<compile_context>
chip_gen: v5e
topology: v5e:2x2
jax: 0.10.0
libtpu: 0.0.40
codegen_flags: <defaults>
</compile_context>

<pallas_src>
import math

import jax
import jax.numpy as jnp
from jax.experimental import pallas as pl
from jax.experimental.pallas import tpu as pltpu

# ---------------- small synthetic config (shapes implied by DCN.__init__/forward) ------------
B = 2                    # batch
S = 8                    # question length
RNN_DIM = 16             # word-embedding dim (RNN_DIM constant of the repo)
QUES_SIZE = 32           # opt.ques_size
NUM_LAYERS = 1           # opt.num_layers
RNN_HID = QUES_SIZE - RNN_DIM          # 16, LSTM hidden (residual_embeddings=True)
C_IN = 4                 # CNN feature-map channels fed to ImageExtractionLayer
IMG_HW = 4
R = IMG_HW * IMG_HW      # 16 image regions
IMG_SIZE = 32            # opt.img_size
NUM_NONE = 2             # opt.num_none ("nowhere-to-attend" slots)
NUM_SEQ = 2              # opt.num_seq (stacked dense co-attention layers)
ATTN_D = 32              # affinity projection dim
PRED_HID = 64
NUM_ANS = 10

F32 = jnp.float32

# folded-row sizes
NIR = B * R                    # image rows (batch folded)
NQR = B * S                    # question rows (batch folded)
NIK = B * R + B * NUM_NONE     # image keys   (real rows + none slots)
NQK = B * S + B * NUM_NONE     # question keys


# ---------------------------------- in-kernel helpers ---------------------------------------
def _dot_t(a, b):
    """a @ b.T via dot_general (contract on last dims, no explicit transpose)."""
    return jax.lax.dot_general(a, b, (((1,), (1,)), ((), ())),
                               preferred_element_type=jnp.float32)


def _softmax_rows(x):
    m = jnp.max(x, axis=-1, keepdims=True)
    e = jnp.exp(x - m)
    s = jnp.sum(e, axis=-1, keepdims=True)
    return e * pl.reciprocal(s, approx=True)


# ---------------------------------- the fused DCN kernel ------------------------------------
def dcn_fused_kernel(
    # data
    x_emb_ref,        # (B*S, RNN_DIM)   embedded question tokens (batch folded)
    qmask_ref,        # (B*S, 1)         token validity
    img_ref,          # (B*R, C_IN)      CNN feature map, NCHW flattened to rows
    mask_iq_ref,      # (B*R, NQK)       key mask (block-diag batch x ques validity x none)
    mask_qi_ref,      # (B*S, NIK)       key mask for the other direction
    sel_img_ref,      # (B, B*R)         per-example row-selection (with img_mask)
    sel_ques_ref,     # (B, B*S)         per-example row-selection (with ques_mask)
    # LSTM weights
    w_ih_ref, w_hh_ref, b_lstm_ref,
    # image extraction weights
    w_img_ref, w_qv_ref, b_img_ref,
    # stacked per-layer co-attention weights
    none_img_ref,     # (L, NUM_NONE, IMG_SIZE)
    none_ques_ref,    # (L, NUM_NONE, QUES_SIZE)
    w_img_proj_ref,   # (L, IMG_SIZE, 2*ATTN_D)   [w_q_img | w_k_img]
    w_ques_proj_ref,  # (L, QUES_SIZE, 2*ATTN_D)  [w_k_ques | w_q_ques]
    w_fi_self_ref, w_fi_attn_ref, b_fi_ref,
    w_fq_self_ref, w_fq_attn_ref, b_fq_ref,
    # prediction weights
    w_attn_img_ref, w_attn_ques_ref, w1_img_ref, w1_ques_ref, b1_ref, w2_ref, b2_ref,
    # output
    score_ref,        # (B, NUM_ANS)
    # scratch (resident feature + kv buffers)
    img_kv_sc,        # (NIK, IMG_SIZE)
    ques_kv_sc,       # (NQK, QUES_SIZE)
):
    f32 = jnp.float32

    # ---- 1) language extraction: masked single-layer LSTM, input projection hoisted -------
    # TODO(synk): word-embedding lookup + cudnn multi-layer LSTM packing are out of scope;
    # x_emb stands for the embedded tokens.
    x = x_emb_ref[...]                                                    # (B*S, RNN_DIM)
    qm = qmask_ref[...]                                                   # (B*S, 1)
    gates_x = jnp.dot(x, w_ih_ref[...], preferred_element_type=f32) + b_lstm_ref[...]   # (B*S, 4H)
    w_hh = w_hh_ref[...]

    h = jnp.zeros((B, RNN_HID), f32)
    c = jnp.zeros((B, RNN_HID), f32)
    hs = []
    for t in range(S):                                                    # static unroll, S=8
        gx_t = jnp.concatenate([gates_x[b * S + t:b * S + t + 1, :] for b in range(B)], axis=0)
        m_t = jnp.concatenate([qm[b * S + t:b * S + t + 1, :] for b in range(B)], axis=0)
        gates = gx_t + jnp.dot(h, w_hh, preferred_element_type=f32)       # (B, 4H)
        i_g = jax.nn.sigmoid(gates[:, 0 * RNN_HID:1 * RNN_HID])
        f_g = jax.nn.sigmoid(gates[:, 1 * RNN_HID:2 * RNN_HID])
        g_g = jnp.tanh(gates[:, 2 * RNN_HID:3 * RNN_HID])
        o_g = jax.nn.sigmoid(gates[:, 3 * RNN_HID:4 * RNN_HID])
        c_new = f_g * c + i_g * g_g
        h_new = o_g * jnp.tanh(c_new)
        h = m_t * h_new + (1.0 - m_t) * h        # padded tokens keep previous state
        c = m_t * c_new + (1.0 - m_t) * c
        hs.append(h * m_t)                       # hidden sequence, zeroed at padding

    # residual question features [emb | hseq] * mask written straight into the kv scratch
    ques_kv_sc[:NQR, :RNN_DIM] = x * qm
    for b in range(B):
        hseq_b = jnp.concatenate([hs[t][b:b + 1, :] for t in range(S)], axis=0)   # (S, RNN_HID)
        ques_kv_sc[b * S:(b + 1) * S, RNN_DIM:QUES_SIZE] = hseq_b
    ques_vec = h                                                           # (B, RNN_HID)

    # ---- 2) image extraction: question-conditioned projection + ReLU ----------------------
    # TODO(synk): the ResNet CNN backbone (cnn_name) and num_img_attn glimpses are collapsed
    # into a single question-conditioned projection on the provided feature map.
    proj = jnp.dot(img_ref[...], w_img_ref[...], preferred_element_type=f32)      # (B*R, IMG_SIZE)
    cond = jnp.dot(ques_vec, w_qv_ref[...], preferred_element_type=f32)           # (B, IMG_SIZE)
    b_img = b_img_ref[...]
    for b in range(B):
        img_kv_sc[b * R:(b + 1) * R, :] = jnp.maximum(
            proj[b * R:(b + 1) * R, :] + cond[b:b + 1, :] + b_img, 0.0)

    # ---- 3) dense co-attention stack (kv resident in VMEM, batch folded into rows) --------
    # TODO(synk): num_dense_attn heads of DCNLayer collapsed to a single attention head.
    scale = 1.0 / math.sqrt(ATTN_D)
    add_mask_iq = (mask_iq_ref[...] - 1.0) * 1e9                                  # (B*R, NQK)
    add_mask_qi = (mask_qi_ref[...] - 1.0) * 1e9                                  # (B*S, NIK)

    for l in range(NUM_SEQ):
        # this layer's "nowhere-to-attend" slots, placed per example
        for b in range(B):
            img_kv_sc[NIR + b * NUM_NONE:NIR + (b + 1) * NUM_NONE, :] = none_img_ref[l]
            ques_kv_sc[NQR + b * NUM_NONE:NQR + (b + 1) * NUM_NONE, :] = none_ques_ref[l]

        img_kv = img_kv_sc[...]                # (NIK, IMG_SIZE)
        ques_kv = ques_kv_sc[...]              # (NQK, QUES_SIZE)
        img = img_kv[:NIR, :]
        ques = ques_kv[:NQR, :]

        # fused [query | key] projections: one wide MXU call per modality
        img_pk = jnp.dot(img_kv, w_img_proj_ref[l], preferred_element_type=f32)   # (NIK, 2D)
        ques_pk = jnp.dot(ques_kv, w_ques_proj_ref[l], preferred_element_type=f32)  # (NQK, 2D)
        qi = img_pk[:NIR, :ATTN_D]
        ki = img_pk[:, ATTN_D:]
        kq = ques_pk[:, :ATTN_D]
        qq = ques_pk[:NQR, ATTN_D:]

        # image -> question attention (masked over question keys incl. none slots)
        aff_iq = _dot_t(qi, kq) * scale + add_mask_iq
        p_iq = _softmax_rows(aff_iq)
        attn_q = jnp.dot(p_iq, ques_kv, preferred_element_type=f32)               # (B*R, QUES_SIZE)

        # question -> image attention
        aff_qi = _dot_t(qq, ki) * scale + add_mask_qi
        p_qi = _softmax_rows(aff_qi)
        attn_i = jnp.dot(p_qi, img_kv, preferred_element_type=f32)                # (B*S, IMG_SIZE)

        # fusion: ReLU(W [x, attended]) + residual, W split -> no in-kernel lane concat
        new_img = jnp.maximum(
            jnp.dot(img, w_fi_self_ref[l], preferred_element_type=f32)
            + jnp.dot(attn_q, w_fi_attn_ref[l], preferred_element_type=f32)
            + b_fi_ref[l], 0.0) + img
        new_ques = jnp.maximum(
            jnp.dot(ques, w_fq_self_ref[l], preferred_element_type=f32)
            + jnp.dot(attn_i, w_fq_attn_ref[l], preferred_element_type=f32)
            + b_fq_ref[l], 0.0) + ques

        img_kv_sc[:NIR, :] = new_img
        ques_kv_sc[:NQR, :] = new_ques

    # ---- 4) prediction head: masked attention pooling + 2-layer MLP -----------------------
    # TODO(synk): num_predict_attn glimpses collapsed to a single summary glimpse per modality.
    img_f = img_kv_sc[:NIR, :]
    ques_f = ques_kv_sc[:NQR, :]

    zi = jnp.sum(img_f * w_attn_img_ref[...], axis=-1, keepdims=True)             # (B*R, 1) VPU+XLU
    ei = jnp.exp(zi - jnp.max(zi, axis=0, keepdims=True))
    num_i = jnp.dot(sel_img_ref[...], img_f * ei, preferred_element_type=f32)     # (B, IMG_SIZE)
    den_i = jnp.dot(sel_img_ref[...], ei, preferred_element_type=f32)             # (B, 1)
    img_sum = num_i * pl.reciprocal(den_i, approx=True)

    zq = jnp.sum(ques_f * w_attn_ques_ref[...], axis=-1, keepdims=True)
    eq = jnp.exp(zq - jnp.max(zq, axis=0, keepdims=True))
    num_q = jnp.dot(sel_ques_ref[...], ques_f * eq, preferred_element_type=f32)
    den_q = jnp.dot(sel_ques_ref[...], eq, preferred_element_type=f32)
    ques_sum = num_q * pl.reciprocal(den_q, approx=True)

    hdn = jnp.maximum(
        jnp.dot(img_sum, w1_img_ref[...], preferred_element_type=f32)
        + jnp.dot(ques_sum, w1_ques_ref[...], preferred_element_type=f32)
        + b1_ref[...], 0.0)                                                       # (B, PRED_HID)
    score_ref[...] = jnp.dot(hdn, w2_ref[...], preferred_element_type=f32) + b2_ref[...]


# ---------------------------------- mask construction (wrapper) -----------------------------
def build_masks(img_mask, ques_mask):
    """Block-diagonal (folded-batch) key masks and per-example selection matrices."""
    bI = jnp.repeat(jnp.arange(B), R)           # batch id per folded image row
    bQ = jnp.repeat(jnp.arange(B), S)           # batch id per folded question row
    bN = jnp.repeat(jnp.arange(B), NUM_NONE)    # batch id per none slot

    same_iq = (bI[:, None] == bQ[None, :]).astype(F32)
    mask_iq = jnp.concatenate(
        [same_iq * ques_mask.reshape(1, B * S),
         (bI[:, None] == bN[None, :]).astype(F32)], axis=-1)          # (B*R, NQK)

    same_qi = (bQ[:, None] == bI[None, :]).astype(F32)
    mask_qi = jnp.concatenate(
        [same_qi * img_mask.reshape(1, B * R),
         (bQ[:, None] == bN[None, :]).astype(F32)], axis=-1)          # (B*S, NIK)

    sel_img = (jnp.arange(B)[:, None] == bI[None, :]).astype(F32) * img_mask.reshape(1, B * R)
    sel_ques = (jnp.arange(B)[:, None] == bQ[None, :]).astype(F32) * ques_mask.reshape(1, B * S)
    return mask_iq, mask_qi, sel_img, sel_ques


# ---------------------------------- parameters (Xavier normal) ------------------------------
def xavier_normal(key, shape):
    fan_in, fan_out = shape[0], shape[-1]
    std = math.sqrt(2.0 / (fan_in + fan_out))
    return (std * jax.random.normal(key, shape)).astype(F32)


def init_params(key):
    keys = iter(jax.random.split(key, 64))
    params = {
        "lstm": {
            "w_ih": xavier_normal(next(keys), (RNN_DIM, 4 * RNN_HID)),
            "w_hh": xavier_normal(next(keys), (RNN_HID, 4 * RNN_HID)),
            "b": jnp.zeros((1, 4 * RNN_HID), F32),
        },
        "img": {
            "w_img": xavier_normal(next(keys), (C_IN, IMG_SIZE)),
            "w_q": xavier_normal(next(keys), (NUM_LAYERS * RNN_HID, IMG_SIZE)),
            "b": jnp.zeros((1, IMG_SIZE), F32),
        },
        "dcn": [],
        "pred": {
            "w_attn_img": xavier_normal(next(keys), (IMG_SIZE, 1)),
            "w_attn_ques": xavier_normal(next(keys), (QUES_SIZE, 1)),
            "w1": xavier_normal(next(keys), (IMG_SIZE + QUES_SIZE, PRED_HID)),
            "b1": jnp.zeros((1, PRED_HID), F32),
            "w2": xavier_normal(next(keys), (PRED_HID, NUM_ANS)),
            "b2": jnp.zeros((1, NUM_ANS), F32),
        },
    }
    for _ in range(NUM_SEQ):
        params["dcn"].append({
            "none_img": xavier_normal(next(keys), (NUM_NONE, IMG_SIZE)),
            "none_ques": xavier_normal(next(keys), (NUM_NONE, QUES_SIZE)),
            "w_q_img": xavier_normal(next(keys), (IMG_SIZE, ATTN_D)),
            "w_k_ques": xavier_normal(next(keys), (QUES_SIZE, ATTN_D)),
            "w_q_ques": xavier_normal(next(keys), (QUES_SIZE, ATTN_D)),
            "w_k_img": xavier_normal(next(keys), (IMG_SIZE, ATTN_D)),
            "w_fuse_img": xavier_normal(next(keys), (IMG_SIZE + QUES_SIZE, IMG_SIZE)),
            "b_fuse_img": jnp.zeros((1, IMG_SIZE), F32),
            "w_fuse_ques": xavier_normal(next(keys), (QUES_SIZE + IMG_SIZE, QUES_SIZE)),
            "b_fuse_ques": jnp.zeros((1, QUES_SIZE), F32),
        })
    return params


def pack_params(p):
    """Reshape/concat/stack original-layout weights into the fused-kernel layout (host side)."""
    dcn = p["dcn"]
    return {
        "w_ih": p["lstm"]["w_ih"], "w_hh": p["lstm"]["w_hh"], "b_lstm": p["lstm"]["b"],
        "w_img": p["img"]["w_img"], "w_qv": p["img"]["w_q"], "b_img": p["img"]["b"],
        "none_img": jnp.stack([l["none_img"] for l in dcn]),
        "none_ques": jnp.stack([l["none_ques"] for l in dcn]),
        "w_img_proj": jnp.stack([jnp.concatenate([l["w_q_img"], l["w_k_img"]], axis=1) for l in dcn]),
        "w_ques_proj": jnp.stack([jnp.concatenate([l["w_k_ques"], l["w_q_ques"]], axis=1) for l in dcn]),
        "w_fi_self": jnp.stack([l["w_fuse_img"][:IMG_SIZE] for l in dcn]),
        "w_fi_attn": jnp.stack([l["w_fuse_img"][IMG_SIZE:] for l in dcn]),
        "b_fi": jnp.stack([l["b_fuse_img"] for l in dcn]),
        "w_fq_self": jnp.stack([l["w_fuse_ques"][:QUES_SIZE] for l in dcn]),
        "w_fq_attn": jnp.stack([l["w_fuse_ques"][QUES_SIZE:] for l in dcn]),
        "b_fq": jnp.stack([l["b_fuse_ques"] for l in dcn]),
        "w_attn_img": p["pred"]["w_attn_img"].T,      # (1, IMG_SIZE) row for VPU multiply
        "w_attn_ques": p["pred"]["w_attn_ques"].T,    # (1, QUES_SIZE)
        "w1_img": p["pred"]["w1"][:IMG_SIZE],
        "w1_ques": p["pred"]["w1"][IMG_SIZE:],
        "b1": p["pred"]["b1"], "w2": p["pred"]["w2"], "b2": p["pred"]["b2"],
    }


# ---------------------------------- full DCN forward ----------------------------------------
def dcn_forward(img, ques_emb, img_mask, ques_mask, packed):
    b, c, hh, ww = img.shape
    img_rows = jnp.transpose(img, (0, 2, 3, 1)).reshape(b * hh * ww, c)   # NCHW -> (B*R, C)
    x_rows = ques_emb.reshape(B * S, RNN_DIM)
    qmask_rows = ques_mask.reshape(B * S, 1)
    mask_iq, mask_qi, sel_img, sel_ques = build_masks(img_mask, ques_mask)

    score = pl.pallas_call(
        dcn_fused_kernel,
        out_shape=jax.ShapeDtypeStruct((B, NUM_ANS), F32),
        scratch_shapes=[
            pltpu.VMEM((NIK, IMG_SIZE), F32),    # image features + none slots (resident)
            pltpu.VMEM((NQK, QUES_SIZE), F32),   # question features + none slots (resident)
        ],
    )(x_rows, qmask_rows, img_rows, mask_iq, mask_qi, sel_img, sel_ques,
      packed["w_ih"], packed["w_hh"], packed["b_lstm"],
      packed["w_img"], packed["w_qv"], packed["b_img"],
      packed["none_img"], packed["none_ques"], packed["w_img_proj"], packed["w_ques_proj"],
      packed["w_fi_self"], packed["w_fi_attn"], packed["b_fi"],
      packed["w_fq_self"], packed["w_fq_attn"], packed["b_fq"],
      packed["w_attn_img"], packed["w_attn_ques"],
      packed["w1_img"], packed["w1_ques"], packed["b1"], packed["w2"], packed["b2"])
    return score                                                          # (B, NUM_ANS)


if __name__ == "__main__":
    key = jax.random.PRNGKey(0)
    k_param, k_img, k_ques = jax.random.split(key, 3)
    params = init_params(k_param)
    packed = pack_params(params)

    img = jax.random.normal(k_img, (B, C_IN, IMG_HW, IMG_HW), dtype=F32)       # NCHW feature map
    ques_emb = jax.random.normal(k_ques, (B, S, RNN_DIM), dtype=F32)           # embedded question
    ques_lens = jnp.array([S, 5], dtype=jnp.int32)
    ques_mask = (jnp.arange(S)[None, :] < ques_lens[:, None]).astype(F32)      # (B, S)
    img_mask = jnp.ones((B, R), dtype=F32)                                     # (B, R)

    score = jax.jit(dcn_forward)(img, ques_emb, img_mask, ques_mask, packed)
    score = jax.block_until_ready(score)

    assert score.shape == (B, NUM_ANS)
    assert bool(jnp.all(jnp.isfinite(score)))
    print("KERNEL_OK")
</pallas_src>

<mosaic_0001>
module attributes {stable_mosaic.version = 11 : i64} {
  func.func @dcn_fused_kernel(%arg0: memref<16x16xf32, #tpu.memory_space<vmem>>, %arg1: memref<16x1xf32, #tpu.memory_space<vmem>>, %arg2: memref<32x4xf32, #tpu.memory_space<vmem>>, %arg3: memref<32x20xf32, #tpu.memory_space<vmem>>, %arg4: memref<16x36xf32, #tpu.memory_space<vmem>>, %arg5: memref<2x32xf32, #tpu.memory_space<vmem>>, %arg6: memref<2x16xf32, #tpu.memory_space<vmem>>, %arg7: memref<16x64xf32, #tpu.memory_space<vmem>>, %arg8: memref<16x64xf32, #tpu.memory_space<vmem>>, %arg9: memref<1x64xf32, #tpu.memory_space<vmem>>, %arg10: memref<4x32xf32, #tpu.memory_space<vmem>>, %arg11: memref<16x32xf32, #tpu.memory_space<vmem>>, %arg12: memref<1x32xf32, #tpu.memory_space<vmem>>, %arg13: memref<2x2x32xf32, #tpu.memory_space<vmem>>, %arg14: memref<2x2x32xf32, #tpu.memory_space<vmem>>, %arg15: memref<2x32x64xf32, #tpu.memory_space<vmem>>, %arg16: memref<2x32x64xf32, #tpu.memory_space<vmem>>, %arg17: memref<2x32x32xf32, #tpu.memory_space<vmem>>, %arg18: memref<2x32x32xf32, #tpu.memory_space<vmem>>, %arg19: memref<2x1x32xf32, #tpu.memory_space<vmem>>, %arg20: memref<2x32x32xf32, #tpu.memory_space<vmem>>, %arg21: memref<2x32x32xf32, #tpu.memory_space<vmem>>, %arg22: memref<2x1x32xf32, #tpu.memory_space<vmem>>, %arg23: memref<1x32xf32, #tpu.memory_space<vmem>>, %arg24: memref<1x32xf32, #tpu.memory_space<vmem>>, %arg25: memref<32x64xf32, #tpu.memory_space<vmem>>, %arg26: memref<32x64xf32, #tpu.memory_space<vmem>>, %arg27: memref<1x64xf32, #tpu.memory_space<vmem>>, %arg28: memref<64x10xf32, #tpu.memory_space<vmem>>, %arg29: memref<1x10xf32, #tpu.memory_space<vmem>>, %arg30: memref<2x10xf32, #tpu.memory_space<vmem>>, %arg31: memref<36x32xf32, #tpu.memory_space<vmem>>, %arg32: memref<20x32xf32, #tpu.memory_space<vmem>>) attributes {dimension_semantics = [], scalar_prefetch = 0 : i64, scratch_operands = 2 : i64, tpu.core_type = #tpu.core_type<tc>} {
    %c0 = arith.constant 0 : index
    %c0_0 = arith.constant 0 : index
    %0 = vector.load %arg0[%c0, %c0_0] : memref<16x16xf32, #tpu.memory_space<vmem>>, vector<16x16xf32>
    %c0_1 = arith.constant 0 : index
    %c0_2 = arith.constant 0 : index
    %1 = vector.load %arg1[%c0_1, %c0_2] : memref<16x1xf32, #tpu.memory_space<vmem>>, vector<16x1xf32>
    %c0_3 = arith.constant 0 : index
    %c0_4 = arith.constant 0 : index
    %2 = vector.load %arg7[%c0_3, %c0_4] : memref<16x64xf32, #tpu.memory_space<vmem>>, vector<16x64xf32>
    %cst = arith.constant dense<0.000000e+00> : vector<16x64xf32>
    %3 = tpu.matmul %0, %2, %cst {dimension_numbers = #tpu.dot_dimension_numbers<[1], [0], [0], [1], [0, 0, 1, 1], [], []>} : vector<16x16xf32>, vector<16x64xf32>, vector<16x64xf32> -> vector<16x64xf32>
    %c0_5 = arith.constant 0 : index
    %c0_6 = arith.constant 0 : index
    %4 = vector.load %arg9[%c0_5, %c0_6] : memref<1x64xf32, #tpu.memory_space<vmem>>, vector<1x64xf32>
    %5 = vector.broadcast %4 : vector<1x64xf32> to vector<16x64xf32>
    %6 = arith.addf %3, %5 : vector<16x64xf32>
    %c0_7 = arith.constant 0 : index
    %c0_8 = arith.constant 0 : index
    %7 = vector.load %arg8[%c0_7, %c0_8] : memref<16x64xf32, #tpu.memory_space<vmem>>, vector<16x64xf32>
    %cst_9 = arith.constant 0.000000e+00 : f32
    %8 = vector.broadcast %cst_9 : f32 to vector<2x16xf32>
    %cst_10 = arith.constant 0.000000e+00 : f32
    %9 = vector.broadcast %cst_10 : f32 to vector<2x16xf32>
    %10 = vector.extract_strided_slice %6 {offsets = [0, 0], sizes = [1, 64], strides = [1, 1]} : vector<16x64xf32> to vector<1x64xf32>
    %11 = vector.extract_strided_slice %6 {offsets = [8, 0], sizes = [1, 64], strides = [1, 1]} : vector<16x64xf32> to vector<1x64xf32>
    %12 = tpu.concatenate %10, %11 in 0 : vector<1x64xf32>, vector<1x64xf32> -> vector<2x64xf32>
    %13 = vector.extract_strided_slice %1 {offsets = [0, 0], sizes = [1, 1], strides = [1, 1]} : vector<16x1xf32> to vector<1x1xf32>
    %14 = vector.extract_strided_slice %1 {offsets = [8, 0], sizes = [1, 1], strides = [1, 1]} : vector<16x1xf32> to vector<1x1xf32>
    %15 = tpu.concatenate %13, %14 in 0 : vector<1x1xf32>, vector<1x1xf32> -> vector<2x1xf32>
    %cst_11 = arith.constant dense<0.000000e+00> : vector<2x64xf32>
    %16 = tpu.matmul %8, %7, %cst_11 {dimension_numbers = #tpu.dot_dimension_numbers<[1], [0], [0], [1], [0, 0, 1, 1], [], []>} : vector<2x16xf32>, vector<16x64xf32>, vector<2x64xf32> -> vector<2x64xf32>
    %17 = arith.addf %12, %16 : vector<2x64xf32>
    %18 = vector.extract_strided_slice %17 {offsets = [0, 0], sizes = [2, 16], strides = [1, 1]} : vector<2x64xf32> to vector<2x16xf32>
    %19 = arith.negf %18 : vector<2x16xf32>
    %20 = math.exp %19 : vector<2x16xf32>
    %cst_12 = arith.constant 1.000000e+00 : f32
    %21 = vector.broadcast %cst_12 : f32 to vector<2x16xf32>
    %22 = arith.addf %21, %20 : vector<2x16xf32>
    %23 = arith.divf %21, %22 : vector<2x16xf32>
    %24 = vector.extract_strided_slice %17 {offsets = [0, 16], sizes = [2, 16], strides = [1, 1]} : vector<2x64xf32> to vector<2x16xf32>
    %25 = arith.negf %24 : vector<2x16xf32>
    %26 = math.exp %25 : vector<2x16xf32>
    %cst_13 = arith.constant 1.000000e+00 : f32
    %27 = vector.broadcast %cst_13 : f32 to vector<2x16xf32>
    %28 = arith.addf %27, %26 : vector<2x16xf32>
    %29 = arith.divf %27, %28 : vector<2x16xf32>
    %30 = vector.extract_strided_slice %17 {offsets = [0, 32], sizes = [2, 16], strides = [1, 1]} : vector<2x64xf32> to vector<2x16xf32>
    %31 = math.tanh %30 : vector<2x16xf32>
    %32 = vector.extract_strided_slice %17 {offsets = [0, 48], sizes = [2, 16], strides = [1, 1]} : vector<2x64xf32> to vector<2x16xf32>
    %33 = arith.negf %32 : vector<2x16xf32>
    %34 = math.exp %33 : vector<2x16xf32>
    %cst_14 = arith.constant 1.000000e+00 : f32
    %35 = vector.broadcast %cst_14 : f32 to vector<2x16xf32>
    %36 = arith.addf %35, %34 : vector<2x16xf32>
    %37 = arith.divf %35, %36 : vector<2x16xf32>
    %38 = arith.mulf %29, %9 : vector<2x16xf32>
    %39 = arith.mulf %23, %31 : vector<2x16xf32>
    %40 = arith.addf %38, %39 : vector<2x16xf32>
    %41 = math.tanh %40 : vector<2x16xf32>
    %42 = arith.mulf %37, %41 : vector<2x16xf32>
    %43 = vector.broadcast %15 : vector<2x1xf32> to vector<2x16xf32>
    %44 = arith.mulf %43, %42 : vector<2x16xf32>
    %cst_15 = arith.constant 1.000000e+00 : f32
    %45 = vector.broadcast %cst_15 : f32 to vector<2x1xf32>
    %46 = arith.subf %45, %15 : vector<2x1xf32>
    %47 = vector.broadcast %46 : vector<2x1xf32> to vector<2x16xf32>
    %48 = arith.mulf %47, %8 : vector<2x16xf32>
    %49 = arith.addf %44, %48 : vector<2x16xf32>
    %50 = vector.broadcast %15 : vector<2x1xf32> to vector<2x16xf32>
    %51 = arith.mulf %50, %40 : vector<2x16xf32>
    %cst_16 = arith.constant 1.000000e+00 : f32
    %52 = vector.broadcast %cst_16 : f32 to vector<2x1xf32>
    %53 = arith.subf %52, %15 : vector<2x1xf32>
    %54 = vector.broadcast %53 : vector<2x1xf32> to vector<2x16xf32>
    %55 = arith.mulf %54, %9 : vector<2x16xf32>
    %56 = arith.addf %51, %55 : vector<2x16xf32>
    %57 = vector.broadcast %15 : vector<2x1xf32> to vector<2x16xf32>
    %58 = arith.mulf %49, %57 : vector<2x16xf32>
    %59 = vector.extract_strided_slice %6 {offsets = [1, 0], sizes = [1, 64], strides = [1, 1]} : vector<16x64xf32> to vector<1x64xf32>
    %60 = vector.extract_strided_slice %6 {offsets = [9, 0], sizes = [1, 64], strides = [1, 1]} : vector<16x64xf32> to vector<1x64xf32>
    %61 = tpu.concatenate %59, %60 in 0 : vector<1x64xf32>, vector<1x64xf32> -> vector<2x64xf32>
    %62 = vector.extract_strided_slice %1 {offsets = [1, 0], sizes = [1, 1], strides = [1, 1]} : vector<16x1xf32> to vector<1x1xf32>
    %63 = vector.extract_strided_slice %1 {offsets = [9, 0], sizes = [1, 1], strides = [1, 1]} : vector<16x1xf32> to vector<1x1xf32>
    %64 = tpu.concatenate %62, %63 in 0 : vector<1x1xf32>, vector<1x1xf32> -> vector<2x1xf32>
    %cst_17 = arith.constant dense<0.000000e+00> : vector<2x64xf32>
    %65 = tpu.matmul %49, %7, %cst_17 {dimension_numbers = #tpu.dot_dimension_numbers<[1], [0], [0], [1], [0, 0, 1, 1], [], []>} : vector<2x16xf32>, vector<16x64xf32>, vector<2x64xf32> -> vector<2x64xf32>
    %66 = arith.addf %61, %65 : vector<2x64xf32>
    %67 = vector.extract_strided_slice %66 {offsets = [0, 0], sizes = [2, 16], strides = [1, 1]} : vector<2x64xf32> to vector<2x16xf32>
    %68 = arith.negf %67 : vector<2x16xf32>
    %69 = math.exp %68 : vector<2x16xf32>
    %cst_18 = arith.constant 1.000000e+00 : f32
    %70 = vector.broadcast %cst_18 : f32 to vector<2x16xf32>
    %71 = arith.addf %70, %69 : vector<2x16xf32>
    %72 = arith.divf %70, %71 : vector<2x16xf32>
    %73 = vector.extract_strided_slice %66 {offsets = [0, 16], sizes = [2, 16], strides = [1, 1]} : vector<2x64xf32> to vector<2x16xf32>
    %74 = arith.negf %73 : vector<2x16xf32>
    %75 = math.exp %74 : vector<2x16xf32>
    %cst_19 = arith.constant 1.000000e+00 : f32
    %76 = vector.broadcast %cst_19 : f32 to vector<2x16xf32>
    %77 = arith.addf %76, %75 : vector<2x16xf32>
    %78 = arith.divf %76, %77 : vector<2x16xf32>
    %79 = vector.extract_strided_slice %66 {offsets = [0, 32], sizes = [2, 16], strides = [1, 1]} : vector<2x64xf32> to vector<2x16xf32>
    %80 = math.tanh %79 : vector<2x16xf32>
    %81 = vector.extract_strided_slice %66 {offsets = [0, 48], sizes = [2, 16], strides = [1, 1]} : vector<2x64xf32> to vector<2x16xf32>
    %82 = arith.negf %81 : vector<2x16xf32>
    %83 = math.exp %82 : vector<2x16xf32>
    %cst_20 = arith.constant 1.000000e+00 : f32
    %84 = vector.broadcast %cst_20 : f32 to vector<2x16xf32>
    %85 = arith.addf %84, %83 : vector<2x16xf32>
    %86 = arith.divf %84, %85 : vector<2x16xf32>
    %87 = arith.mulf %78, %56 : vector<2x16xf32>
    %88 = arith.mulf %72, %80 : vector<2x16xf32>
    %89 = arith.addf %87, %88 : vector<2x16xf32>
    %90 = math.tanh %89 : vector<2x16xf32>
    %91 = arith.mulf %86, %90 : vector<2x16xf32>
    %92 = vector.broadcast %64 : vector<2x1xf32> to vector<2x16xf32>
    %93 = arith.mulf %92, %91 : vector<2x16xf32>
    %cst_21 = arith.constant 1.000000e+00 : f32
    %94 = vector.broadcast %cst_21 : f32 to vector<2x1xf32>
    %95 = arith.subf %94, %64 : vector<2x1xf32>
    %96 = vector.broadcast %95 : vector<2x1xf32> to vector<2x16xf32>
    %97 = arith.mulf %96, %49 : vector<2x16xf32>
    %98 = arith.addf %93, %97 : vector<2x16xf32>
    %99 = vector.broadcast %64 : vector<2x1xf32> to vector<2x16xf32>
    %100 = arith.mulf %99, %89 : vector<2x16xf32>
    %cst_22 = arith.constant 1.000000e+00 : f32
    %101 = vector.broadcast %cst_22 : f32 to vector<2x1xf32>
    %102 = arith.subf %101, %64 : vector<2x1xf32>
    %103 = vector.broadcast %102 : vector<2x1xf32> to vector<2x16xf32>
    %104 = arith.mulf %103, %56 : vector<2x16xf32>
    %105 = arith.addf %100, %104 : vector<2x16xf32>
    %106 = vector.broadcast %64 : vector<2x1xf32> to vector<2x16xf32>
    %107 = arith.mulf %98, %106 : vector<2x16xf32>
    %108 = vector.extract_strided_slice %6 {offsets = [2, 0], sizes = [1, 64], strides = [1, 1]} : vector<16x64xf32> to vector<1x64xf32>
    %109 = vector.extract_strided_slice %6 {offsets = [10, 0], sizes = [1, 64], strides = [1, 1]} : vector<16x64xf32> to vector<1x64xf32>
    %110 = tpu.concatenate %108, %109 in 0 : vector<1x64xf32>, vector<1x64xf32> -> vector<2x64xf32>
    %111 = vector.extract_strided_slice %1 {offsets = [2, 0], sizes = [1, 1], strides = [1, 1]} : vector<16x1xf32> to vector<1x1xf32>
    %112 = vector.extract_strided_slice %1 {offsets = [10, 0], sizes = [1, 1], strides = [1, 1]} : vector<16x1xf32> to vector<1x1xf32>
    %113 = tpu.concatenate %111, %112 in 0 : vector<1x1xf32>, vector<1x1xf32> -> vector<2x1xf32>
    %cst_23 = arith.constant dense<0.000000e+00> : vector<2x64xf32>
    %114 = tpu.matmul %98, %7, %cst_23 {dimension_numbers = #tpu.dot_dimension_numbers<[1], [0], [0], [1], [0, 0, 1, 1], [], []>} : vector<2x16xf32>, vector<16x64xf32>, vector<2x64xf32> -> vector<2x64xf32>
    %115 = arith.addf %110, %114 : vector<2x64xf32>
    %116 = vector.extract_strided_slice %115 {offsets = [0, 0], sizes = [2, 16], strides = [1, 1]} : vector<2x64xf32> to vector<2x16xf32>
    %117 = arith.negf %116 : vector<2x16xf32>
    %118 = math.exp %117 : vector<2x16xf32>
    %cst_24 = arith.constant 1.000000e+00 : f32
    %119 = vector.broadcast %cst_24 : f32 to vector<2x16xf32>
    %120 = arith.addf %119, %118 : vector<2x16xf32>
    %121 = arith.divf %119, %120 : vector<2x16xf32>
    %122 = vector.extract_strided_slice %115 {offsets = [0, 16], sizes = [2, 16], strides = [1, 1]} : vector<2x64xf32> to vector<2x16xf32>
    %123 = arith.negf %122 : vector<2x16xf32>
    %124 = math.exp %123 : vector<2x16xf32>
    %cst_25 = arith.constant 1.000000e+00 : f32
    %125 = vector.broadcast %cst_25 : f32 to vector<2x16xf32>
    %126 = arith.addf %125, %124 : vector<2x16xf32>
    %127 = arith.divf %125, %126 : vector<2x16xf32>
    %128 = vector.extract_strided_slice %115 {offsets = [0, 32], sizes = [2, 16], strides = [1, 1]} : vector<2x64xf32> to vector<2x16xf32>
    %129 = math.tanh %128 : vector<2x16xf32>
    %130 = vector.extract_strided_slice %115 {offsets = [0, 48], sizes = [2, 16], strides = [1, 1]} : vector<2x64xf32> to vector<2x16xf32>
    %131 = arith.negf %130 : vector<2x16xf32>
    %132 = math.exp %131 : vector<2x16xf32>
    %cst_26 = arith.constant 1.000000e+00 : f32
    %133 = vector.broadcast %cst_26 : f32 to vector<2x16xf32>
    %134 = arith.addf %133, %132 : vector<2x16xf32>
    %135 = arith.divf %133, %134 : vector<2x16xf32>
    %136 = arith.mulf %127, %105 : vector<2x16xf32>
    %137 = arith.mulf %121, %129 : vector<2x16xf32>
    %138 = arith.addf %136, %137 : vector<2x16xf32>
    %139 = math.tanh %138 : vector<2x16xf32>
    %140 = arith.mulf %135, %139 : vector<2x16xf32>
    %141 = vector.broadcast %113 : vector<2x1xf32> to vector<2x16xf32>
    %142 = arith.mulf %141, %140 : vector<2x16xf32>
    %cst_27 = arith.constant 1.000000e+00 : f32
    %143 = vector.broadcast %cst_27 : f32 to vector<2x1xf32>
    %144 = arith.subf %143, %113 : vector<2x1xf32>
    %145 = vector.broadcast %144 : vector<2x1xf32> to vector<2x16xf32>
    %146 = arith.mulf %145, %98 : vector<2x16xf32>
    %147 = arith.addf %142, %146 : vector<2x16xf32>
    %148 = vector.broadcast %113 : vector<2x1xf32> to vector<2x16xf32>
    %149 = arith.mulf %148, %138 : vector<2x16xf32>
    %cst_28 = arith.constant 1.000000e+00 : f32
    %150 = vector.broadcast %cst_28 : f32 to vector<2x1xf32>
    %151 = arith.subf %150, %113 : vector<2x1xf32>
    %152 = vector.broadcast %151 : vector<2x1xf32> to vector<2x16xf32>
    %153 = arith.mulf %152, %105 : vector<2x16xf32>
    %154 = arith.addf %149, %153 : vector<2x16xf32>
    %155 = vector.broadcast %113 : vector<2x1xf32> to vector<2x16xf32>
    %156 = arith.mulf %147, %155 : vector<2x16xf32>
    %157 = vector.extract_strided_slice %6 {offsets = [3, 0], sizes = [1, 64], strides = [1, 1]} : vector<16x64xf32> to vector<1x64xf32>
    %158 = vector.extract_strided_slice %6 {offsets = [11, 0], sizes = [1, 64], strides = [1, 1]} : vector<16x64xf32> to vector<1x64xf32>
    %159 = tpu.concatenate %157, %158 in 0 : vector<1x64xf32>, vector<1x64xf32> -> vector<2x64xf32>
    %160 = vector.extract_strided_slice %1 {offsets = [3, 0], sizes = [1, 1], strides = [1, 1]} : vector<16x1xf32> to vector<1x1xf32>
    %161 = vector.extract_strided_slice %1 {offsets = [11, 0], sizes = [1, 1], strides = [1, 1]} : vector<16x1xf32> to vector<1x1xf32>
    %162 = tpu.concatenate %160, %161 in 0 : vector<1x1xf32>, vector<1x1xf32> -> vector<2x1xf32>
    %cst_29 = arith.constant dense<0.000000e+00> : vector<2x64xf32>
    %163 = tpu.matmul %147, %7, %cst_29 {dimension_numbers = #tpu.dot_dimension_numbers<[1], [0], [0], [1], [0, 0, 1, 1], [], []>} : vector<2x16xf32>, vector<16x64xf32>, vector<2x64xf32> -> vector<2x64xf32>
    %164 = arith.addf %159, %163 : vector<2x64xf32>
    %165 = vector.extract_strided_slice %164 {offsets = [0, 0], sizes = [2, 16], strides = [1, 1]} : vector<2x64xf32> to vector<2x16xf32>
    %166 = arith.negf %165 : vector<2x16xf32>
    %167 = math.exp %166 : vector<2x16xf32>
    %cst_30 = arith.constant 1.000000e+00 : f32
    %168 = vector.broadcast %cst_30 : f32 to vector<2x16xf32>
    %169 = arith.addf %168, %167 : vector<2x16xf32>
    %170 = arith.divf %168, %169 : vector<2x16xf32>
    %171 = vector.extract_strided_slice %164 {offsets = [0, 16], sizes = [2, 16], strides = [1, 1]} : vector<2x64xf32> to vector<2x16xf32>
    %172 = arith.negf %171 : vector<2x16xf32>
    %173 = math.exp %172 : vector<2x16xf32>
    %cst_31 = arith.constant 1.000000e+00 : f32
    %174 = vector.broadcast %cst_31 : f32 to vector<2x16xf32>
    %175 = arith.addf %174, %173 : vector<2x16xf32>
    %176 = arith.divf %174, %175 : vector<2x16xf32>
    %177 = vector.extract_strided_slice %164 {offsets = [0, 32], sizes = [2, 16], strides = [1, 1]} : vector<2x64xf32> to vector<2x16xf32>
    %178 = math.tanh %177 : vector<2x16xf32>
    %179 = vector.extract_strided_slice %164 {offsets = [0, 48], sizes = [2, 16], strides = [1, 1]} : vector<2x64xf32> to vector<2x16xf32>
    %180 = arith.negf %179 : vector<2x16xf32>
    %181 = math.exp %180 : vector<2x16xf32>
    %cst_32 = arith.constant 1.000000e+00 : f32
    %182 = vector.broadcast %cst_32 : f32 to vector<2x16xf32>
    %183 = arith.addf %182, %181 : vector<2x16xf32>
    %184 = arith.divf %182, %183 : vector<2x16xf32>
    %185 = arith.mulf %176, %154 : vector<2x16xf32>
    %186 = arith.mulf %170, %178 : vector<2x16xf32>
    %187 = arith.addf %185, %186 : vector<2x16xf32>
    %188 = math.tanh %187 : vector<2x16xf32>
    %189 = arith.mulf %184, %188 : vector<2x16xf32>
    %190 = vector.broadcast %162 : vector<2x1xf32> to vector<2x16xf32>
    %191 = arith.mulf %190, %189 : vector<2x16xf32>
    %cst_33 = arith.constant 1.000000e+00 : f32
    %192 = vector.broadcast %cst_33 : f32 to vector<2x1xf32>
    %193 = arith.subf %192, %162 : vector<2x1xf32>
    %194 = vector.broadcast %193 : vector<2x1xf32> to vector<2x16xf32>
    %195 = arith.mulf %194, %147 : vector<2x16xf32>
    %196 = arith.addf %191, %195 : vector<2x16xf32>
    %197 = vector.broadcast %162 : vector<2x1xf32> to vector<2x16xf32>
    %198 = arith.mulf %197, %187 : vector<2x16xf32>
    %cst_34 = arith.constant 1.000000e+00 : f32
    %199 = vector.broadcast %cst_34 : f32 to vector<2x1xf32>
    %200 = arith.subf %199, %162 : vector<2x1xf32>
    %201 = vector.broadcast %200 : vector<2x1xf32> to vector<2x16xf32>
    %202 = arith.mulf %201, %154 : vector<2x16xf32>
    %203 = arith.addf %198, %202 : vector<2x16xf32>
    %204 = vector.broadcast %162 : vector<2x1xf32> to vector<2x16xf32>
    %205 = arith.mulf %196, %204 : vector<2x16xf32>
    %206 = vector.extract_strided_slice %6 {offsets = [4, 0], sizes = [1, 64], strides = [1, 1]} : vector<16x64xf32> to vector<1x64xf32>
    %207 = vector.extract_strided_slice %6 {offsets = [12, 0], sizes = [1, 64], strides = [1, 1]} : vector<16x64xf32> to vector<1x64xf32>
    %208 = tpu.concatenate %206, %207 in 0 : vector<1x64xf32>, vector<1x64xf32> -> vector<2x64xf32>
    %209 = vector.extract_strided_slice %1 {offsets = [4, 0], sizes = [1, 1], strides = [1, 1]} : vector<16x1xf32> to vector<1x1xf32>
    %210 = vector.extract_strided_slice %1 {offsets = [12, 0], sizes = [1, 1], strides = [1, 1]} : vector<16x1xf32> to vector<1x1xf32>
    %211 = tpu.concatenate %209, %210 in 0 : vector<1x1xf32>, vector<1x1xf32> -> vector<2x1xf32>
    %cst_35 = arith.constant dense<0.000000e+00> : vector<2x64xf32>
    %212 = tpu.matmul %196, %7, %cst_35 {dimension_numbers = #tpu.dot_dimension_numbers<[1], [0], [0], [1], [0, 0, 1, 1], [], []>} : vector<2x16xf32>, vector<16x64xf32>, vector<2x64xf32> -> vector<2x64xf32>
    %213 = arith.addf %208, %212 : vector<2x64xf32>
    %214 = vector.extract_strided_slice %213 {offsets = [0, 0], sizes = [2, 16], strides = [1, 1]} : vector<2x64xf32> to vector<2x16xf32>
    %215 = arith.negf %214 : vector<2x16xf32>
    %216 = math.exp %215 : vector<2x16xf32>
    %cst_36 = arith.constant 1.000000e+00 : f32
    %217 = vector.broadcast %cst_36 : f32 to vector<2x16xf32>
    %218 = arith.addf %217, %216 : vector<2x16xf32>
    %219 = arith.divf %217, %218 : vector<2x16xf32>
    %220 = vector.extract_strided_slice %213 {offsets = [0, 16], sizes = [2, 16], strides = [1, 1]} : vector<2x64xf32> to vector<2x16xf32>
    %221 = arith.negf %220 : vector<2x16xf32>
    %222 = math.exp %221 : vector<2x16xf32>
    %cst_37 = arith.constant 1.000000e+00 : f32
    %223 = vector.broadcast %cst_37 : f32 to vector<2x16xf32>
    %224 = arith.addf %223, %222 : vector<2x16xf32>
    %225 = arith.divf %223, %224 : vector<2x16xf32>
    %226 = vector.extract_strided_slice %213 {offsets = [0, 32], sizes = [2, 16], strides = [1, 1]} : vector<2x64xf32> to vector<2x16xf32>
    %227 = math.tanh %226 : vector<2x16xf32>
    %228 = vector.extract_strided_slice %213 {offsets = [0, 48], sizes = [2, 16], strides = [1, 1]} : vector<2x64xf32> to vector<2x16xf32>
    %229 = arith.negf %228 : vector<2x16xf32>
    %230 = math.exp %229 : vector<2x16xf32>
    %cst_38 = arith.constant 1.000000e+00 : f32
    %231 = vector.broadcast %cst_38 : f32 to vector<2x16xf32>
    %232 = arith.addf %231, %230 : vector<2x16xf32>
    %233 = arith.divf %231, %232 : vector<2x16xf32>
    %234 = arith.mulf %225, %203 : vector<2x16xf32>
    %235 = arith.mulf %219, %227 : vector<2x16xf32>
    %236 = arith.addf %234, %235 : vector<2x16xf32>
    %237 = math.tanh %236 : vector<2x16xf32>
    %238 = arith.mulf %233, %237 : vector<2x16xf32>
    %239 = vector.broadcast %211 : vector<2x1xf32> to vector<2x16xf32>
    %240 = arith.mulf %239, %238 : vector<2x16xf32>
    %cst_39 = arith.constant 1.000000e+00 : f32
    %241 = vector.broadcast %cst_39 : f32 to vector<2x1xf32>
    %242 = arith.subf %241, %211 : vector<2x1xf32>
    %243 = vector.broadcast %242 : vector<2x1xf32> to vector<2x16xf32>
    %244 = arith.mulf %243, %196 : vector<2x16xf32>
    %245 = arith.addf %240, %244 : vector<2x16xf32>
    %246 = vector.broadcast %211 : vector<2x1xf32> to vector<2x16xf32>
    %247 = arith.mulf %246, %236 : vector<2x16xf32>
    %cst_40 = arith.constant 1.000000e+00 : f32
    %248 = vector.broadcast %cst_40 : f32 to vector<2x1xf32>
    %249 = arith.subf %248, %211 : vector<2x1xf32>
    %250 = vector.broadcast %249 : vector<2x1xf32> to vector<2x16xf32>
    %251 = arith.mulf %250, %203 : vector<2x16xf32>
    %252 = arith.addf %247, %251 : vector<2x16xf32>
    %253 = vector.broadcast %211 : vector<2x1xf32> to vector<2x16xf32>
    %254 = arith.mulf %245, %253 : vector<2x16xf32>
    %255 = vector.extract_strided_slice %6 {offsets = [5, 0], sizes = [1, 64], strides = [1, 1]} : vector<16x64xf32> to vector<1x64xf32>
    %256 = vector.extract_strided_slice %6 {offsets = [13, 0], sizes = [1, 64], strides = [1, 1]} : vector<16x64xf32> to vector<1x64xf32>
    %257 = tpu.concatenate %255, %256 in 0 : vector<1x64xf32>, vector<1x64xf32> -> vector<2x64xf32>
    %258 = vector.extract_strided_slice %1 {offsets = [5, 0], sizes = [1, 1], strides = [1, 1]} : vector<16x1xf32> to vector<1x1xf32>
    %259 = vector.extract_strided_slice %1 {offsets = [13, 0], sizes = [1, 1], strides = [1, 1]} : vector<16x1xf32> to vector<1x1xf32>
    %260 = tpu.concatenate %258, %259 in 0 : vector<1x1xf32>, vector<1x1xf32> -> vector<2x1xf32>
    %cst_41 = arith.constant dense<0.000000e+00> : vector<2x64xf32>
    %261 = tpu.matmul %245, %7, %cst_41 {dimension_numbers = #tpu.dot_dimension_numbers<[1], [0], [0], [1], [0, 0, 1, 1], [], []>} : vector<2x16xf32>, vector<16x64xf32>, vector<2x64xf32> -> vector<2x64xf32>
    %262 = arith.addf %257, %261 : vector<2x64xf32>
    %263 = vector.extract_strided_slice %262 {offsets = [0, 0], sizes = [2, 16], strides = [1, 1]} : vector<2x64xf32> to vector<2x16xf32>
    %264 = arith.negf %263 : vector<2x16xf32>
    %265 = math.exp %264 : vector<2x16xf32>
    %cst_42 = arith.constant 1.000000e+00 : f32
    %266 = vector.broadcast %cst_42 : f32 to vector<2x16xf32>
    %267 = arith.addf %266, %265 : vector<2x16xf32>
    %268 = arith.divf %266, %267 : vector<2x16xf32>
    %269 = vector.extract_strided_slice %262 {offsets = [0, 16], sizes = [2, 16], strides = [1, 1]} : vector<2x64xf32> to vector<2x16xf32>
    %270 = arith.negf %269 : vector<2x16xf32>
    %271 = math.exp %270 : vector<2x16xf32>
    %cst_43 = arith.constant 1.000000e+00 : f32
    %272 = vector.broadcast %cst_43 : f32 to vector<2x16xf32>
    %273 = arith.addf %272, %271 : vector<2x16xf32>
    %274 = arith.divf %272, %273 : vector<2x16xf32>
    %275 = vector.extract_strided_slice %262 {offsets = [0, 32], sizes = [2, 16], strides = [1, 1]} : vector<2x64xf32> to vector<2x16xf32>
    %276 = math.tanh %275 : vector<2x16xf32>
    %277 = vector.extract_strided_slice %262 {offsets = [0, 48], sizes = [2, 16], strides = [1, 1]} : vector<2x64xf32> to vector<2x16xf32>
    %278 = arith.negf %277 : vector<2x16xf32>
    %279 = math.exp %278 : vector<2x16xf32>
    %cst_44 = arith.constant 1.000000e+00 : f32
    %280 = vector.broadcast %cst_44 : f32 to vector<2x16xf32>
    %281 = arith.addf %280, %279 : vector<2x16xf32>
    %282 = arith.divf %280, %281 : vector<2x16xf32>
    %283 = arith.mulf %274, %252 : vector<2x16xf32>
    %284 = arith.mulf %268, %276 : vector<2x16xf32>
    %285 = arith.addf %283, %284 : vector<2x16xf32>
    %286 = math.tanh %285 : vector<2x16xf32>
    %287 = arith.mulf %282, %286 : vector<2x16xf32>
    %288 = vector.broadcast %260 : vector<2x1xf32> to vector<2x16xf32>
    %289 = arith.mulf %288, %287 : vector<2x16xf32>
    %cst_45 = arith.constant 1.000000e+00 : f32
    %290 = vector.broadcast %cst_45 : f32 to vector<2x1xf32>
    %291 = arith.subf %290, %260 : vector<2x1xf32>
    %292 = vector.broadcast %291 : vector<2x1xf32> to vector<2x16xf32>
    %293 = arith.mulf %292, %245 : vector<2x16xf32>
    %294 = arith.addf %289, %293 : vector<2x16xf32>
    %295 = vector.broadcast %260 : vector<2x1xf32> to vector<2x16xf32>
    %296 = arith.mulf %295, %285 : vector<2x16xf32>
    %cst_46 = arith.constant 1.000000e+00 : f32
    %297 = vector.broadcast %cst_46 : f32 to vector<2x1xf32>
    %298 = arith.subf %297, %260 : vector<2x1xf32>
    %299 = vector.broadcast %298 : vector<2x1xf32> to vector<2x16xf32>
    %300 = arith.mulf %299, %252 : vector<2x16xf32>
    %301 = arith.addf %296, %300 : vector<2x16xf32>
    %302 = vector.broadcast %260 : vector<2x1xf32> to vector<2x16xf32>
    %303 = arith.mulf %294, %302 : vector<2x16xf32>
    %304 = vector.extract_strided_slice %6 {offsets = [6, 0], sizes = [1, 64], strides = [1, 1]} : vector<16x64xf32> to vector<1x64xf32>
    %305 = vector.extract_strided_slice %6 {offsets = [14, 0], sizes = [1, 64], strides = [1, 1]} : vector<16x64xf32> to vector<1x64xf32>
    %306 = tpu.concatenate %304, %305 in 0 : vector<1x64xf32>, vector<1x64xf32> -> vector<2x64xf32>
    %307 = vector.extract_strided_slice %1 {offsets = [6, 0], sizes = [1, 1], strides = [1, 1]} : vector<16x1xf32> to vector<1x1xf32>
    %308 = vector.extract_strided_slice %1 {offsets = [14, 0], sizes = [1, 1], strides = [1, 1]} : vector<16x1xf32> to vector<1x1xf32>
    %309 = tpu.concatenate %307, %308 in 0 : vector<1x1xf32>, vector<1x1xf32> -> vector<2x1xf32>
    %cst_47 = arith.constant dense<0.000000e+00> : vector<2x64xf32>
    %310 = tpu.matmul %294, %7, %cst_47 {dimension_numbers = #tpu.dot_dimension_numbers<[1], [0], [0], [1], [0, 0, 1, 1], [], []>} : vector<2x16xf32>, vector<16x64xf32>, vector<2x64xf32> -> vector<2x64xf32>
    %311 = arith.addf %306, %310 : vector<2x64xf32>
    %312 = vector.extract_strided_slice %311 {offsets = [0, 0], sizes = [2, 16], strides = [1, 1]} : vector<2x64xf32> to vector<2x16xf32>
    %313 = arith.negf %312 : vector<2x16xf32>
    %314 = math.exp %313 : vector<2x16xf32>
    %cst_48 = arith.constant 1.000000e+00 : f32
    %315 = vector.broadcast %cst_48 : f32 to vector<2x16xf32>
    %316 = arith.addf %315, %314 : vector<2x16xf32>
    %317 = arith.divf %315, %316 : vector<2x16xf32>
    %318 = vector.extract_strided_slice %311 {offsets = [0, 16], sizes = [2, 16], strides = [1, 1]} : vector<2x64xf32> to vector<2x16xf32>
    %319 = arith.negf %318 : vector<2x16xf32>
    %320 = math.exp %319 : vector<2x16xf32>
    %cst_49 = arith.constant 1.000000e+00 : f32
    %321 = vector.broadcast %cst_49 : f32 to vector<2x16xf32>
    %322 = arith.addf %321, %320 : vector<2x16xf32>
    %323 = arith.divf %321, %322 : vector<2x16xf32>
    %324 = vector.extract_strided_slice %311 {offsets = [0, 32], sizes = [2, 16], strides = [1, 1]} : vector<2x64xf32> to vector<2x16xf32>
    %325 = math.tanh %324 : vector<2x16xf32>
    %326 = vector.extract_strided_slice %311 {offsets = [0, 48], sizes = [2, 16], strides = [1, 1]} : vector<2x64xf32> to vector<2x16xf32>
    %327 = arith.negf %326 : vector<2x16xf32>
    %328 = math.exp %327 : vector<2x16xf32>
    %cst_50 = arith.constant 1.000000e+00 : f32
    %329 = vector.broadcast %cst_50 : f32 to vector<2x16xf32>
    %330 = arith.addf %329, %328 : vector<2x16xf32>
    %331 = arith.divf %329, %330 : vector<2x16xf32>
    %332 = arith.mulf %323, %301 : vector<2x16xf32>
    %333 = arith.mulf %317, %325 : vector<2x16xf32>
    %334 = arith.addf %332, %333 : vector<2x16xf32>
    %335 = math.tanh %334 : vector<2x16xf32>
    %336 = arith.mulf %331, %335 : vector<2x16xf32>
    %337 = vector.broadcast %309 : vector<2x1xf32> to vector<2x16xf32>
    %338 = arith.mulf %337, %336 : vector<2x16xf32>
    %cst_51 = arith.constant 1.000000e+00 : f32
    %339 = vector.broadcast %cst_51 : f32 to vector<2x1xf32>
    %340 = arith.subf %339, %309 : vector<2x1xf32>
    %341 = vector.broadcast %340 : vector<2x1xf32> to vector<2x16xf32>
    %342 = arith.mulf %341, %294 : vector<2x16xf32>
    %343 = arith.addf %338, %342 : vector<2x16xf32>
    %344 = vector.broadcast %309 : vector<2x1xf32> to vector<2x16xf32>
    %345 = arith.mulf %344, %334 : vector<2x16xf32>
    %cst_52 = arith.constant 1.000000e+00 : f32
    %346 = vector.broadcast %cst_52 : f32 to vector<2x1xf32>
    %347 = arith.subf %346, %309 : vector<2x1xf32>
    %348 = vector.broadcast %347 : vector<2x1xf32> to vector<2x16xf32>
    %349 = arith.mulf %348, %301 : vector<2x16xf32>
    %350 = arith.addf %345, %349 : vector<2x16xf32>
    %351 = vector.broadcast %309 : vector<2x1xf32> to vector<2x16xf32>
    %352 = arith.mulf %343, %351 : vector<2x16xf32>
    %353 = vector.extract_strided_slice %6 {offsets = [7, 0], sizes = [1, 64], strides = [1, 1]} : vector<16x64xf32> to vector<1x64xf32>
    %354 = vector.extract_strided_slice %6 {offsets = [15, 0], sizes = [1, 64], strides = [1, 1]} : vector<16x64xf32> to vector<1x64xf32>
    %355 = tpu.concatenate %353, %354 in 0 : vector<1x64xf32>, vector<1x64xf32> -> vector<2x64xf32>
    %356 = vector.extract_strided_slice %1 {offsets = [7, 0], sizes = [1, 1], strides = [1, 1]} : vector<16x1xf32> to vector<1x1xf32>
    %357 = vector.extract_strided_slice %1 {offsets = [15, 0], sizes = [1, 1], strides = [1, 1]} : vector<16x1xf32> to vector<1x1xf32>
    %358 = tpu.concatenate %356, %357 in 0 : vector<1x1xf32>, vector<1x1xf32> -> vector<2x1xf32>
    %cst_53 = arith.constant dense<0.000000e+00> : vector<2x64xf32>
    %359 = tpu.matmul %343, %7, %cst_53 {dimension_numbers = #tpu.dot_dimension_numbers<[1], [0], [0], [1], [0, 0, 1, 1], [], []>} : vector<2x16xf32>, vector<16x64xf32>, vector<2x64xf32> -> vector<2x64xf32>
    %360 = arith.addf %355, %359 : vector<2x64xf32>
    %361 = vector.extract_strided_slice %360 {offsets = [0, 0], sizes = [2, 16], strides = [1, 1]} : vector<2x64xf32> to vector<2x16xf32>
    %362 = arith.negf %361 : vector<2x16xf32>
    %363 = math.exp %362 : vector<2x16xf32>
    %cst_54 = arith.constant 1.000000e+00 : f32
    %364 = vector.broadcast %cst_54 : f32 to vector<2x16xf32>
    %365 = arith.addf %364, %363 : vector<2x16xf32>
    %366 = arith.divf %364, %365 : vector<2x16xf32>
    %367 = vector.extract_strided_slice %360 {offsets = [0, 16], sizes = [2, 16], strides = [1, 1]} : vector<2x64xf32> to vector<2x16xf32>
    %368 = arith.negf %367 : vector<2x16xf32>
    %369 = math.exp %368 : vector<2x16xf32>
    %cst_55 = arith.constant 1.000000e+00 : f32
    %370 = vector.broadcast %cst_55 : f32 to vector<2x16xf32>
    %371 = arith.addf %370, %369 : vector<2x16xf32>
    %372 = arith.divf %370, %371 : vector<2x16xf32>
    %373 = vector.extract_strided_slice %360 {offsets = [0, 32], sizes = [2, 16], strides = [1, 1]} : vector<2x64xf32> to vector<2x16xf32>
    %374 = math.tanh %373 : vector<2x16xf32>
    %375 = vector.extract_strided_slice %360 {offsets = [0, 48], sizes = [2, 16], strides = [1, 1]} : vector<2x64xf32> to vector<2x16xf32>
    %376 = arith.negf %375 : vector<2x16xf32>
    %377 = math.exp %376 : vector<2x16xf32>
    %cst_56 = arith.constant 1.000000e+00 : f32
    %378 = vector.broadcast %cst_56 : f32 to vector<2x16xf32>
    %379 = arith.addf %378, %377 : vector<2x16xf32>
    %380 = arith.divf %378, %379 : vector<2x16xf32>
    %381 = arith.mulf %372, %350 : vector<2x16xf32>
    %382 = arith.mulf %366, %374 : vector<2x16xf32>
    %383 = arith.addf %381, %382 : vector<2x16xf32>
    %384 = math.tanh %383 : vector<2x16xf32>
    %385 = arith.mulf %380, %384 : vector<2x16xf32>
    %386 = vector.broadcast %358 : vector<2x1xf32> to vector<2x16xf32>
    %387 = arith.mulf %386, %385 : vector<2x16xf32>
    %cst_57 = arith.constant 1.000000e+00 : f32
    %388 = vector.broadcast %cst_57 : f32 to vector<2x1xf32>
    %389 = arith.subf %388, %358 : vector<2x1xf32>
    %390 = vector.broadcast %389 : vector<2x1xf32> to vector<2x16xf32>
    %391 = arith.mulf %390, %343 : vector<2x16xf32>
    %392 = arith.addf %387, %391 : vector<2x16xf32>
    %393 = vector.broadcast %358 : vector<2x1xf32> to vector<2x16xf32>
    %394 = arith.mulf %392, %393 : vector<2x16xf32>
    %395 = vector.broadcast %1 : vector<16x1xf32> to vector<16x16xf32>
    %396 = arith.mulf %0, %395 : vector<16x16xf32>
    %c0_58 = arith.constant 0 : index
    %c0_59 = arith.constant 0 : index
    %397 = vector.load %arg32[%c0_58, %c0_59] : memref<20x32xf32, #tpu.memory_space<vmem>>, vector<16x16xf32>
    tpu.vector_store %arg32[%c0_58, %c0_59], %396 {strides = array<i32>} : memref<20x32xf32, #tpu.memory_space<vmem>>, vector<16x16xf32>,
    %398 = vector.extract_strided_slice %58 {offsets = [0, 0], sizes = [1, 16], strides = [1, 1]} : vector<2x16xf32> to vector<1x16xf32>
    %399 = vector.extract_strided_slice %107 {offsets = [0, 0], sizes = [1, 16], strides = [1, 1]} : vector<2x16xf32> to vector<1x16xf32>
    %400 = vector.extract_strided_slice %156 {offsets = [0, 0], sizes = [1, 16], strides = [1, 1]} : vector<2x16xf32> to vector<1x16xf32>
    %401 = vector.extract_strided_slice %205 {offsets = [0, 0], sizes = [1, 16], strides = [1, 1]} : vector<2x16xf32> to vector<1x16xf32>
    %402 = vector.extract_strided_slice %254 {offsets = [0, 0], sizes = [1, 16], strides = [1, 1]} : vector<2x16xf32> to vector<1x16xf32>
    %403 = vector.extract_strided_slice %303 {offsets = [0, 0], sizes = [1, 16], strides = [1, 1]} : vector<2x16xf32> to vector<1x16xf32>
    %404 = vector.extract_strided_slice %352 {offsets = [0, 0], sizes = [1, 16], strides = [1, 1]} : vector<2x16xf32> to vector<1x16xf32>
    %405 = vector.extract_strided_slice %394 {offsets = [0, 0], sizes = [1, 16], strides = [1, 1]} : vector<2x16xf32> to vector<1x16xf32>
    %406 = tpu.concatenate %398, %399, %400, %401, %402, %403, %404, %405 in 0 : vector<1x16xf32>, vector<1x16xf32>, vector<1x16xf32>, vector<1x16xf32>, vector<1x16xf32>, vector<1x16xf32>, vector<1x16xf32>, vector<1x16xf32> -> vector<8x16xf32>
    %c0_60 = arith.constant 0 : index
    %c16 = arith.constant 16 : index
    %407 = vector.load %arg32[%c0_60, %c16] : memref<20x32xf32, #tpu.memory_space<vmem>>, vector<8x16xf32>
    tpu.vector_store %arg32[%c0_60, %c16], %406 {strides = array<i32>} : memref<20x32xf32, #tpu.memory_space<vmem>>, vector<8x16xf32>,
    %408 = vector.extract_strided_slice %58 {offsets = [1, 0], sizes = [1, 16], strides = [1, 1]} : vector<2x16xf32> to vector<1x16xf32>
    %409 = vector.extract_strided_slice %107 {offsets = [1, 0], sizes = [1, 16], strides = [1, 1]} : vector<2x16xf32> to vector<1x16xf32>
    %410 = vector.extract_strided_slice %156 {offsets = [1, 0], sizes = [1, 16], strides = [1, 1]} : vector<2x16xf32> to vector<1x16xf32>
    %411 = vector.extract_strided_slice %205 {offsets = [1, 0], sizes = [1, 16], strides = [1, 1]} : vector<2x16xf32> to vector<1x16xf32>
    %412 = vector.extract_strided_slice %254 {offsets = [1, 0], sizes = [1, 16], strides = [1, 1]} : vector<2x16xf32> to vector<1x16xf32>
    %413 = vector.extract_strided_slice %303 {offsets = [1, 0], sizes = [1, 16], strides = [1, 1]} : vector<2x16xf32> to vector<1x16xf32>
    %414 = vector.extract_strided_slice %352 {offsets = [1, 0], sizes = [1, 16], strides = [1, 1]} : vector<2x16xf32> to vector<1x16xf32>
    %415 = vector.extract_strided_slice %394 {offsets = [1, 0], sizes = [1, 16], strides = [1, 1]} : vector<2x16xf32> to vector<1x16xf32>
    %416 = tpu.concatenate %408, %409, %410, %411, %412, %413, %414, %415 in 0 : vector<1x16xf32>, vector<1x16xf32>, vector<1x16xf32>, vector<1x16xf32>, vector<1x16xf32>, vector<1x16xf32>, vector<1x16xf32>, vector<1x16xf32> -> vector<8x16xf32>
    %c8 = arith.constant 8 : index
    %c16_61 = arith.constant 16 : index
    %417 = vector.load %arg32[%c8, %c16_61] : memref<20x32xf32, #tpu.memory_space<vmem>>, vector<8x16xf32>
    tpu.vector_store %arg32[%c8, %c16_61], %416 {strides = array<i32>} : memref<20x32xf32, #tpu.memory_space<vmem>>, vector<8x16xf32>,
    %c0_62 = arith.constant 0 : index
    %c0_63 = arith.constant 0 : index
    %418 = vector.load %arg2[%c0_62, %c0_63] : memref<32x4xf32, #tpu.memory_space<vmem>>, vector<32x4xf32>
    %c0_64 = arith.constant 0 : index
    %c0_65 = arith.constant 0 : index
    %419 = vector.load %arg10[%c0_64, %c0_65] : memref<4x32xf32, #tpu.memory_space<vmem>>, vector<4x32xf32>
    %cst_66 = arith.constant dense<0.000000e+00> : vector<32x32xf32>
    %420 = tpu.matmul %418, %419, %cst_66 {dimension_numbers = #tpu.dot_dimension_numbers<[1], [0], [0], [1], [0, 0, 1, 1], [], []>} : vector<32x4xf32>, vector<4x32xf32>, vector<32x32xf32> -> vector<32x32xf32>
    %c0_67 = arith.constant 0 : index
    %c0_68 = arith.constant 0 : index
    %421 = vector.load %arg11[%c0_67, %c0_68] : memref<16x32xf32, #tpu.memory_space<vmem>>, vector<16x32xf32>
    %cst_69 = arith.constant dense<0.000000e+00> : vector<2x32xf32>
    %422 = tpu.matmul %392, %421, %cst_69 {dimension_numbers = #tpu.dot_dimension_numbers<[1], [0], [0], [1], [0, 0, 1, 1], [], []>} : vector<2x16xf32>, vector<16x32xf32>, vector<2x32xf32> -> vector<2x32xf32>
    %c0_70 = arith.constant 0 : index
    %c0_71 = arith.constant 0 : index
    %423 = vector.load %arg12[%c0_70, %c0_71] : memref<1x32xf32, #tpu.memory_space<vmem>>, vector<1x32xf32>
    %424 = vector.extract_strided_slice %420 {offsets = [0, 0], sizes = [16, 32], strides = [1, 1]} : vector<32x32xf32> to vector<16x32xf32>
    %425 = vector.extract_strided_slice %422 {offsets = [0, 0], sizes = [1, 32], strides = [1, 1]} : vector<2x32xf32> to vector<1x32xf32>
    %426 = vector.broadcast %425 : vector<1x32xf32> to vector<16x32xf32>
    %427 = arith.addf %424, %426 : vector<16x32xf32>
    %428 = vector.broadcast %423 : vector<1x32xf32> to vector<16x32xf32>
    %429 = arith.addf %427, %428 : vector<16x32xf32>
    %cst_72 = arith.constant 0.000000e+00 : f32
    %430 = vector.broadcast %cst_72 : f32 to vector<16x32xf32>
    %431 = arith.maximumf %429, %430 : vector<16x32xf32>
    %c0_73 = arith.constant 0 : index
    %c0_74 = arith.constant 0 : index
    %432 = vector.load %arg31[%c0_73, %c0_74] : memref<36x32xf32, #tpu.memory_space<vmem>>, vector<16x32xf32>
    tpu.vector_store %arg31[%c0_73, %c0_74], %431 {strides = array<i32>} : memref<36x32xf32, #tpu.memory_space<vmem>>, vector<16x32xf32>,
    %433 = vector.extract_strided_slice %420 {offsets = [16, 0], sizes = [16, 32], strides = [1, 1]} : vector<32x32xf32> to vector<16x32xf32>
    %434 = vector.extract_strided_slice %422 {offsets = [1, 0], sizes = [1, 32], strides = [1, 1]} : vector<2x32xf32> to vector<1x32xf32>
    %435 = vector.broadcast %434 : vector<1x32xf32> to vector<16x32xf32>
    %436 = arith.addf %433, %435 : vector<16x32xf32>
    %437 = vector.broadcast %423 : vector<1x32xf32> to vector<16x32xf32>
    %438 = arith.addf %436, %437 : vector<16x32xf32>
    %cst_75 = arith.constant 0.000000e+00 : f32
    %439 = vector.broadcast %cst_75 : f32 to vector<16x32xf32>
    %440 = arith.maximumf %438, %439 : vector<16x32xf32>
    %c16_76 = arith.constant 16 : index
    %c0_77 = arith.constant 0 : index
    %441 = vector.load %arg31[%c16_76, %c0_77] : memref<36x32xf32, #tpu.memory_space<vmem>>, vector<16x32xf32>
    tpu.vector_store %arg31[%c16_76, %c0_77], %440 {strides = array<i32>} : memref<36x32xf32, #tpu.memory_space<vmem>>, vector<16x32xf32>,
    %c0_78 = arith.constant 0 : index
    %c0_79 = arith.constant 0 : index
    %442 = vector.load %arg3[%c0_78, %c0_79] : memref<32x20xf32, #tpu.memory_space<vmem>>, vector<32x20xf32>
    %cst_80 = arith.constant 1.000000e+00 : f32
    %443 = vector.broadcast %cst_80 : f32 to vector<32x20xf32>
    %444 = arith.subf %442, %443 : vector<32x20xf32>
    %cst_81 = arith.constant 1.000000e+09 : f32
    %445 = vector.broadcast %cst_81 : f32 to vector<32x20xf32>
    %446 = arith.mulf %444, %445 : vector<32x20xf32>
    %c0_82 = arith.constant 0 : index
    %c0_83 = arith.constant 0 : index
    %447 = vector.load %arg4[%c0_82, %c0_83] : memref<16x36xf32, #tpu.memory_space<vmem>>, vector<16x36xf32>
    %cst_84 = arith.constant 1.000000e+00 : f32
    %448 = vector.broadcast %cst_84 : f32 to vector<16x36xf32>
    %449 = arith.subf %447, %448 : vector<16x36xf32>
    %cst_85 = arith.constant 1.000000e+09 : f32
    %450 = vector.broadcast %cst_85 : f32 to vector<16x36xf32>
    %451 = arith.mulf %449, %450 : vector<16x36xf32>
    %c0_86 = arith.constant 0 : index
    %c0_87 = arith.constant 0 : index
    %c0_88 = arith.constant 0 : index
    %452 = vector.load %arg13[%c0_86, %c0_87, %c0_88] : memref<2x2x32xf32, #tpu.memory_space<vmem>>, vector<1x2x32xf32>
    %453 = vector.shape_cast %452 : vector<1x2x32xf32> to vector<2x32xf32>
    %c32 = arith.constant 32 : index
    %c0_89 = arith.constant 0 : index
    %454 = vector.load %arg31[%c32, %c0_89] : memref<36x32xf32, #tpu.memory_space<vmem>>, vector<2x32xf32>
    tpu.vector_store %arg31[%c32, %c0_89], %453 {strides = array<i32>} : memref<36x32xf32, #tpu.memory_space<vmem>>, vector<2x32xf32>,
    %c0_90 = arith.constant 0 : index
    %c0_91 = arith.constant 0 : index
    %c0_92 = arith.constant 0 : index
    %455 = vector.load %arg14[%c0_90, %c0_91, %c0_92] : memref<2x2x32xf32, #tpu.memory_space<vmem>>, vector<1x2x32xf32>
    %456 = vector.shape_cast %455 : vector<1x2x32xf32> to vector<2x32xf32>
    %c16_93 = arith.constant 16 : index
    %c0_94 = arith.constant 0 : index
    %457 = vector.load %arg32[%c16_93, %c0_94] : memref<20x32xf32, #tpu.memory_space<vmem>>, vector<2x32xf32>
    tpu.vector_store %arg32[%c16_93, %c0_94], %456 {strides = array<i32>} : memref<20x32xf32, #tpu.memory_space<vmem>>, vector<2x32xf32>,
    %c0_95 = arith.constant 0 : index
    %c0_96 = arith.constant 0 : index
    %c0_97 = arith.constant 0 : index
    %458 = vector.load %arg13[%c0_95, %c0_96, %c0_97] : memref<2x2x32xf32, #tpu.memory_space<vmem>>, vector<1x2x32xf32>
    %459 = vector.shape_cast %458 : vector<1x2x32xf32> to vector<2x32xf32>
    %c34 = arith.constant 34 : index
    %c0_98 = arith.constant 0 : index
    %460 = vector.load %arg31[%c34, %c0_98] : memref<36x32xf32, #tpu.memory_space<vmem>>, vector<2x32xf32>
    tpu.vector_store %arg31[%c34, %c0_98], %459 {strides = array<i32>} : memref<36x32xf32, #tpu.memory_space<vmem>>, vector<2x32xf32>,
    %c0_99 = arith.constant 0 : index
    %c0_100 = arith.constant 0 : index
    %c0_101 = arith.constant 0 : index
    %461 = vector.load %arg14[%c0_99, %c0_100, %c0_101] : memref<2x2x32xf32, #tpu.memory_space<vmem>>, vector<1x2x32xf32>
    %462 = vector.shape_cast %461 : vector<1x2x32xf32> to vector<2x32xf32>
    %c18 = arith.constant 18 : index
    %c0_102 = arith.constant 0 : index
    %463 = vector.load %arg32[%c18, %c0_102] : memref<20x32xf32, #tpu.memory_space<vmem>>, vector<2x32xf32>
    tpu.vector_store %arg32[%c18, %c0_102], %462 {strides = array<i32>} : memref<20x32xf32, #tpu.memory_space<vmem>>, vector<2x32xf32>,
    %c0_103 = arith.constant 0 : index
    %c0_104 = arith.constant 0 : index
    %464 = vector.load %arg31[%c0_103, %c0_104] : memref<36x32xf32, #tpu.memory_space<vmem>>, vector<36x32xf32>
    %c0_105 = arith.constant 0 : index
    %c0_106 = arith.constant 0 : index
    %465 = vector.load %arg32[%c0_105, %c0_106] : memref<20x32xf32, #tpu.memory_space<vmem>>, vector<20x32xf32>
    %466 = vector.extract_strided_slice %464 {offsets = [0, 0], sizes = [32, 32], strides = [1, 1]} : vector<36x32xf32> to vector<32x32xf32>
    %467 = vector.extract_strided_slice %465 {offsets = [0, 0], sizes = [16, 32], strides = [1, 1]} : vector<20x32xf32> to vector<16x32xf32>
    %c0_107 = arith.constant 0 : index
    %c0_108 = arith.constant 0 : index
    %c0_109 = arith.constant 0 : index
    %468 = vector.load %arg15[%c0_107, %c0_108, %c0_109] : memref<2x32x64xf32, #tpu.memory_space<vmem>>, vector<1x32x64xf32>
    %469 = vector.shape_cast %468 : vector<1x32x64xf32> to vector<32x64xf32>
    %cst_110 = arith.constant dense<0.000000e+00> : vector<36x64xf32>
    %470 = tpu.matmul %464, %469, %cst_110 {dimension_numbers = #tpu.dot_dimension_numbers<[1], [0], [0], [1], [0, 0, 1, 1], [], []>} : vector<36x32xf32>, vector<32x64xf32>, vector<36x64xf32> -> vector<36x64xf32>
    %c0_111 = arith.constant 0 : index
    %c0_112 = arith.constant 0 : index
    %c0_113 = arith.constant 0 : index
    %471 = vector.load %arg16[%c0_111, %c0_112, %c0_113] : memref<2x32x64xf32, #tpu.memory_space<vmem>>, vector<1x32x64xf32>
    %472 = vector.shape_cast %471 : vector<1x32x64xf32> to vector<32x64xf32>
    %cst_114 = arith.constant dense<0.000000e+00> : vector<20x64xf32>
    %473 = tpu.matmul %465, %472, %cst_114 {dimension_numbers = #tpu.dot_dimension_numbers<[1], [0], [0], [1], [0, 0, 1, 1], [], []>} : vector<20x32xf32>, vector<32x64xf32>, vector<20x64xf32> -> vector<20x64xf32>
    %474 = vector.extract_strided_slice %470 {offsets = [0, 0], sizes = [32, 32], strides = [1, 1]} : vector<36x64xf32> to vector<32x32xf32>
    %475 = vector.extract_strided_slice %470 {offsets = [0, 32], sizes = [36, 32], strides = [1, 1]} : vector<36x64xf32> to vector<36x32xf32>
    %476 = vector.extract_strided_slice %473 {offsets = [0, 0], sizes = [20, 32], strides = [1, 1]} : vector<20x64xf32> to vector<20x32xf32>
    %477 = vector.extract_strided_slice %473 {offsets = [0, 32], sizes = [16, 32], strides = [1, 1]} : vector<20x64xf32> to vector<16x32xf32>
    %cst_115 = arith.constant dense<0.000000e+00> : vector<32x20xf32>
    %478 = tpu.matmul %474, %476, %cst_115 {dimension_numbers = #tpu.dot_dimension_numbers<[1], [1], [0], [0], [0, 0, 1, 0], [], []>} : vector<32x32xf32>, vector<20x32xf32>, vector<32x20xf32> -> vector<32x20xf32>
    %cst_116 = arith.constant 0.176776692 : f32
    %479 = vector.broadcast %cst_116 : f32 to vector<32x20xf32>
    %480 = arith.mulf %478, %479 : vector<32x20xf32>
    %481 = arith.addf %480, %446 : vector<32x20xf32>
    %cst_117 = arith.constant dense<0xFF800000> : vector<32xf32>
    %482 = vector.multi_reduction <maximumf>, %481, %cst_117 [1] : vector<32x20xf32> to vector<32xf32>
    %483 = vector.shape_cast %482 : vector<32xf32> to vector<32x1xf32>
    %484 = vector.broadcast %483 : vector<32x1xf32> to vector<32x20xf32>
    %485 = arith.subf %481, %484 : vector<32x20xf32>
    %486 = math.exp %485 : vector<32x20xf32>
    %cst_118 = arith.constant dense<0.000000e+00> : vector<32xf32>
    %487 = vector.multi_reduction <add>, %486, %cst_118 [1] : vector<32x20xf32> to vector<32xf32>
    %488 = vector.shape_cast %487 : vector<32xf32> to vector<32x1xf32>
    %489 = tpu.reciprocal %488 {approx = true} : vector<32x1xf32> -> vector<32x1xf32>
    %490 = vector.broadcast %489 : vector<32x1xf32> to vector<32x20xf32>
    %491 = arith.mulf %486, %490 : vector<32x20xf32>
    %cst_119 = arith.constant dense<0.000000e+00> : vector<32x32xf32>
    %492 = tpu.matmul %491, %465, %cst_119 {dimension_numbers = #tpu.dot_dimension_numbers<[1], [0], [0], [1], [0, 0, 1, 1], [], []>} : vector<32x20xf32>, vector<20x32xf32>, vector<32x32xf32> -> vector<32x32xf32>
    %cst_120 = arith.constant dense<0.000000e+00> : vector<16x36xf32>
    %493 = tpu.matmul %477, %475, %cst_120 {dimension_numbers = #tpu.dot_dimension_numbers<[1], [1], [0], [0], [0, 0, 1, 0], [], []>} : vector<16x32xf32>, vector<36x32xf32>, vector<16x36xf32> -> vector<16x36xf32>
    %cst_121 = arith.constant 0.176776692 : f32
    %494 = vector.broadcast %cst_121 : f32 to vector<16x36xf32>
    %495 = arith.mulf %493, %494 : vector<16x36xf32>
    %496 = arith.addf %495, %451 : vector<16x36xf32>
    %cst_122 = arith.constant dense<0xFF800000> : vector<16xf32>
    %497 = vector.multi_reduction <maximumf>, %496, %cst_122 [1] : vector<16x36xf32> to vector<16xf32>
    %498 = vector.shape_cast %497 : vector<16xf32> to vector<16x1xf32>
    %499 = vector.broadcast %498 : vector<16x1xf32> to vector<16x36xf32>
    %500 = arith.subf %496, %499 : vector<16x36xf32>
    %501 = math.exp %500 : vector<16x36xf32>
    %cst_123 = arith.constant dense<0.000000e+00> : vector<16xf32>
    %502 = vector.multi_reduction <add>, %501, %cst_123 [1] : vector<16x36xf32> to vector<16xf32>
    %503 = vector.shape_cast %502 : vector<16xf32> to vector<16x1xf32>
    %504 = tpu.reciprocal %503 {approx = true} : vector<16x1xf32> -> vector<16x1xf32>
    %505 = vector.broadcast %504 : vector<16x1xf32> to vector<16x36xf32>
    %506 = arith.mulf %501, %505 : vector<16x36xf32>
    %cst_124 = arith.constant dense<0.000000e+00> : vector<16x32xf32>
    %507 = tpu.matmul %506, %464, %cst_124 {dimension_numbers = #tpu.dot_dimension_numbers<[1], [0], [0], [1], [0, 0, 1, 1], [], []>} : vector<16x36xf32>, vector<36x32xf32>, vector<16x32xf32> -> vector<16x32xf32>
    %c0_125 = arith.constant 0 : index
    %c0_126 = arith.constant 0 : index
    %c0_127 = arith.constant 0 : index
    %508 = vector.load %arg17[%c0_125, %c0_126, %c0_127] : memref<2x32x32xf32, #tpu.memory_space<vmem>>, vector<1x32x32xf32>
    %509 = vector.shape_cast %508 : vector<1x32x32xf32> to vector<32x32xf32>
    %cst_128 = arith.constant dense<0.000000e+00> : vector<32x32xf32>
    %510 = tpu.matmul %466, %509, %cst_128 {dimension_numbers = #tpu.dot_dimension_numbers<[1], [0], [0], [1], [0, 0, 1, 1], [], []>} : vector<32x32xf32>, vector<32x32xf32>, vector<32x32xf32> -> vector<32x32xf32>
    %c0_129 = arith.constant 0 : index
    %c0_130 = arith.constant 0 : index
    %c0_131 = arith.constant 0 : index
    %511 = vector.load %arg18[%c0_129, %c0_130, %c0_131] : memref<2x32x32xf32, #tpu.memory_space<vmem>>, vector<1x32x32xf32>
    %512 = vector.shape_cast %511 : vector<1x32x32xf32> to vector<32x32xf32>
    %cst_132 = arith.constant dense<0.000000e+00> : vector<32x32xf32>
    %513 = tpu.matmul %492, %512, %cst_132 {dimension_numbers = #tpu.dot_dimension_numbers<[1], [0], [0], [1], [0, 0, 1, 1], [], []>} : vector<32x32xf32>, vector<32x32xf32>, vector<32x32xf32> -> vector<32x32xf32>
    %514 = arith.addf %510, %513 : vector<32x32xf32>
    %c0_133 = arith.constant 0 : index
    %c0_134 = arith.constant 0 : index
    %c0_135 = arith.constant 0 : index
    %515 = vector.load %arg19[%c0_133, %c0_134, %c0_135] : memref<2x1x32xf32, #tpu.memory_space<vmem>>, vector<1x1x32xf32>
    %516 = vector.shape_cast %515 : vector<1x1x32xf32> to vector<1x32xf32>
    %517 = vector.broadcast %516 : vector<1x32xf32> to vector<32x32xf32>
    %518 = arith.addf %514, %517 : vector<32x32xf32>
    %cst_136 = arith.constant 0.000000e+00 : f32
    %519 = vector.broadcast %cst_136 : f32 to vector<32x32xf32>
    %520 = arith.maximumf %518, %519 : vector<32x32xf32>
    %521 = arith.addf %520, %466 : vector<32x32xf32>
    %c0_137 = arith.constant 0 : index
    %c0_138 = arith.constant 0 : index
    %c0_139 = arith.constant 0 : index
    %522 = vector.load %arg20[%c0_137, %c0_138, %c0_139] : memref<2x32x32xf32, #tpu.memory_space<vmem>>, vector<1x32x32xf32>
    %523 = vector.shape_cast %522 : vector<1x32x32xf32> to vector<32x32xf32>
    %cst_140 = arith.constant dense<0.000000e+00> : vector<16x32xf32>
    %524 = tpu.matmul %467, %523, %cst_140 {dimension_numbers = #tpu.dot_dimension_numbers<[1], [0], [0], [1], [0, 0, 1, 1], [], []>} : vector<16x32xf32>, vector<32x32xf32>, vector<16x32xf32> -> vector<16x32xf32>
    %c0_141 = arith.constant 0 : index
    %c0_142 = arith.constant 0 : index
    %c0_143 = arith.constant 0 : index
    %525 = vector.load %arg21[%c0_141, %c0_142, %c0_143] : memref<2x32x32xf32, #tpu.memory_space<vmem>>, vector<1x32x32xf32>
    %526 = vector.shape_cast %525 : vector<1x32x32xf32> to vector<32x32xf32>
    %cst_144 = arith.constant dense<0.000000e+00> : vector<16x32xf32>
    %527 = tpu.matmul %507, %526, %cst_144 {dimension_numbers = #tpu.dot_dimension_numbers<[1], [0], [0], [1], [0, 0, 1, 1], [], []>} : vector<16x32xf32>, vector<32x32xf32>, vector<16x32xf32> -> vector<16x32xf32>
    %528 = arith.addf %524, %527 : vector<16x32xf32>
    %c0_145 = arith.constant 0 : index
    %c0_146 = arith.constant 0 : index
    %c0_147 = arith.constant 0 : index
    %529 = vector.load %arg22[%c0_145, %c0_146, %c0_147] : memref<2x1x32xf32, #tpu.memory_space<vmem>>, vector<1x1x32xf32>
    %530 = vector.shape_cast %529 : vector<1x1x32xf32> to vector<1x32xf32>
    %531 = vector.broadcast %530 : vector<1x32xf32> to vector<16x32xf32>
    %532 = arith.addf %528, %531 : vector<16x32xf32>
    %cst_148 = arith.constant 0.000000e+00 : f32
    %533 = vector.broadcast %cst_148 : f32 to vector<16x32xf32>
    %534 = arith.maximumf %532, %533 : vector<16x32xf32>
    %535 = arith.addf %534, %467 : vector<16x32xf32>
    %c0_149 = arith.constant 0 : index
    %c0_150 = arith.constant 0 : index
    %536 = vector.load %arg31[%c0_149, %c0_150] : memref<36x32xf32, #tpu.memory_space<vmem>>, vector<32x32xf32>
    tpu.vector_store %arg31[%c0_149, %c0_150], %521 {strides = array<i32>} : memref<36x32xf32, #tpu.memory_space<vmem>>, vector<32x32xf32>,
    %c0_151 = arith.constant 0 : index
    %c0_152 = arith.constant 0 : index
    %537 = vector.load %arg32[%c0_151, %c0_152] : memref<20x32xf32, #tpu.memory_space<vmem>>, vector<16x32xf32>
    tpu.vector_store %arg32[%c0_151, %c0_152], %535 {strides = array<i32>} : memref<20x32xf32, #tpu.memory_space<vmem>>, vector<16x32xf32>,
    %c1 = arith.constant 1 : index
    %c0_153 = arith.constant 0 : index
    %c0_154 = arith.constant 0 : index
    %538 = vector.load %arg13[%c1, %c0_153, %c0_154] : memref<2x2x32xf32, #tpu.memory_space<vmem>>, vector<1x2x32xf32>
    %539 = vector.shape_cast %538 : vector<1x2x32xf32> to vector<2x32xf32>
    %c32_155 = arith.constant 32 : index
    %c0_156 = arith.constant 0 : index
    %540 = vector.load %arg31[%c32_155, %c0_156] : memref<36x32xf32, #tpu.memory_space<vmem>>, vector<2x32xf32>
    tpu.vector_store %arg31[%c32_155, %c0_156], %539 {strides = array<i32>} : memref<36x32xf32, #tpu.memory_space<vmem>>, vector<2x32xf32>,
    %c1_157 = arith.constant 1 : index
    %c0_158 = arith.constant 0 : index
    %c0_159 = arith.constant 0 : index
    %541 = vector.load %arg14[%c1_157, %c0_158, %c0_159] : memref<2x2x32xf32, #tpu.memory_space<vmem>>, vector<1x2x32xf32>
    %542 = vector.shape_cast %541 : vector<1x2x32xf32> to vector<2x32xf32>
    %c16_160 = arith.constant 16 : index
    %c0_161 = arith.constant 0 : index
    %543 = vector.load %arg32[%c16_160, %c0_161] : memref<20x32xf32, #tpu.memory_space<vmem>>, vector<2x32xf32>
    tpu.vector_store %arg32[%c16_160, %c0_161], %542 {strides = array<i32>} : memref<20x32xf32, #tpu.memory_space<vmem>>, vector<2x32xf32>,
    %c1_162 = arith.constant 1 : index
    %c0_163 = arith.constant 0 : index
    %c0_164 = arith.constant 0 : index
    %544 = vector.load %arg13[%c1_162, %c0_163, %c0_164] : memref<2x2x32xf32, #tpu.memory_space<vmem>>, vector<1x2x32xf32>
    %545 = vector.shape_cast %544 : vector<1x2x32xf32> to vector<2x32xf32>
    %c34_165 = arith.constant 34 : index
    %c0_166 = arith.constant 0 : index
    %546 = vector.load %arg31[%c34_165, %c0_166] : memref<36x32xf32, #tpu.memory_space<vmem>>, vector<2x32xf32>
    tpu.vector_store %arg31[%c34_165, %c0_166], %545 {strides = array<i32>} : memref<36x32xf32, #tpu.memory_space<vmem>>, vector<2x32xf32>,
    %c1_167 = arith.constant 1 : index
    %c0_168 = arith.constant 0 : index
    %c0_169 = arith.constant 0 : index
    %547 = vector.load %arg14[%c1_167, %c0_168, %c0_169] : memref<2x2x32xf32, #tpu.memory_space<vmem>>, vector<1x2x32xf32>
    %548 = vector.shape_cast %547 : vector<1x2x32xf32> to vector<2x32xf32>
    %c18_170 = arith.constant 18 : index
    %c0_171 = arith.constant 0 : index
    %549 = vector.load %arg32[%c18_170, %c0_171] : memref<20x32xf32, #tpu.memory_space<vmem>>, vector<2x32xf32>
    tpu.vector_store %arg32[%c18_170, %c0_171], %548 {strides = array<i32>} : memref<20x32xf32, #tpu.memory_space<vmem>>, vector<2x32xf32>,
    %c0_172 = arith.constant 0 : index
    %c0_173 = arith.constant 0 : index
    %550 = vector.load %arg31[%c0_172, %c0_173] : memref<36x32xf32, #tpu.memory_space<vmem>>, vector<36x32xf32>
    %c0_174 = arith.constant 0 : index
    %c0_175 = arith.constant 0 : index
    %551 = vector.load %arg32[%c0_174, %c0_175] : memref<20x32xf32, #tpu.memory_space<vmem>>, vector<20x32xf32>
    %552 = vector.extract_strided_slice %550 {offsets = [0, 0], sizes = [32, 32], strides = [1, 1]} : vector<36x32xf32> to vector<32x32xf32>
    %553 = vector.extract_strided_slice %551 {offsets = [0, 0], sizes = [16, 32], strides = [1, 1]} : vector<20x32xf32> to vector<16x32xf32>
    %c1_176 = arith.constant 1 : index
    %c0_177 = arith.constant 0 : index
    %c0_178 = arith.constant 0 : index
    %554 = vector.load %arg15[%c1_176, %c0_177, %c0_178] : memref<2x32x64xf32, #tpu.memory_space<vmem>>, vector<1x32x64xf32>
    %555 = vector.shape_cast %554 : vector<1x32x64xf32> to vector<32x64xf32>
    %cst_179 = arith.constant dense<0.000000e+00> : vector<36x64xf32>
    %556 = tpu.matmul %550, %555, %cst_179 {dimension_numbers = #tpu.dot_dimension_numbers<[1], [0], [0], [1], [0, 0, 1, 1], [], []>} : vector<36x32xf32>, vector<32x64xf32>, vector<36x64xf32> -> vector<36x64xf32>
    %c1_180 = arith.constant 1 : index
    %c0_181 = arith.constant 0 : index
    %c0_182 = arith.constant 0 : index
    %557 = vector.load %arg16[%c1_180, %c0_181, %c0_182] : memref<2x32x64xf32, #tpu.memory_space<vmem>>, vector<1x32x64xf32>
    %558 = vector.shape_cast %557 : vector<1x32x64xf32> to vector<32x64xf32>
    %cst_183 = arith.constant dense<0.000000e+00> : vector<20x64xf32>
    %559 = tpu.matmul %551, %558, %cst_183 {dimension_numbers = #tpu.dot_dimension_numbers<[1], [0], [0], [1], [0, 0, 1, 1], [], []>} : vector<20x32xf32>, vector<32x64xf32>, vector<20x64xf32> -> vector<20x64xf32>
    %560 = vector.extract_strided_slice %556 {offsets = [0, 0], sizes = [32, 32], strides = [1, 1]} : vector<36x64xf32> to vector<32x32xf32>
    %561 = vector.extract_strided_slice %556 {offsets = [0, 32], sizes = [36, 32], strides = [1, 1]} : vector<36x64xf32> to vector<36x32xf32>
    %562 = vector.extract_strided_slice %559 {offsets = [0, 0], sizes = [20, 32], strides = [1, 1]} : vector<20x64xf32> to vector<20x32xf32>
    %563 = vector.extract_strided_slice %559 {offsets = [0, 32], sizes = [16, 32], strides = [1, 1]} : vector<20x64xf32> to vector<16x32xf32>
    %cst_184 = arith.constant dense<0.000000e+00> : vector<32x20xf32>
    %564 = tpu.matmul %560, %562, %cst_184 {dimension_numbers = #tpu.dot_dimension_numbers<[1], [1], [0], [0], [0, 0, 1, 0], [], []>} : vector<32x32xf32>, vector<20x32xf32>, vector<32x20xf32> -> vector<32x20xf32>
    %cst_185 = arith.constant 0.176776692 : f32
    %565 = vector.broadcast %cst_185 : f32 to vector<32x20xf32>
    %566 = arith.mulf %564, %565 : vector<32x20xf32>
    %567 = arith.addf %566, %446 : vector<32x20xf32>
    %cst_186 = arith.constant dense<0xFF800000> : vector<32xf32>
    %568 = vector.multi_reduction <maximumf>, %567, %cst_186 [1] : vector<32x20xf32> to vector<32xf32>
    %569 = vector.shape_cast %568 : vector<32xf32> to vector<32x1xf32>
    %570 = vector.broadcast %569 : vector<32x1xf32> to vector<32x20xf32>
    %571 = arith.subf %567, %570 : vector<32x20xf32>
    %572 = math.exp %571 : vector<32x20xf32>
    %cst_187 = arith.constant dense<0.000000e+00> : vector<32xf32>
    %573 = vector.multi_reduction <add>, %572, %cst_187 [1] : vector<32x20xf32> to vector<32xf32>
    %574 = vector.shape_cast %573 : vector<32xf32> to vector<32x1xf32>
    %575 = tpu.reciprocal %574 {approx = true} : vector<32x1xf32> -> vector<32x1xf32>
    %576 = vector.broadcast %575 : vector<32x1xf32> to vector<32x20xf32>
    %577 = arith.mulf %572, %576 : vector<32x20xf32>
    %cst_188 = arith.constant dense<0.000000e+00> : vector<32x32xf32>
    %578 = tpu.matmul %577, %551, %cst_188 {dimension_numbers = #tpu.dot_dimension_numbers<[1], [0], [0], [1], [0, 0, 1, 1], [], []>} : vector<32x20xf32>, vector<20x32xf32>, vector<32x32xf32> -> vector<32x32xf32>
    %cst_189 = arith.constant dense<0.000000e+00> : vector<16x36xf32>
    %579 = tpu.matmul %563, %561, %cst_189 {dimension_numbers = #tpu.dot_dimension_numbers<[1], [1], [0], [0], [0, 0, 1, 0], [], []>} : vector<16x32xf32>, vector<36x32xf32>, vector<16x36xf32> -> vector<16x36xf32>
    %cst_190 = arith.constant 0.176776692 : f32
    %580 = vector.broadcast %cst_190 : f32 to vector<16x36xf32>
    %581 = arith.mulf %579, %580 : vector<16x36xf32>
    %582 = arith.addf %581, %451 : vector<16x36xf32>
    %cst_191 = arith.constant dense<0xFF800000> : vector<16xf32>
    %583 = vector.multi_reduction <maximumf>, %582, %cst_191 [1] : vector<16x36xf32> to vector<16xf32>
    %584 = vector.shape_cast %583 : vector<16xf32> to vector<16x1xf32>
    %585 = vector.broadcast %584 : vector<16x1xf32> to vector<16x36xf32>
    %586 = arith.subf %582, %585 : vector<16x36xf32>
    %587 = math.exp %586 : vector<16x36xf32>
    %cst_192 = arith.constant dense<0.000000e+00> : vector<16xf32>
    %588 = vector.multi_reduction <add>, %587, %cst_192 [1] : vector<16x36xf32> to vector<16xf32>
    %589 = vector.shape_cast %588 : vector<16xf32> to vector<16x1xf32>
    %590 = tpu.reciprocal %589 {approx = true} : vector<16x1xf32> -> vector<16x1xf32>
    %591 = vector.broadcast %590 : vector<16x1xf32> to vector<16x36xf32>
    %592 = arith.mulf %587, %591 : vector<16x36xf32>
    %cst_193 = arith.constant dense<0.000000e+00> : vector<16x32xf32>
    %593 = tpu.matmul %592, %550, %cst_193 {dimension_numbers = #tpu.dot_dimension_numbers<[1], [0], [0], [1], [0, 0, 1, 1], [], []>} : vector<16x36xf32>, vector<36x32xf32>, vector<16x32xf32> -> vector<16x32xf32>
    %c1_194 = arith.constant 1 : index
    %c0_195 = arith.constant 0 : index
    %c0_196 = arith.constant 0 : index
    %594 = vector.load %arg17[%c1_194, %c0_195, %c0_196] : memref<2x32x32xf32, #tpu.memory_space<vmem>>, vector<1x32x32xf32>
    %595 = vector.shape_cast %594 : vector<1x32x32xf32> to vector<32x32xf32>
    %cst_197 = arith.constant dense<0.000000e+00> : vector<32x32xf32>
    %596 = tpu.matmul %552, %595, %cst_197 {dimension_numbers = #tpu.dot_dimension_numbers<[1], [0], [0], [1], [0, 0, 1, 1], [], []>} : vector<32x32xf32>, vector<32x32xf32>, vector<32x32xf32> -> vector<32x32xf32>
    %c1_198 = arith.constant 1 : index
    %c0_199 = arith.constant 0 : index
    %c0_200 = arith.constant 0 : index
    %597 = vector.load %arg18[%c1_198, %c0_199, %c0_200] : memref<2x32x32xf32, #tpu.memory_space<vmem>>, vector<1x32x32xf32>
    %598 = vector.shape_cast %597 : vector<1x32x32xf32> to vector<32x32xf32>
    %cst_201 = arith.constant dense<0.000000e+00> : vector<32x32xf32>
    %599 = tpu.matmul %578, %598, %cst_201 {dimension_numbers = #tpu.dot_dimension_numbers<[1], [0], [0], [1], [0, 0, 1, 1], [], []>} : vector<32x32xf32>, vector<32x32xf32>, vector<32x32xf32> -> vector<32x32xf32>
    %600 = arith.addf %596, %599 : vector<32x32xf32>
    %c1_202 = arith.constant 1 : index
    %c0_203 = arith.constant 0 : index
    %c0_204 = arith.constant 0 : index
    %601 = vector.load %arg19[%c1_202, %c0_203, %c0_204] : memref<2x1x32xf32, #tpu.memory_space<vmem>>, vector<1x1x32xf32>
    %602 = vector.shape_cast %601 : vector<1x1x32xf32> to vector<1x32xf32>
    %603 = vector.broadcast %602 : vector<1x32xf32> to vector<32x32xf32>
    %604 = arith.addf %600, %603 : vector<32x32xf32>
    %cst_205 = arith.constant 0.000000e+00 : f32
    %605 = vector.broadcast %cst_205 : f32 to vector<32x32xf32>
    %606 = arith.maximumf %604, %605 : vector<32x32xf32>
    %607 = arith.addf %606, %552 : vector<32x32xf32>
    %c1_206 = arith.constant 1 : index
    %c0_207 = arith.constant 0 : index
    %c0_208 = arith.constant 0 : index
    %608 = vector.load %arg20[%c1_206, %c0_207, %c0_208] : memref<2x32x32xf32, #tpu.memory_space<vmem>>, vector<1x32x32xf32>
    %609 = vector.shape_cast %608 : vector<1x32x32xf32> to vector<32x32xf32>
    %cst_209 = arith.constant dense<0.000000e+00> : vector<16x32xf32>
    %610 = tpu.matmul %553, %609, %cst_209 {dimension_numbers = #tpu.dot_dimension_numbers<[1], [0], [0], [1], [0, 0, 1, 1], [], []>} : vector<16x32xf32>, vector<32x32xf32>, vector<16x32xf32> -> vector<16x32xf32>
    %c1_210 = arith.constant 1 : index
    %c0_211 = arith.constant 0 : index
    %c0_212 = arith.constant 0 : index
    %611 = vector.load %arg21[%c1_210, %c0_211, %c0_212] : memref<2x32x32xf32, #tpu.memory_space<vmem>>, vector<1x32x32xf32>
    %612 = vector.shape_cast %611 : vector<1x32x32xf32> to vector<32x32xf32>
    %cst_213 = arith.constant dense<0.000000e+00> : vector<16x32xf32>
    %613 = tpu.matmul %593, %612, %cst_213 {dimension_numbers = #tpu.dot_dimension_numbers<[1], [0], [0], [1], [0, 0, 1, 1], [], []>} : vector<16x32xf32>, vector<32x32xf32>, vector<16x32xf32> -> vector<16x32xf32>
    %614 = arith.addf %610, %613 : vector<16x32xf32>
    %c1_214 = arith.constant 1 : index
    %c0_215 = arith.constant 0 : index
    %c0_216 = arith.constant 0 : index
    %615 = vector.load %arg22[%c1_214, %c0_215, %c0_216] : memref<2x1x32xf32, #tpu.memory_space<vmem>>, vector<1x1x32xf32>
    %616 = vector.shape_cast %615 : vector<1x1x32xf32> to vector<1x32xf32>
    %617 = vector.broadcast %616 : vector<1x32xf32> to vector<16x32xf32>
    %618 = arith.addf %614, %617 : vector<16x32xf32>
    %cst_217 = arith.constant 0.000000e+00 : f32
    %619 = vector.broadcast %cst_217 : f32 to vector<16x32xf32>
    %620 = arith.maximumf %618, %619 : vector<16x32xf32>
    %621 = arith.addf %620, %553 : vector<16x32xf32>
    %c0_218 = arith.constant 0 : index
    %c0_219 = arith.constant 0 : index
    %622 = vector.load %arg31[%c0_218, %c0_219] : memref<36x32xf32, #tpu.memory_space<vmem>>, vector<32x32xf32>
    tpu.vector_store %arg31[%c0_218, %c0_219], %607 {strides = array<i32>} : memref<36x32xf32, #tpu.memory_space<vmem>>, vector<32x32xf32>,
    %c0_220 = arith.constant 0 : index
    %c0_221 = arith.constant 0 : index
    %623 = vector.load %arg32[%c0_220, %c0_221] : memref<20x32xf32, #tpu.memory_space<vmem>>, vector<16x32xf32>
    tpu.vector_store %arg32[%c0_220, %c0_221], %621 {strides = array<i32>} : memref<20x32xf32, #tpu.memory_space<vmem>>, vector<16x32xf32>,
    %c0_222 = arith.constant 0 : index
    %c0_223 = arith.constant 0 : index
    %624 = vector.load %arg31[%c0_222, %c0_223] : memref<36x32xf32, #tpu.memory_space<vmem>>, vector<32x32xf32>
    %c0_224 = arith.constant 0 : index
    %c0_225 = arith.constant 0 : index
    %625 = vector.load %arg32[%c0_224, %c0_225] : memref<20x32xf32, #tpu.memory_space<vmem>>, vector<16x32xf32>
    %c0_226 = arith.constant 0 : index
    %c0_227 = arith.constant 0 : index
    %626 = vector.load %arg23[%c0_226, %c0_227] : memref<1x32xf32, #tpu.memory_space<vmem>>, vector<1x32xf32>
    %627 = vector.broadcast %626 : vector<1x32xf32> to vector<32x32xf32>
    %628 = arith.mulf %624, %627 : vector<32x32xf32>
    %cst_228 = arith.constant dense<0.000000e+00> : vector<32xf32>
    %629 = vector.multi_reduction <add>, %628, %cst_228 [1] : vector<32x32xf32> to vector<32xf32>
    %630 = vector.shape_cast %629 : vector<32xf32> to vector<32x1xf32>
    %cst_229 = arith.constant dense<0xFF800000> : vector<1xf32>
    %631 = vector.multi_reduction <maximumf>, %630, %cst_229 [0] : vector<32x1xf32> to vector<1xf32>
    %632 = vector.shape_cast %631 : vector<1xf32> to vector<1x1xf32>
    %633 = vector.broadcast %632 : vector<1x1xf32> to vector<32x1xf32>
    %634 = arith.subf %630, %633 : vector<32x1xf32>
    %635 = math.exp %634 : vector<32x1xf32>
    %c0_230 = arith.constant 0 : index
    %c0_231 = arith.constant 0 : index
    %636 = vector.load %arg5[%c0_230, %c0_231] : memref<2x32xf32, #tpu.memory_space<vmem>>, vector<2x32xf32>
    %637 = vector.broadcast %635 : vector<32x1xf32> to vector<32x32xf32>
    %638 = arith.mulf %624, %637 : vector<32x32xf32>
    %cst_232 = arith.constant dense<0.000000e+00> : vector<2x32xf32>
    %639 = tpu.matmul %636, %638, %cst_232 {dimension_numbers = #tpu.dot_dimension_numbers<[1], [0], [0], [1], [0, 0, 1, 1], [], []>} : vector<2x32xf32>, vector<32x32xf32>, vector<2x32xf32> -> vector<2x32xf32>
    %c0_233 = arith.constant 0 : index
    %c0_234 = arith.constant 0 : index
    %640 = vector.load %arg5[%c0_233, %c0_234] : memref<2x32xf32, #tpu.memory_space<vmem>>, vector<2x32xf32>
    %cst_235 = arith.constant dense<0.000000e+00> : vector<2x1xf32>
    %641 = tpu.matmul %640, %635, %cst_235 {dimension_numbers = #tpu.dot_dimension_numbers<[1], [0], [0], [1], [0, 0, 1, 1], [], []>} : vector<2x32xf32>, vector<32x1xf32>, vector<2x1xf32> -> vector<2x1xf32>
    %642 = tpu.reciprocal %641 {approx = true} : vector<2x1xf32> -> vector<2x1xf32>
    %643 = vector.broadcast %642 : vector<2x1xf32> to vector<2x32xf32>
    %644 = arith.mulf %639, %643 : vector<2x32xf32>
    %c0_236 = arith.constant 0 : index
    %c0_237 = arith.constant 0 : index
    %645 = vector.load %arg24[%c0_236, %c0_237] : memref<1x32xf32, #tpu.memory_space<vmem>>, vector<1x32xf32>
    %646 = vector.broadcast %645 : vector<1x32xf32> to vector<16x32xf32>
    %647 = arith.mulf %625, %646 : vector<16x32xf32>
    %cst_238 = arith.constant dense<0.000000e+00> : vector<16xf32>
    %648 = vector.multi_reduction <add>, %647, %cst_238 [1] : vector<16x32xf32> to vector<16xf32>
    %649 = vector.shape_cast %648 : vector<16xf32> to vector<16x1xf32>
    %cst_239 = arith.constant dense<0xFF800000> : vector<1xf32>
    %650 = vector.multi_reduction <maximumf>, %649, %cst_239 [0] : vector<16x1xf32> to vector<1xf32>
    %651 = vector.shape_cast %650 : vector<1xf32> to vector<1x1xf32>
    %652 = vector.broadcast %651 : vector<1x1xf32> to vector<16x1xf32>
    %653 = arith.subf %649, %652 : vector<16x1xf32>
    %654 = math.exp %653 : vector<16x1xf32>
    %c0_240 = arith.constant 0 : index
    %c0_241 = arith.constant 0 : index
    %655 = vector.load %arg6[%c0_240, %c0_241] : memref<2x16xf32, #tpu.memory_space<vmem>>, vector<2x16xf32>
    %656 = vector.broadcast %654 : vector<16x1xf32> to vector<16x32xf32>
    %657 = arith.mulf %625, %656 : vector<16x32xf32>
    %cst_242 = arith.constant dense<0.000000e+00> : vector<2x32xf32>
    %658 = tpu.matmul %655, %657, %cst_242 {dimension_numbers = #tpu.dot_dimension_numbers<[1], [0], [0], [1], [0, 0, 1, 1], [], []>} : vector<2x16xf32>, vector<16x32xf32>, vector<2x32xf32> -> vector<2x32xf32>
    %c0_243 = arith.constant 0 : index
    %c0_244 = arith.constant 0 : index
    %659 = vector.load %arg6[%c0_243, %c0_244] : memref<2x16xf32, #tpu.memory_space<vmem>>, vector<2x16xf32>
    %cst_245 = arith.constant dense<0.000000e+00> : vector<2x1xf32>
    %660 = tpu.matmul %659, %654, %cst_245 {dimension_numbers = #tpu.dot_dimension_numbers<[1], [0], [0], [1], [0, 0, 1, 1], [], []>} : vector<2x16xf32>, vector<16x1xf32>, vector<2x1xf32> -> vector<2x1xf32>
    %661 = tpu.reciprocal %660 {approx = true} : vector<2x1xf32> -> vector<2x1xf32>
    %662 = vector.broadcast %661 : vector<2x1xf32> to vector<2x32xf32>
    %663 = arith.mulf %658, %662 : vector<2x32xf32>
    %c0_246 = arith.constant 0 : index
    %c0_247 = arith.constant 0 : index
    %664 = vector.load %arg25[%c0_246, %c0_247] : memref<32x64xf32, #tpu.memory_space<vmem>>, vector<32x64xf32>
    %cst_248 = arith.constant dense<0.000000e+00> : vector<2x64xf32>
    %665 = tpu.matmul %644, %664, %cst_248 {dimension_numbers = #tpu.dot_dimension_numbers<[1], [0], [0], [1], [0, 0, 1, 1], [], []>} : vector<2x32xf32>, vector<32x64xf32>, vector<2x64xf32> -> vector<2x64xf32>
    %c0_249 = arith.constant 0 : index
    %c0_250 = arith.constant 0 : index
    %666 = vector.load %arg26[%c0_249, %c0_250] : memref<32x64xf32, #tpu.memory_space<vmem>>, vector<32x64xf32>
    %cst_251 = arith.constant dense<0.000000e+00> : vector<2x64xf32>
    %667 = tpu.matmul %663, %666, %cst_251 {dimension_numbers = #tpu.dot_dimension_numbers<[1], [0], [0], [1], [0, 0, 1, 1], [], []>} : vector<2x32xf32>, vector<32x64xf32>, vector<2x64xf32> -> vector<2x64xf32>
    %668 = arith.addf %665, %667 : vector<2x64xf32>
    %c0_252 = arith.constant 0 : index
    %c0_253 = arith.constant 0 : index
    %669 = vector.load %arg27[%c0_252, %c0_253] : memref<1x64xf32, #tpu.memory_space<vmem>>, vector<1x64xf32>
    %670 = vector.broadcast %669 : vector<1x64xf32> to vector<2x64xf32>
    %671 = arith.addf %668, %670 : vector<2x64xf32>
    %cst_254 = arith.constant 0.000000e+00 : f32
    %672 = vector.broadcast %cst_254 : f32 to vector<2x64xf32>
    %673 = arith.maximumf %671, %672 : vector<2x64xf32>
    %c0_255 = arith.constant 0 : index
    %c0_256 = arith.constant 0 : index
    %674 = vector.load %arg28[%c0_255, %c0_256] : memref<64x10xf32, #tpu.memory_space<vmem>>, vector<64x10xf32>
    %cst_257 = arith.constant dense<0.000000e+00> : vector<2x10xf32>
    %675 = tpu.matmul %673, %674, %cst_257 {dimension_numbers = #tpu.dot_dimension_numbers<[1], [0], [0], [1], [0, 0, 1, 1], [], []>} : vector<2x64xf32>, vector<64x10xf32>, vector<2x10xf32> -> vector<2x10xf32>
    %c0_258 = arith.constant 0 : index
    %c0_259 = arith.constant 0 : index
    %676 = vector.load %arg29[%c0_258, %c0_259] : memref<1x10xf32, #tpu.memory_space<vmem>>, vector<1x10xf32>
    %677 = vector.broadcast %676 : vector<1x10xf32> to vector<2x10xf32>
    %678 = arith.addf %675, %677 : vector<2x10xf32>
    %c0_260 = arith.constant 0 : index
    %c0_261 = arith.constant 0 : index
    %679 = vector.load %arg30[%c0_260, %c0_261] : memref<2x10xf32, #tpu.memory_space<vmem>>, vector<2x10xf32>
    tpu.vector_store %arg30[%c0_260, %c0_261], %678 {strides = array<i32>} : memref<2x10xf32, #tpu.memory_space<vmem>>, vector<2x10xf32>,
    return
  }
}

</mosaic_0001>

<llo_original>
// kernel: mul.21
$region0: #{mul.21}
  %s0 = inlined_call_operand.vmem [shape: f32[2,16], index: 0, kind: input, shape index: {}]
  %s1 = inlined_call_operand.vmem [shape: f32[32], index: 1, kind: output, shape index: {}]
  $region1: #{mul.21} parent=0
    #allocation0 [shape = 'u8[4096]{0}', space=vmem, size = 0x1000, scoped, tag = 'scoped mem for output reshape']
    #allocation1 [shape = 'u8[4096]{0}', space=vmem, size = 0x1000, scoped, tag = 'scoped mem for input reshape']
    %s3 = ssub.s32 4, 1
    %v4 = vld [vmem:[%s0] sm:%s3]
    %5 = vst [vmem:[#allocation1] sm:%s3] %v4
    %v6 = vld [vmem:[#allocation1] sm:$0x1]
    %vm7 = vcmask 130048
    %8 = vst.msk [vmem:[#allocation0] sm:$0x1] %vm7, %v6
    %s9 = scalar_lea.vmem [#allocation1], 1
    %v10 = vld [vmem:[%s9] sm:$0x1]
    %11 = vrot.lane.b32.xlu0 %v10, 16
    %v12 = vpop.permute.xlu0 %11
    %vm13 = vcmask 261248
    %14 = vst.msk [vmem:[#allocation0] sm:$0x1] %vm13, %v12
    %s16 = ssub.s32 2, 1
    %v17 = vld [vmem:[#allocation0] sm:%s16]
    %s19 = ssub.s32 2, 1
    %20 = vst [vmem:[%s1] sm:%s19] %v17

// kernel: mul.17
$region0: #{mul.17}
  %s0 = inlined_call_operand.vmem [shape: f32[2,8], index: 0, kind: input, shape index: {}]
  %s1 = inlined_call_operand.vmem [shape: f32[16], index: 1, kind: output, shape index: {}]
  $region1: #{mul.17} parent=0
    #allocation0 [shape = 'u8[4096]{0}', space=vmem, size = 0x1000, scoped, tag = 'scoped mem for output reshape']
    #allocation1 [shape = 'u8[4096]{0}', space=vmem, size = 0x1000, scoped, tag = 'scoped mem for input reshape']
    %s3 = ssub.s32 4, 1
    %v4 = vld [vmem:[%s0] sm:%s3]
    %5 = vst [vmem:[#allocation1] sm:%s3] %v4
    %v6 = vld [vmem:[#allocation1] sm:$0x1]
    %vm7 = vcmask 64512
    %8 = vst.msk [vmem:[#allocation0] sm:$0x1] %vm7, %v6
    %s9 = scalar_lea.vmem [#allocation1], 1
    %v10 = vld [vmem:[%s9] sm:$0x1]
    %11 = vrot.lane.b32.xlu0 %v10, 8
    %v12 = vpop.permute.xlu0 %11
    %vm13 = vcmask 130112
    %14 = vst.msk [vmem:[#allocation0] sm:$0x1] %vm13, %v12
    %s16 = ssub.s32 2, 1
    %v17 = vld [vmem:[#allocation0] sm:%s16]
    %s19 = ssub.s32 2, 1
    %20 = vst [vmem:[%s1] sm:%s19] %v17

// kernel: eq.53
$region0: #{eq.53}
  %s0 = inlined_call_operand.vmem [shape: s32[2,2], index: 0, kind: input, shape index: {}]
  %s1 = inlined_call_operand.vmem [shape: s32[4], index: 1, kind: output, shape index: {}]
  $region1: #{eq.53} parent=0
    #allocation0 [shape = 'u8[4096]{0}', space=vmem, size = 0x1000, scoped, tag = 'scoped mem for output reshape']
    #allocation1 [shape = 'u8[4096]{0}', space=vmem, size = 0x1000, scoped, tag = 'scoped mem for input reshape']
    %s3 = ssub.s32 4, 1
    %v4 = vld [vmem:[%s0] sm:%s3]
    %5 = vst [vmem:[#allocation1] sm:%s3] %v4
    %v6 = vld [vmem:[#allocation1] sm:$0x1]
    %vm7 = vcmask 15360
    %8 = vst.msk [vmem:[#allocation0] sm:$0x1] %vm7, %v6
    %s9 = scalar_lea.vmem [#allocation1], 1
    %v10 = vld [vmem:[%s9] sm:$0x1]
    %11 = vrot.lane.b32.xlu0 %v10, 2
    %v12 = vpop.permute.xlu0 %11
    %vm13 = vcmask 31760
    %14 = vst.msk [vmem:[#allocation0] sm:$0x1] %vm13, %v12
    %s16 = ssub.s32 2, 1
    %v17 = vld [vmem:[#allocation0] sm:%s16]
    %s19 = ssub.s32 2, 1
    %20 = vst [vmem:[%s1] sm:%s19] %v17

// kernel: eq.46
$region0: #{eq.46}
  %s0 = inlined_call_operand.vmem [shape: s32[2,8], index: 0, kind: input, shape index: {}]
  %s1 = inlined_call_operand.vmem [shape: s32[16], index: 1, kind: output, shape index: {}]
  $region1: #{eq.46} parent=0
    #allocation0 [shape = 'u8[4096]{0}', space=vmem, size = 0x1000, scoped, tag = 'scoped mem for output reshape']
    #allocation1 [shape = 'u8[4096]{0}', space=vmem, size = 0x1000, scoped, tag = 'scoped mem for input reshape']
    %s3 = ssub.s32 4, 1
    %v4 = vld [vmem:[%s0] sm:%s3]
    %5 = vst [vmem:[#allocation1] sm:%s3] %v4
    %v6 = vld [vmem:[#allocation1] sm:$0x1]
    %vm7 = vcmask 64512
    %8 = vst.msk [vmem:[#allocation0] sm:$0x1] %vm7, %v6
    %s9 = scalar_lea.vmem [#allocation1], 1
    %v10 = vld [vmem:[%s9] sm:$0x1]
    %11 = vrot.lane.b32.xlu0 %v10, 8
    %v12 = vpop.permute.xlu0 %11
    %vm13 = vcmask 130112
    %14 = vst.msk [vmem:[#allocation0] sm:$0x1] %vm13, %v12
    %s16 = ssub.s32 2, 1
    %v17 = vld [vmem:[#allocation0] sm:%s16]
    %s19 = ssub.s32 2, 1
    %20 = vst [vmem:[%s1] sm:%s19] %v17

// kernel: eq.43
$region0: #{eq.43}
  %s0 = inlined_call_operand.vmem [shape: s32[2,16], index: 0, kind: input, shape index: {}]
  %s1 = inlined_call_operand.vmem [shape: s32[32], index: 1, kind: output, shape index: {}]
  $region1: #{eq.43} parent=0
    #allocation0 [shape = 'u8[4096]{0}', space=vmem, size = 0x1000, scoped, tag = 'scoped mem for output reshape']
    #allocation1 [shape = 'u8[4096]{0}', space=vmem, size = 0x1000, scoped, tag = 'scoped mem for input reshape']
    %s3 = ssub.s32 4, 1
    %v4 = vld [vmem:[%s0] sm:%s3]
    %5 = vst [vmem:[#allocation1] sm:%s3] %v4
    %v6 = vld [vmem:[#allocation1] sm:$0x1]
    %vm7 = vcmask 130048
    %8 = vst.msk [vmem:[#allocation0] sm:$0x1] %vm7, %v6
    %s9 = scalar_lea.vmem [#allocation1], 1
    %v10 = vld [vmem:[%s9] sm:$0x1]
    %11 = vrot.lane.b32.xlu0 %v10, 16
    %v12 = vpop.permute.xlu0 %11
    %vm13 = vcmask 261248
    %14 = vst.msk [vmem:[#allocation0] sm:$0x1] %vm13, %v12
    %s16 = ssub.s32 2, 1
    %v17 = vld [vmem:[#allocation0] sm:%s16]
    %s19 = ssub.s32 2, 1
    %20 = vst [vmem:[%s1] sm:%s19] %v17

// kernel: dcn_forward.1
$region0: #{dcn_forward.1}
  #allocation0 [shape = 'u32[]', space=smem, size = 0x4, offset = 0x4, fixed_abs, tag = 'smem constant byte address 0x4 - core index']
  #allocation1 [shape = 'u32[72,128]{1,0:T(1,128)}', space=vmem, size = 0x9000, scoped, tag = 'internal scratch']
  #allocation2 [shape = 'f32[36,32]{1,0:T(8,128)}', space=vmem, size = 0x5000, scoped, tag = 'scratch operand']
  #allocation3 [shape = 'f32[20,32]{1,0:T(8,128)}', space=vmem, size = 0x3000, scoped, tag = 'scratch operand']
  %s0 = inlined_call_operand.smem [shape: u32[31], index: -1, kind: input, shape index: {}]
  %s1 = sld [smem:[%s0]]
  %s2 = scalar_lea.smem %s0, 1
  %s3 = sld [smem:[%s2]]
  %s4 = scalar_lea.smem %s0, 2
  %s5 = sld [smem:[%s4]]
  %s6 = scalar_lea.smem %s0, 3
  %s7 = sld [smem:[%s6]]
  %s8 = scalar_lea.smem %s0, 4
  %s9 = sld [smem:[%s8]]
  %s10 = scalar_lea.smem %s0, 5
  %s11 = sld [smem:[%s10]]
  %s12 = scalar_lea.smem %s0, 6
  %s13 = sld [smem:[%s12]]
  %s14 = scalar_lea.smem %s0, 7
  %s15 = sld [smem:[%s14]]
  %s16 = scalar_lea.smem %s0, 8
  %s17 = sld [smem:[%s16]]
  %s18 = scalar_lea.smem %s0, 9
  %s19 = sld [smem:[%s18]]
  %s20 = scalar_lea.smem %s0, 10
  %s21 = sld [smem:[%s20]]
  %s22 = scalar_lea.smem %s0, 11
  %s23 = sld [smem:[%s22]]
  %s24 = scalar_lea.smem %s0, 12
  %s25 = sld [smem:[%s24]]
  %s26 = scalar_lea.smem %s0, 13
  %s27 = sld [smem:[%s26]]
  %s28 = scalar_lea.smem %s0, 14
  %s29 = sld [smem:[%s28]]
  %s30 = scalar_lea.smem %s0, 15
  %s31 = sld [smem:[%s30]]
  %s32 = scalar_lea.smem %s0, 16
  %s33 = sld [smem:[%s32]]
  %s34 = scalar_lea.smem %s0, 17
  %s35 = sld [smem:[%s34]]
  %s36 = scalar_lea.smem %s0, 18
  %s37 = sld [smem:[%s36]]
  %s38 = scalar_lea.smem %s0, 19
  %s39 = sld [smem:[%s38]]
  %s40 = scalar_lea.smem %s0, 20
  %s41 = sld [smem:[%s40]]
  %s42 = scalar_lea.smem %s0, 21
  %s43 = sld [smem:[%s42]]
  %s44 = scalar_lea.smem %s0, 22
  %s45 = sld [smem:[%s44]]
  %s46 = scalar_lea.smem %s0, 23
  %s47 = sld [smem:[%s46]]
  %s48 = scalar_lea.smem %s0, 24
  %s49 = sld [smem:[%s48]]
  %s50 = scalar_lea.smem %s0, 25
  %s51 = sld [smem:[%s50]]
  %s52 = scalar_lea.smem %s0, 26
  %s53 = sld [smem:[%s52]]
  %s54 = scalar_lea.smem %s0, 27
  %s55 = sld [smem:[%s54]]
  %s56 = scalar_lea.smem %s0, 28
  %s57 = sld [smem:[%s56]]
  %s58 = scalar_lea.smem %s0, 29
  %s59 = sld [smem:[%s58]]
  %s60 = scalar_lea.smem %s0, 30
  %s61 = sld [smem:[%s60]]
  %s62 = sld [smem:[#allocation0]]
  $region182: #{dcn_forward.1} parent=0
    _
  %s64 = ssub.s32 1, %s62
  %s65 = scalar_select 0, %s64, %s62
  $region1: #{dcn_forward.1} parent=0
    #allocation4 [shape = 'u8[8192]{0}', space=vmem, size = 0x2000, scoped, tag = 'input window, operand 0, single buffered']
    #allocation5 [shape = 's32[1]{0}', space=sflag, size = 0x4, scoped, tag = 'scoped memory for dcn_forward.1']
    #allocation6 [shape = 's32[1]{0}', space=sflag, size = 0x4, scoped, tag = 'scoped memory for dcn_forward.1']
    #allocation7 [shape = 'u8[8192]{0}', space=vmem, size = 0x2000, scoped, tag = 'input window, operand 8, single buffered']
    #allocation8 [shape = 's32[1]{0}', space=sflag, size = 0x4, scoped, tag = 'scoped memory for dcn_forward.1']
    #allocation9 [shape = 'u8[8192]{0}', space=vmem, size = 0x2000, scoped, tag = 'input window, operand 11, single buffered']
    #allocation10 [shape = 'u8[512]{0}', space=vmem, size = 0x400, scoped, tag = 'input window, operand 12, single buffered']
    #allocation11 [shape = 's32[1]{0}', space=sflag, size = 0x4, scoped, tag = 'scoped memory for dcn_forward.1']
    #allocation12 [shape = 'u8[2048]{0}', space=vmem, size = 0x800, scoped, tag = 'input window, operand 14, single buffered']
    #allocation13 [shape = 'u8[1024]{0}', space=vmem, size = 0x400, scoped, tag = 'input window, operand 19, single buffered']
    #allocation14 [shape = 's32[1]{0}', space=sflag, size = 0x4, scoped, tag = 'scoped memory for dcn_forward.1']
    #allocation15 [shape = 'u8[1024]{0}', space=vmem, size = 0x400, scoped, tag = 'input window, operand 22, single buffered']
    #allocation16 [shape = 'u8[512]{0}', space=vmem, size = 0x400, scoped, tag = 'input window, operand 23, single buffered']
    #allocation17 [shape = 's32[1]{0}', space=sflag, size = 0x4, scoped, tag = 'scoped memory for dcn_forward.1']
    #allocation18 [shape = 'u8[512]{0}', space=vmem, size = 0x400, scoped, tag = 'input window, operand 24, single buffered']
    #allocation19 [shape = 'u8[16384]{0}', space=vmem, size = 0x4000, scoped, tag = 'input window, operand 25, single buffered']
    #allocation20 [shape = 's32[1]{0}', space=sflag, size = 0x4, scoped, tag = 'scoped memory for dcn_forward.1']
    #allocation21 [shape = 'u8[16384]{0}', space=vmem, size = 0x4000, scoped, tag = 'input window, operand 26, single buffered']
    #allocation22 [shape = 'u8[512]{0}', space=vmem, size = 0x400, scoped, tag = 'input window, operand 27, single buffered']
    #allocation23 [shape = 's32[1]{0}', space=sflag, size = 0x4, scoped, tag = 'scoped memory for dcn_forward.1']
    #allocation24 [shape = 'u8[512]{0}', space=vmem, size = 0x400, scoped, tag = 'input window, operand 29, single buffered']
    #allocation25 [shape = 'u8[1024]{0}', space=vmem, size = 0x400, scoped, tag = 'output window, operand 0, single buffered']
    %66 = vsyncpa [#allocation5], 0
    %67 = vsyncpa [#allocation8], 0
    %68 = vsyncpa [#allocation11], 0
    %69 = vsyncpa [#allocation14], 0
    %70 = vsyncpa [#allocation17], 0
    %71 = vsyncpa [#allocation20], 0
    %72 = vsyncpa [#allocation23], 0
    %73 = vsyncpa [#allocation6], 0
    // Predicated region
    $region2: #{dcn_forward.1} parent=1 // pred_check
      _
    $region3: #{dcn_forward.1} parent=1 // pred_check_branch
      %75 = sbr.rel (0) target = $region5
    $region4: #{dcn_forward.1} parent=1 // pred_region
      %77 = vsyncadd [#allocation5], 0
      %s78 = sshll.u32 %s1, 4
      %s79 = int_to_ptr.hbm [resolvable:$true] %s78
      %s80 = sshll.u32 [#allocation4], 4
      %s81 = int_to_ptr.vmem [resolvable:$true] %s80
      %86 = dma.hbm_to_vmem [thread:$0]  %s79, 256, %s81, [#allocation5], 128, 128, 8
    $region5: #{dcn_forward.1} parent=1 // pred_fallthru
      _
    // Predicated region
    $region6: #{dcn_forward.1} parent=1 // pred_check
      _
    $region7: #{dcn_forward.1} parent=1 // pred_check_branch
      %88 = sbr.rel (0) target = $region9
    $region8: #{dcn_forward.1} parent=1 // pred_region
      _
    $region9: #{dcn_forward.1} parent=1 // pred_fallthru
      _
    // Predicated region
    $region10: #{dcn_forward.1} parent=1 // pred_check
      _
    $region11: #{dcn_forward.1} parent=1 // pred_check_branch
      %90 = sbr.rel (0) target = $region13
    $region12: #{dcn_forward.1} parent=1 // pred_region
      _
    $region13: #{dcn_forward.1} parent=1 // pred_fallthru
      _
    // Predicated region
    $region14: #{dcn_forward.1} parent=1 // pred_check
      _
    $region15: #{dcn_forward.1} parent=1 // pred_check_branch
      %92 = sbr.rel (0) target = $region17
    $region16: #{dcn_forward.1} parent=1 // pred_region
      _
    $region17: #{dcn_forward.1} parent=1 // pred_fallthru
      _
    // Predicated region
    $region18: #{dcn_forward.1} parent=1 // pred_check
      _
    $region19: #{dcn_forward.1} parent=1 // pred_check_branch
      %94 = sbr.rel (0) target = $region21
    $region20: #{dcn_forward.1} parent=1 // pred_region
      _
    $region21: #{dcn_forward.1} parent=1 // pred_fallthru
      _
    // Predicated region
    $region22: #{dcn_forward.1} parent=1 // pred_check
      _
    $region23: #{dcn_forward.1} parent=1 // pred_check_branch
      %96 = sbr.rel (0) target = $region25
    $region24: #{dcn_forward.1} parent=1 // pred_region
      _
    $region25: #{dcn_forward.1} parent=1 // pred_fallthru
      _
    // Predicated region
    $region26: #{dcn_forward.1} parent=1 // pred_check
      _
    $region27: #{dcn_forward.1} parent=1 // pred_check_branch
      %98 = sbr.rel (0) target = $region29
    $region28: #{dcn_forward.1} parent=1 // pred_region
      _
    $region29: #{dcn_forward.1} parent=1 // pred_fallthru
      _
    // Predicated region
    $region30: #{dcn_forward.1} parent=1 // pred_check
      _
    $region31: #{dcn_forward.1} parent=1 // pred_check_branch
      %100 = sbr.rel (0) target = $region33
    $region32: #{dcn_forward.1} parent=1 // pred_region
      _
    $region33: #{dcn_forward.1} parent=1 // pred_fallthru
      _
    // Predicated region
    $region34: #{dcn_forward.1} parent=1 // pred_check
      _
    $region35: #{dcn_forward.1} parent=1 // pred_check_branch
      %102 = sbr.rel (0) target = $region37
    $region36: #{dcn_forward.1} parent=1 // pred_region
      %104 = vsyncadd [#allocation8], 0
      %s105 = sshll.u32 %s17, 4
      %s106 = int_to_ptr.hbm [resolvable:$true] %s105
      %s107 = sshll.u32 [#allocation7], 4
      %s108 = int_to_ptr.vmem [resolvable:$true] %s107
      %113 = dma.hbm_to_vmem [thread:$0]  %s106, 256, %s108, [#allocation8], 128, 128, 8
    $region37: #{dcn_forward.1} parent=1 // pred_fallthru
      _
    // Predicated region
    $region38: #{dcn_forward.1} parent=1 // pred_check
      _
    $region39: #{dcn_forward.1} parent=1 // pred_check_branch
      %115 = sbr.rel (0) target = $region41
    $region40: #{dcn_forward.1} parent=1 // pred_region
      _
    $region41: #{dcn_forward.1} parent=1 // pred_fallthru
      _
    // Predicated region
    $region42: #{dcn_forward.1} parent=1 // pred_check
      _
    $region43: #{dcn_forward.1} parent=1 // pred_check_branch
      %117 = sbr.rel (0) target = $region45
    $region44: #{dcn_forward.1} parent=1 // pred_region
      _
    $region45: #{dcn_forward.1} parent=1 // pred_fallthru
      _
    // Predicated region
    $region46: #{dcn_forward.1} parent=1 // pred_check
      _
    $region47: #{dcn_forward.1} parent=1 // pred_check_branch
      %119 = sbr.rel (0) target = $region49
    $region48: #{dcn_forward.1} parent=1 // pred_region
      %121 = vsyncadd [#allocation8], 0
      %s122 = sshll.u32 %s23, 4
      %s123 = int_to_ptr.hbm [resolvable:$true] %s122
      %s124 = sshll.u32 [#allocation9], 4
      %s125 = int_to_ptr.vmem [resolvable:$true] %s124
      %130 = dma.hbm_to_vmem [thread:$0]  %s123, 256, %s125, [#allocation8], 128, 128, 8
    $region49: #{dcn_forward.1} parent=1 // pred_fallthru
      _
    // Predicated region
    $region50: #{dcn_forward.1} parent=1 // pred_check
      _
    $region51: #{dcn_forward.1} parent=1 // pred_check_branch
      %132 = sbr.rel (0) target = $region53
    $region52: #{dcn_forward.1} parent=1 // pred_region
      %134 = vsyncadd [#allocation11], 0
      %s136 = sshll.u32 %s25, 4
      %s137 = int_to_ptr.hbm [resolvable:$true] %s136
      %s138 = sshll.u32 [#allocation10], 4
      %s139 = int_to_ptr.vmem [resolvable:$true] %s138
      %141 = dma.hbm_to_vmem [thread:$0]  %s137, 16, %s139, [#allocation11]
    $region53: #{dcn_forward.1} parent=1 // pred_fallthru
      _
    // Predicated region
    $region54: #{dcn_forward.1} parent=1 // pred_check
      _
    $region55: #{dcn_forward.1} parent=1 // pred_check_branch
      %143 = sbr.rel (0) target = $region57
    $region56: #{dcn_forward.1} parent=1 // pred_region
      _
    $region57: #{dcn_forward.1} parent=1 // pred_fallthru
      _
    // Predicated region
    $region58: #{dcn_forward.1} parent=1 // pred_check
      _
    $region59: #{dcn_forward.1} parent=1 // pred_check_branch
      %145 = sbr.rel (0) target = $region61
    $region60: #{dcn_forward.1} parent=1 // pred_region
      %147 = vsyncadd [#allocation11], 0
      %s148 = sshll.u32 %s29, 4
      %s149 = int_to_ptr.hbm [resolvable:$true] %s148
      %s150 = sshll.u32 [#allocation12], 4
      %s151 = int_to_ptr.vmem [resolvable:$true] %s150
      %156 = dma.hbm_to_vmem [thread:$0]  %s149, 64, %s151, [#allocation11], 32, 32, 2
    $region61: #{dcn_forward.1} parent=1 // pred_fallthru
      _
    // Predicated region
    $region62: #{dcn_forward.1} parent=1 // pred_check
      _
    $region63: #{dcn_forward.1} parent=1 // pred_check_branch
      %158 = sbr.rel (0) target = $region65
    $region64: #{dcn_forward.1} parent=1 // pred_region
      _
    $region65: #{dcn_forward.1} parent=1 // pred_fallthru
      _
    // Predicated region
    $region66: #{dcn_forward.1} parent=1 // pred_check
      _
    $region67: #{dcn_forward.1} parent=1 // pred_check_branch
      %160 = sbr.rel (0) target = $region69
    $region68: #{dcn_forward.1} parent=1 // pred_region
      _
    $region69: #{dcn_forward.1} parent=1 // pred_fallthru
      _
    // Predicated region
    $region70: #{dcn_forward.1} parent=1 // pred_check
      _
    $region71: #{dcn_forward.1} parent=1 // pred_check_branch
      %162 = sbr.rel (0) target = $region73
    $region72: #{dcn_forward.1} parent=1 // pred_region
      _
    $region73: #{dcn_forward.1} parent=1 // pred_fallthru
      _
    // Predicated region
    $region74: #{dcn_forward.1} parent=1 // pred_check
      _
    $region75: #{dcn_forward.1} parent=1 // pred_check_branch
      %164 = sbr.rel (0) target = $region77
    $region76: #{dcn_forward.1} parent=1 // pred_region
      _
    $region77: #{dcn_forward.1} parent=1 // pred_fallthru
      _
    // Predicated region
    $region78: #{dcn_forward.1} parent=1 // pred_check
      _
    $region79: #{dcn_forward.1} parent=1 // pred_check_branch
      %166 = sbr.rel (0) target = $region81
    $region80: #{dcn_forward.1} parent=1 // pred_region
      %168 = vsyncadd [#allocation14], 0
      %s169 = sshll.u32 %s39, 4
      %s170 = int_to_ptr.hbm [resolvable:$true] %s169
      %s171 = sshll.u32 [#allocation13], 4
      %s172 = int_to_ptr.vmem [resolvable:$true] %s171
      %177 = dma.hbm_to_vmem [thread:$0]  %s170, 32, %s172, [#allocation14], 16, 16, 1
    $region81: #{dcn_forward.1} parent=1 // pred_fallthru
      _
    // Predicated region
    $region82: #{dcn_forward.1} parent=1 // pred_check
      _
    $region83: #{dcn_forward.1} parent=1 // pred_check_branch
      %179 = sbr.rel (0) target = $region85
    $region84: #{dcn_forward.1} parent=1 // pred_region
      _
    $region85: #{dcn_forward.1} parent=1 // pred_fallthru
      _
    // Predicated region
    $region86: #{dcn_forward.1} parent=1 // pred_check
      _
    $region87: #{dcn_forward.1} parent=1 // pred_check_branch
      %181 = sbr.rel (0) target = $region89
    $region88: #{dcn_forward.1} parent=1 // pred_region
      _
    $region89: #{dcn_forward.1} parent=1 // pred_fallthru
      _
    // Predicated region
    $region90: #{dcn_forward.1} parent=1 // pred_check
      _
    $region91: #{dcn_forward.1} parent=1 // pred_check_branch
      %183 = sbr.rel (0) target = $region93
    $region92: #{dcn_forward.1} parent=1 // pred_region
      %185 = vsyncadd [#allocation14], 0
      %s186 = sshll.u32 %s45, 4
      %s187 = int_to_ptr.hbm [resolvable:$true] %s186
      %s188 = sshll.u32 [#allocation15], 4
      %s189 = int_to_ptr.vmem [resolvable:$true] %s188
      %194 = dma.hbm_to_vmem [thread:$0]  %s187, 32, %s189, [#allocation14], 16, 16, 1
    $region93: #{dcn_forward.1} parent=1 // pred_fallthru
      _
    // Predicated region
    $region94: #{dcn_forward.1} parent=1 // pred_check
      _
    $region95: #{dcn_forward.1} parent=1 // pred_check_branch
      %196 = sbr.rel (0) target = $region97
    $region96: #{dcn_forward.1} parent=1 // pred_region
      %198 = vsyncadd [#allocation17], 0
      %s200 = sshll.u32 %s47, 4
      %s201 = int_to_ptr.hbm [resolvable:$true] %s200
      %s202 = sshll.u32 [#allocation16], 4
      %s203 = int_to_ptr.vmem [resolvable:$true] %s202
      %205 = dma.hbm_to_vmem [thread:$0]  %s201, 16, %s203, [#allocation17]
    $region97: #{dcn_forward.1} parent=1 // pred_fallthru
      _
    // Predicated region
    $region98: #{dcn_forward.1} parent=1 // pred_check
      _
    $region99: #{dcn_forward.1} parent=1 // pred_check_branch
      %207 = sbr.rel (0) target = $region101
    $region100: #{dcn_forward.1} parent=1 // pred_region
      %209 = vsyncadd [#allocation17], 0
      %s211 = sshll.u32 %s49, 4
      %s212 = int_to_ptr.hbm [resolvable:$true] %s211
      %s213 = sshll.u32 [#allocation18], 4
      %s214 = int_to_ptr.vmem [resolvable:$true] %s213
      %216 = dma.hbm_to_vmem [thread:$0]  %s212, 16, %s214, [#allocation17]
    $region101: #{dcn_forward.1} parent=1 // pred_fallthru
      _
    // Predicated region
    $region102: #{dcn_forward.1} parent=1 // pred_check
      _
    $region103: #{dcn_forward.1} parent=1 // pred_check_branch
      %218 = sbr.rel (0) target = $region105
    $region104: #{dcn_forward.1} parent=1 // pred_region
      %220 = vsyncadd [#allocation20], 0
      %s221 = sshll.u32 %s51, 4
      %s222 = int_to_ptr.hbm [resolvable:$true] %s221
      %s223 = sshll.u32 [#allocation19], 4
      %s224 = int_to_ptr.vmem [resolvable:$true] %s223
      %229 = dma.hbm_to_vmem [thread:$0]  %s222, 512, %s224, [#allocation20], 128, 128, 8
    $region105: #{dcn_forward.1} parent=1 // pred_fallthru
      _
    // Predicated region
    $region106: #{dcn_forward.1} parent=1 // pred_check
      _
    $region107: #{dcn_forward.1} parent=1 // pred_check_branch
      %231 = sbr.rel (0) target = $region109
    $region108: #{dcn_forward.1} parent=1 // pred_region
      %233 = vsyncadd [#allocation20], 0
      %s234 = sshll.u32 %s53, 4
      %s235 = int_to_ptr.hbm [resolvable:$true] %s234
      %s236 = sshll.u32 [#allocation21], 4
      %s237 = int_to_ptr.vmem [resolvable:$true] %s236
      %242 = dma.hbm_to_vmem [thread:$0]  %s235, 512, %s237, [#allocation20], 128, 128, 8
    $region109: #{dcn_forward.1} parent=1 // pred_fallthru
      _
    // Predicated region
    $region110: #{dcn_forward.1} parent=1 // pred_check
      _
    $region111: #{dcn_forward.1} parent=1 // pred_check_branch
      %244 = sbr.rel (0) target = $region113
    $region112: #{dcn_forward.1} parent=1 // pred_region
      %246 = vsyncadd [#allocation23], 0
      %s248 = sshll.u32 %s55, 4
      %s249 = int_to_ptr.hbm [resolvable:$true] %s248
      %s250 = sshll.u32 [#allocation22], 4
      %s251 = int_to_ptr.vmem [resolvable:$true] %s250
      %253 = dma.hbm_to_vmem [thread:$0]  %s249, 16, %s251, [#allocation23]
    $region113: #{dcn_forward.1} parent=1 // pred_fallthru
      _
    // Predicated region
    $region114: #{dcn_forward.1} parent=1 // pred_check
      _
    $region115: #{dcn_forward.1} parent=1 // pred_check_branch
      %255 = sbr.rel (0) target = $region117
    $region116: #{dcn_forward.1} parent=1 // pred_region
      _
    $region117: #{dcn_forward.1} parent=1 // pred_fallthru
      _
    // Predicated region
    $region118: #{dcn_forward.1} parent=1 // pred_check
      _
    $region119: #{dcn_forward.1} parent=1 // pred_check_branch
      %257 = sbr.rel (0) target = $region121
    $region120: #{dcn_forward.1} parent=1 // pred_region
      %259 = vsyncadd [#allocation23], 0
      %s261 = sshll.u32 %s59, 4
      %s262 = int_to_ptr.hbm [resolvable:$true] %s261
      %s263 = sshll.u32 [#allocation24], 4
      %s264 = int_to_ptr.vmem [resolvable:$true] %s263
      %266 = dma.hbm_to_vmem [thread:$0]  %s262, 16, %s264, [#allocation23]
    $region121: #{dcn_forward.1} parent=1 // pred_fallthru
      _
    // Predicated region
    $region122: #{dcn_forward.1} parent=1 // pred_check
      _
    $region123: #{dcn_forward.1} parent=1 // pred_check_branch
      %268 = sbr.rel (0) target = $region125
    $region124: #{dcn_forward.1} parent=1 // pred_region
      %270 = dma.done [#allocation5], 256
    $region125: #{dcn_forward.1} parent=1 // pred_fallthru
      _
    // Predicated region
    $region126: #{dcn_forward.1} parent=1 // pred_check
      _
    $region127: #{dcn_forward.1} parent=1 // pred_check_branch
      %272 = sbr.rel (0) target = $region129
    $region128: #{dcn_forward.1} parent=1 // pred_region
      %274 = dma.done [#allocation8], 256
    $region129: #{dcn_forward.1} parent=1 // pred_fallthru
      _
    // Predicated region
    $region130: #{dcn_forward.1} parent=1 // pred_check
      _
    $region131: #{dcn_forward.1} parent=1 // pred_check_branch
      %276 = sbr.rel (0) target = $region133
    $region132: #{dcn_forward.1} parent=1 // pred_region
      %278 = dma.done [#allocation8], 256
    $region133: #{dcn_forward.1} parent=1 // pred_fallthru
      _
    // Predicated region
    $region134: #{dcn_forward.1} parent=1 // pred_check
      _
    $region135: #{dcn_forward.1} parent=1 // pred_check_branch
      %280 = sbr.rel (0) target = $region137
    $region136: #{dcn_forward.1} parent=1 // pred_region
      %282 = dma.done [#allocation11], 16
    $region137: #{dcn_forward.1} parent=1 // pred_fallthru
      _
    // Predicated region
    $region138: #{dcn_forward.1} parent=1 // pred_check
      _
    $region139: #{dcn_forward.1} parent=1 // pred_check_branch
      %284 = sbr.rel (0) target = $region141
    $region140: #{dcn_forward.1} parent=1 // pred_region
      %286 = dma.done [#allocation11], 64
    $region141: #{dcn_forward.1} parent=1 // pred_fallthru
      _
    // Predicated region
    $region142: #{dcn_forward.1} parent=1 // pred_check
      _
    $region143: #{dcn_forward.1} parent=1 // pred_check_branch
      %288 = sbr.rel (0) target = $region145
    $region144: #{dcn_forward.1} parent=1 // pred_region
      %290 = dma.done [#allocation14], 32
    $region145: #{dcn_forward.1} parent=1 // pred_fallthru
      _
    // Predicated region
    $region146: #{dcn_forward.1} parent=1 // pred_check
      _
    $region147: #{dcn_forward.1} parent=1 // pred_check_branch
      %292 = sbr.rel (0) target = $region149
    $region148: #{dcn_forward.1} parent=1 // pred_region
      %294 = dma.done [#allocation14], 32
    $region149: #{dcn_forward.1} parent=1 // pred_fallthru
      _
    // Predicated region
    $region150: #{dcn_forward.1} parent=1 // pred_check
      _
    $region151: #{dcn_forward.1} parent=1 // pred_check_branch
      %296 = sbr.rel (0) target = $region153
    $region152: #{dcn_forward.1} parent=1 // pred_region
      %298 = dma.done [#allocation17], 16
    $region153: #{dcn_forward.1} parent=1 // pred_fallthru
      _
    // Predicated region
    $region154: #{dcn_forward.1} parent=1 // pred_check
      _
    $region155: #{dcn_forward.1} parent=1 // pred_check_branch
      %300 = sbr.rel (0) target = $region157
    $region156: #{dcn_forward.1} parent=1 // pred_region
      %302 = dma.done [#allocation17], 16
    $region157: #{dcn_forward.1} parent=1 // pred_fallthru
      _
    // Predicated region
    $region158: #{dcn_forward.1} parent=1 // pred_check
      _
    $region159: #{dcn_forward.1} parent=1 // pred_check_branch
      %304 = sbr.rel (0) target = $region161
    $region160: #{dcn_forward.1} parent=1 // pred_region
      %306 = dma.done [#allocation20], 512
    $region161: #{dcn_forward.1} parent=1 // pred_fallthru
      _
    // Predicated region
    $region162: #{dcn_forward.1} parent=1 // pred_check
      _
    $region163: #{dcn_forward.1} parent=1 // pred_check_branch
      %308 = sbr.rel (0) target = $region165
    $region164: #{dcn_forward.1} parent=1 // pred_region
      %310 = dma.done [#allocation20], 512
    $region165: #{dcn_forward.1} parent=1 // pred_fallthru
      _
    // Predicated region
    $region166: #{dcn_forward.1} parent=1 // pred_check
      _
    $region167: #{dcn_forward.1} parent=1 // pred_check_branch
      %312 = sbr.rel (0) target = $region169
    $region168: #{dcn_forward.1} parent=1 // pred_region
      %314 = dma.done [#allocation23], 16
    $region169: #{dcn_forward.1} parent=1 // pred_fallthru
      _
    // Predicated region
    $region170: #{dcn_forward.1} parent=1 // pred_check
      _
    $region171: #{dcn_forward.1} parent=1 // pred_check_branch
      %316 = sbr.rel (0) target = $region173
    $region172: #{dcn_forward.1} parent=1 // pred_region
      %318 = dma.done [#allocation23], 16
    $region173: #{dcn_forward.1} parent=1 // pred_fallthru
      _
    %v319 = vld [vmem:[#allocation4] sm:$0xff]
    %v320 = vld [vmem:[#allocation4 + $0x8] sm:$0xff]
    %v321 = vld [vmem:[%s3] sm:$0xff]
    %v322 = vld [vmem:[%s3 + $0x8] sm:$0xff]
    %v323 = vld [vmem:[%s15] sm:$0xff]
    %v324 = vld [vmem:[%s15 + $0x8] sm:$0xff]
    %v325 = vld [vmem:[%s19] sm:$0x1]
    %v327 = vperm.slane %v325, 0
    %vm329 = vcmask 130048
    %v331 = vsel %vm329, %v319, 0
    %v334 = vsel %vm329, %v320, 0
    %336 = vmatpush.msra.mxu0 0.0
    %337 = vmatpush.msra.mxu0 0.0
    %338 = vmatpush.msra.mxu0 0.0
    %339 = vmatpush.msra.mxu0 0.0
    %340 = vmatpush.msra.mxu0 0.0
    %341 = vmatpush.msra.mxu0 0.0
    %342 = vmatpush.msra.mxu0 0.0
    %343 = vmatpush.msra.mxu0 0.0
    %344 = vmatpush.msra.mxu0 0.0
    %345 = vmatpush.msra.mxu0 0.0
    %346 = vmatpush.msra.mxu0 0.0
    %347 = vmatpush.msra.mxu0 0.0
    %348 = vmatpush.msra.mxu0 0.0
    %349 = vmatpush.msra.mxu0 0.0
    %350 = vmatpush.msra.mxu0 %v324
    %351 = vmatpush.msra.mxu0 %v323
    %352 = vmatmul.f32.gmra.mxu0 %v331
    %v353 = vpop.f32.mrf.mxu0
    %v354 = vadd.f32 %v327, %v353
    %355 = vmatmul.f32.gmra.mxu0 %v334
    %v356 = vpop.f32.mrf.mxu0
    %v357 = vadd.f32 %v327, %v356
    %358 = vdwg.mxu0
    %v359 = vld [vmem:[#allocation7] sm:$0xff]
    %v360 = vld [vmem:[#allocation7 + $0x8] sm:$0xff]
    %v362 = vrot.slane %v357, 7
    %vm364 = vcmask 1040384
    %v365 = vsel %vm364, %v354, %v362
    %v367 = vrot.slane %v322, 7
    %v369 = vsel %vm364, %v321, %v367
    %v371 = vsel %vm329, 0.0, 0
    %373 = vmatpush.msra.mxu0 0.0
    %374 = vmatpush.msra.mxu0 0.0
    %375 = vmatpush.msra.mxu0 0.0
    %376 = vmatpush.msra.mxu0 0.0
    %377 = vmatpush.msra.mxu0 0.0
    %378 = vmatpush.msra.mxu0 0.0
    %379 = vmatpush.msra.mxu0 0.0
    %380 = vmatpush.msra.mxu0 0.0
    %381 = vmatpush.msra.mxu0 0.0
    %382 = vmatpush.msra.mxu0 0.0
    %383 = vmatpush.msra.mxu0 0.0
    %384 = vmatpush.msra.mxu0 0.0
    %385 = vmatpush.msra.mxu0 0.0
    %386 = vmatpush.msra.mxu0 0.0
    %387 = vmatpush.msra.mxu0 %v360
    %388 = vmatpush.msra.mxu0 %v359
    %389 = vmatmul.f32.gmra.mxu0 %v371
    %v390 = vpop.f32.mrf.mxu0
    %v391 = vadd.f32 0.0, %v390
    %392 = vdwg.mxu0
    %v393 = vadd.f32 %v365, %v391
    %v394 = vxor.u32 %v393, 2147483648
    %v395 = vmul.f32 %v394, 1.442695
    %v396 = vpow.pop %v395
    %v397 = vadd.f32 %v396, 1.0
    %v398 = vrcp.pop %v397
    %v399 = vmul.f32 %v397, %v398
    %v400 = vsub.f32 1.0, %v399
    %v401 = vmul.f32 %v398, %v400
    %v402 = vadd.f32 %v398, %v401
    %vm403 = vweird.f32 %v397
    %vm404 = vweird.f32 %v398
    %vm405 = vmor %vm403, %vm404
    %v406 = vsel %vm405, %v398, %v402
    %v407 = vand.u32 2147483647, %v397
    %vm408 = vcmp.eq.f32.partialorder %v407, 8.507059e+37
    %v409 = vand.u32 %v397, 2147483648
    %v410 = vor.u32 1.1754944e-38, %v409
    %v411 = vsel %vm408, %v410, %v406
    %v412 = vmul.f32 1.0, %v411
    %v413 = vtanh.pop %v393
    %v414 = vmul.f32 %v412, 0.0
    %416 = vrot.lane.b32.xlu0 %v413, 96
    %v417 = vpop.permute.xlu0 %416
    %v419 = vmul.f32 %v412, %v417
    %421 = vrot.lane.b32.xlu0 %v419, 16
    %v422 = vpop.permute.xlu0 %421
    %v424 = vadd.f32 %v414, %v422
    %v425 = vtanh.pop %v424
    %427 = vrot.lane.b32.xlu0 %v425, 32
    %v428 = vpop.permute.xlu0 %427
    %v430 = vmul.f32 %v412, %v428
    %432 = vset.pattern.permute.xlu0 0
    %433 = vperm.xlu0 %432, %v369
    %v434 = vpop.permute.xlu0 %433
    %v436 = vmul.f32 %v434, %v430
    %v437 = vsub.f32 1.0, %v369
    %439 = vset.pattern.permute.xlu0 0
    %440 = vperm.xlu0 %439, %v437
    %v441 = vpop.permute.xlu0 %440
    %v443 = vmul.f32 %v441, 0.0
    %v444 = vadd.f32 %v436, %v443
    %v445 = vmul.f32 %v434, %v424
    %v446 = vadd.f32 %v445, %v443
    %v447 = vmul.f32 %v444, %v434
    %v449 = vrot.slane %v354, 1
    %v451 = vsel %vm364, %v449, %v357
    %v453 = vrot.slane %v321, 1
    %v455 = vsel %vm364, %v453, %v322
    %457 = vrot.lane.b32.xlu0 %v444, 80
    %v458 = vpop.permute.xlu0 %457
    %v459 = vsel %vm329, %v458, 0
    %461 = vmatpush.msra.mxu0 0.0
    %462 = vmatpush.msra.mxu0 0.0
    %463 = vmatpush.msra.mxu0 0.0
    %464 = vmatpush.msra.mxu0 0.0
    %465 = vmatpush.msra.mxu0 0.0
    %466 = vmatpush.msra.mxu0 0.0
    %467 = vmatpush.msra.mxu0 0.0
    %468 = vmatpush.msra.mxu0 0.0
    %469 = vmatpush.msra.mxu0 0.0
    %470 = vmatpush.msra.mxu0 0.0
    %471 = vmatpush.msra.mxu0 0.0
    %472 = vmatpush.msra.mxu0 0.0
    %473 = vmatpush.msra.mxu0 0.0
    %474 = vmatpush.msra.mxu0 0.0
    %475 = vmatpush.msra.mxu0 %v360
    %476 = vmatpush.msra.mxu0 %v359
    %477 = vmatmul.f32.gmra.mxu0 %v459
    %v478 = vpop.f32.mrf.mxu0
    %v479 = vadd.f32 0.0, %v478
    %480 = vdwg.mxu0
    %v481 = vadd.f32 %v451, %v479
    %v482 = vxor.u32 %v481, 2147483648
    %v483 = vmul.f32 %v482, 1.442695
    %v484 = vpow.pop %v483
    %v485 = vadd.f32 %v484, 1.0
    %v486 = vrcp.pop %v485
    %v487 = vmul.f32 %v485, %v486
    %v488 = vsub.f32 1.0, %v487
    %v489 = vmul.f32 %v486, %v488
    %v490 = vadd.f32 %v486, %v489
    %vm491 = vweird.f32 %v485
    %vm492 = vweird.f32 %v486
    %vm493 = vmor %vm491, %vm492
    %v494 = vsel %vm493, %v486, %v490
    %v495 = vand.u32 2147483647, %v485
    %vm496 = vcmp.eq.f32.partialorder %v495, 8.507059e+37
    %v497 = vand.u32 %v485, 2147483648
    %v498 = vor.u32 1.1754944e-38, %v497
    %v499 = vsel %vm496, %v498, %v494
    %v500 = vmul.f32 1.0, %v499
    %v501 = vtanh.pop %v481
    %v502 = vmul.f32 %v500, %v446
    %504 = vrot.lane.b32.xlu0 %v501, 96
    %v505 = vpop.permute.xlu0 %504
    %v507 = vmul.f32 %v500, %v505
    %509 = vrot.lane.b32.xlu0 %v507, 16
    %v510 = vpop.permute.xlu0 %509
    %v512 = vadd.f32 %v502, %v510
    %v513 = vtanh.pop %v512
    %515 = vrot.lane.b32.xlu0 %v513, 32
    %v516 = vpop.permute.xlu0 %515
    %v518 = vmul.f32 %v500, %v516
    %520 = vset.pattern.permute.xlu0 0
    %521 = vperm.xlu0 %520, %v455
    %v522 = vpop.permute.xlu0 %521
    %v524 = vmul.f32 %v522, %v518
    %v525 = vsub.f32 1.0, %v455
    %527 = vset.pattern.permute.xlu0 0
    %528 = vperm.xlu0 %527, %v525
    %v529 = vpop.permute.xlu0 %528
    %v531 = vmul.f32 %v529, %v444
    %v532 = vadd.f32 %v524, %v531
    %v533 = vmul.f32 %v522, %v512
    %v534 = vmul.f32 %v529, %v446
    %v535 = vadd.f32 %v533, %v534
    %v536 = vmul.f32 %v532, %v522
    %v537 = vrot.slane %v354, 2
    %v539 = vrot.slane %v357, 1
    %v541 = vsel %vm364, %v537, %v539
    %v542 = vrot.slane %v321, 2
    %v544 = vrot.slane %v322, 1
    %v546 = vsel %vm364, %v542, %v544
    %548 = vrot.lane.b32.xlu0 %v532, 80
    %v549 = vpop.permute.xlu0 %548
    %v550 = vsel %vm329, %v549, 0
    %552 = vmatpush.msra.mxu0 0.0
    %553 = vmatpush.msra.mxu0 0.0
    %554 = vmatpush.msra.mxu0 0.0
    %555 = vmatpush.msra.mxu0 0.0
    %556 = vmatpush.msra.mxu0 0.0
    %557 = vmatpush.msra.mxu0 0.0
    %558 = vmatpush.msra.mxu0 0.0
    %559 = vmatpush.msra.mxu0 0.0
    %560 = vmatpush.msra.mxu0 0.0
    %561 = vmatpush.msra.mxu0 0.0
    %562 = vmatpush.msra.mxu0 0.0
    %563 = vmatpush.msra.mxu0 0.0
    %564 = vmatpush.msra.mxu0 0.0
    %565 = vmatpush.msra.mxu0 0.0
    %566 = vmatpush.msra.mxu0 %v360
    %567 = vmatpush.msra.mxu0 %v359
    %568 = vmatmul.f32.gmra.mxu0 %v550
    %v569 = vpop.f32.mrf.mxu0
    %v570 = vadd.f32 0.0, %v569
    %571 = vdwg.mxu0
    %v572 = vadd.f32 %v541, %v570
    %v573 = vxor.u32 %v572, 2147483648
    %v574 = vmul.f32 %v573, 1.442695
    %v575 = vpow.pop %v574
    %v576 = vadd.f32 %v575, 1.0
    %v577 = vrcp.pop %v576
    %v578 = vmul.f32 %v576, %v577
    %v579 = vsub.f32 1.0, %v578
    %v580 = vmul.f32 %v577, %v579
    %v581 = vadd.f32 %v577, %v580
    %vm582 = vweird.f32 %v576
    %vm583 = vweird.f32 %v577
    %vm584 = vmor %vm582, %vm583
    %v585 = vsel %vm584, %v577, %v581
    %v586 = vand.u32 2147483647, %v576
    %vm587 = vcmp.eq.f32.partialorder %v586, 8.507059e+37
    %v588 = vand.u32 %v576, 2147483648
    %v589 = vor.u32 1.1754944e-38, %v588
    %v590 = vsel %vm587, %v589, %v585
    %v591 = vmul.f32 1.0, %v590
    %v592 = vtanh.pop %v572
    %v593 = vmul.f32 %v591, %v535
    %595 = vrot.lane.b32.xlu0 %v592, 96
    %v596 = vpop.permute.xlu0 %595
    %v598 = vmul.f32 %v591, %v596
    %600 = vrot.lane.b32.xlu0 %v598, 16
    %v601 = vpop.permute.xlu0 %600
    %v603 = vadd.f32 %v593, %v601
    %v604 = vtanh.pop %v603
    %606 = vrot.lane.b32.xlu0 %v604, 32
    %v607 = vpop.permute.xlu0 %606
    %v609 = vmul.f32 %v591, %v607
    %611 = vset.pattern.permute.xlu0 0
    %612 = vperm.xlu0 %611, %v546
    %v613 = vpop.permute.xlu0 %612
    %v615 = vmul.f32 %v613, %v609
    %v616 = vsub.f32 1.0, %v546
    %618 = vset.pattern.permute.xlu0 0
    %619 = vperm.xlu0 %618, %v616
    %v620 = vpop.permute.xlu0 %619
    %v622 = vmul.f32 %v620, %v532
    %v623 = vadd.f32 %v615, %v622
    %v624 = vmul.f32 %v613, %v603
    %v625 = vmul.f32 %v620, %v535
    %v626 = vadd.f32 %v624, %v625
    %v627 = vmul.f32 %v623, %v613
    %v628 = vrot.slane %v354, 3
    %v630 = vrot.slane %v357, 2
    %v632 = vsel %vm364, %v628, %v630
    %v633 = vrot.slane %v321, 3
    %v635 = vrot.slane %v322, 2
    %v637 = vsel %vm364, %v633, %v635
    %639 = vrot.lane.b32.xlu0 %v623, 80
    %v640 = vpop.permute.xlu0 %639
    %v641 = vsel %vm329, %v640, 0
    %643 = vmatpush.msra.mxu0 0.0
    %644 = vmatpush.msra.mxu0 0.0
    %645 = vmatpush.msra.mxu0 0.0
    %646 = vmatpush.msra.mxu0 0.0
    %647 = vmatpush.msra.mxu0 0.0
    %648 = vmatpush.msra.mxu0 0.0
    %649 = vmatpush.msra.mxu0 0.0
    %650 = vmatpush.msra.mxu0 0.0
    %651 = vmatpush.msra.mxu0 0.0
    %652 = vmatpush.msra.mxu0 0.0
    %653 = vmatpush.msra.mxu0 0.0
    %654 = vmatpush.msra.mxu0 0.0
    %655 = vmatpush.msra.mxu0 0.0
    %656 = vmatpush.msra.mxu0 0.0
    %657 = vmatpush.msra.mxu0 %v360
    %658 = vmatpush.msra.mxu0 %v359
    %659 = vmatmul.f32.gmra.mxu0 %v641
    %v660 = vpop.f32.mrf.mxu0
    %v661 = vadd.f32 0.0, %v660
    %662 = vdwg.mxu0
    %v663 = vadd.f32 %v632, %v661
    %v664 = vxor.u32 %v663, 2147483648
    %v665 = vmul.f32 %v664, 1.442695
    %v666 = vpow.pop %v665
    %v667 = vadd.f32 %v666, 1.0
    %v668 = vrcp.pop %v667
    %v669 = vmul.f32 %v667, %v668
    %v670 = vsub.f32 1.0, %v669
    %v671 = vmul.f32 %v668, %v670
    %v672 = vadd.f32 %v668, %v671
    %vm673 = vweird.f32 %v667
    %vm674 = vweird.f32 %v668
    %vm675 = vmor %vm673, %vm674
    %v676 = vsel %vm675, %v668, %v672
    %v677 = vand.u32 2147483647, %v667
    %vm678 = vcmp.eq.f32.partialorder %v677, 8.507059e+37
    %v679 = vand.u32 %v667, 2147483648
    %v680 = vor.u32 1.1754944e-38, %v679
    %v681 = vsel %vm678, %v680, %v676
    %v682 = vmul.f32 1.0, %v681
    %v683 = vtanh.pop %v663
    %v684 = vmul.f32 %v682, %v626
    %686 = vrot.lane.b32.xlu0 %v683, 96
    %v687 = vpop.permute.xlu0 %686
    %v689 = vmul.f32 %v682, %v687
    %691 = vrot.lane.b32.xlu0 %v689, 16
    %v692 = vpop.permute.xlu0 %691
    %v694 = vadd.f32 %v684, %v692
    %v695 = vtanh.pop %v694
    %697 = vrot.lane.b32.xlu0 %v695, 32
    %v698 = vpop.permute.xlu0 %697
    %v700 = vmul.f32 %v682, %v698
    %702 = vset.pattern.permute.xlu0 0
    %703 = vperm.xlu0 %702, %v637
    %v704 = vpop.permute.xlu0 %703
    %v706 = vmul.f32 %v704, %v700
    %v707 = vsub.f32 1.0, %v637
    %709 = vset.pattern.permute.xlu0 0
    %710 = vperm.xlu0 %709, %v707
    %v711 = vpop.permute.xlu0 %710
    %v713 = vmul.f32 %v711, %v623
    %v714 = vadd.f32 %v706, %v713
    %v715 = vmul.f32 %v704, %v694
    %v716 = vmul.f32 %v711, %v626
    %v717 = vadd.f32 %v715, %v716
    %v718 = vmul.f32 %v714, %v704
    %v719 = vrot.slane %v354, 4
    %v721 = vrot.slane %v357, 3
    %v723 = vsel %vm364, %v719, %v721
    %v724 = vrot.slane %v321, 4
    %v726 = vrot.slane %v322, 3
    %v728 = vsel %vm364, %v724, %v726
    %730 = vrot.lane.b32.xlu0 %v714, 80
    %v731 = vpop.permute.xlu0 %730
    %v732 = vsel %vm329, %v731, 0
    %734 = vmatpush.msra.mxu0 0.0
    %735 = vmatpush.msra.mxu0 0.0
    %736 = vmatpush.msra.mxu0 0.0
    %737 = vmatpush.msra.mxu0 0.0
    %738 = vmatpush.msra.mxu0 0.0
    %739 = vmatpush.msra.mxu0 0.0
    %740 = vmatpush.msra.mxu0 0.0
    %741 = vmatpush.msra.mxu0 0.0
    %742 = vmatpush.msra.mxu0 0.0
    %743 = vmatpush.msra.mxu0 0.0
    %744 = vmatpush.msra.mxu0 0.0
    %745 = vmatpush.msra.mxu0 0.0
    %746 = vmatpush.msra.mxu0 0.0
    %747 = vmatpush.msra.mxu0 0.0
    %748 = vmatpush.msra.mxu0 %v360
    %749 = vmatpush.msra.mxu0 %v359
    %750 = vmatmul.f32.gmra.mxu0 %v732
    %v751 = vpop.f32.mrf.mxu0
    %v752 = vadd.f32 0.0, %v751
    %753 = vdwg.mxu0
    %v754 = vadd.f32 %v723, %v752
    %v755 = vxor.u32 %v754, 2147483648
    %v756 = vmul.f32 %v755, 1.442695
    %v757 = vpow.pop %v756
    %v758 = vadd.f32 %v757, 1.0
    %v759 = vrcp.pop %v758
    %v760 = vmul.f32 %v758, %v759
    %v761 = vsub.f32 1.0, %v760
    %v762 = vmul.f32 %v759, %v761
    %v763 = vadd.f32 %v759, %v762
    %vm764 = vweird.f32 %v758
    %vm765 = vweird.f32 %v759
    %vm766 = vmor %vm764, %vm765
    %v767 = vsel %vm766, %v759, %v763
    %v768 = vand.u32 2147483647, %v758
    %vm769 = vcmp.eq.f32.partialorder %v768, 8.507059e+37
    %v770 = vand.u32 %v758, 2147483648
    %v771 = vor.u32 1.1754944e-38, %v770
    %v772 = vsel %vm769, %v771, %v767
    %v773 = vmul.f32 1.0, %v772
    %v774 = vtanh.pop %v754
    %v775 = vmul.f32 %v773, %v717
    %777 = vrot.lane.b32.xlu0 %v774, 96
    %v778 = vpop.permute.xlu0 %777
    %v780 = vmul.f32 %v773, %v778
    %782 = vrot.lane.b32.xlu0 %v780, 16
    %v783 = vpop.permute.xlu0 %782
    %v785 = vadd.f32 %v775, %v783
    %v786 = vtanh.pop %v785
    %788 = vrot.lane.b32.xlu0 %v786, 32
    %v789 = vpop.permute.xlu0 %788
    %v791 = vmul.f32 %v773, %v789
    %793 = vset.pattern.permute.xlu0 0
    %794 = vperm.xlu0 %793, %v728
    %v795 = vpop.permute.xlu0 %794
    %v797 = vmul.f32 %v795, %v791
    %v798 = vsub.f32 1.0, %v728
    %800 = vset.pattern.permute.xlu0 0
    %801 = vperm.xlu0 %800, %v798
    %v802 = vpop.permute.xlu0 %801
    %v804 = vmul.f32 %v802, %v714
    %v805 = vadd.f32 %v797, %v804
    %v806 = vmul.f32 %v795, %v785
    %v807 = vmul.f32 %v802, %v717
    %v808 = vadd.f32 %v806, %v807
    %v809 = vmul.f32 %v805, %v795
    %v810 = vrot.slane %v354, 5
    %v812 = vrot.slane %v357, 4
    %v814 = vsel %vm364, %v810, %v812
    %v815 = vrot.slane %v321, 5
    %v817 = vrot.slane %v322, 4
    %v819 = vsel %vm364, %v815, %v817
    %821 = vrot.lane.b32.xlu0 %v805, 80
    %v822 = vpop.permute.xlu0 %821
    %v823 = vsel %vm329, %v822, 0
    %825 = vmatpush.msra.mxu0 0.0
    %826 = vmatpush.msra.mxu0 0.0
    %827 = vmatpush.msra.mxu0 0.0
    %828 = vmatpush.msra.mxu0 0.0
    %829 = vmatpush.msra.mxu0 0.0
    %830 = vmatpush.msra.mxu0 0.0
    %831 = vmatpush.msra.mxu0 0.0
    %832 = vmatpush.msra.mxu0 0.0
    %833 = vmatpush.msra.mxu0 0.0
    %834 = vmatpush.msra.mxu0 0.0
    %835 = vmatpush.msra.mxu0 0.0
    %836 = vmatpush.msra.mxu0 0.0
    %837 = vmatpush.msra.mxu0 0.0
    %838 = vmatpush.msra.mxu0 0.0
    %839 = vmatpush.msra.mxu0 %v360
    %840 = vmatpush.msra.mxu0 %v359
    %841 = vmatmul.f32.gmra.mxu0 %v823
    %v842 = vpop.f32.mrf.mxu0
    %v843 = vadd.f32 0.0, %v842
    %844 = vdwg.mxu0
    %v845 = vadd.f32 %v814, %v843
    %v846 = vxor.u32 %v845, 2147483648
    %v847 = vmul.f32 %v846, 1.442695
    %v848 = vpow.pop %v847
    %v849 = vadd.f32 %v848, 1.0
    %v850 = vrcp.pop %v849
    %v851 = vmul.f32 %v849, %v850
    %v852 = vsub.f32 1.0, %v851
    %v853 = vmul.f32 %v850, %v852
    %v854 = vadd.f32 %v850, %v853
    %vm855 = vweird.f32 %v849
    %vm856 = vweird.f32 %v850
    %vm857 = vmor %vm855, %vm856
    %v858 = vsel %vm857, %v850, %v854
    %v859 = vand.u32 2147483647, %v849
    %vm860 = vcmp.eq.f32.partialorder %v859, 8.507059e+37
    %v861 = vand.u32 %v849, 2147483648
    %v862 = vor.u32 1.1754944e-38, %v861
    %v863 = vsel %vm860, %v862, %v858
    %v864 = vmul.f32 1.0, %v863
    %v865 = vtanh.pop %v845
    %v866 = vmul.f32 %v864, %v808
    %868 = vrot.lane.b32.xlu0 %v865, 96
    %v869 = vpop.permute.xlu0 %868
    %v871 = vmul.f32 %v864, %v869
    %873 = vrot.lane.b32.xlu0 %v871, 16
    %v874 = vpop.permute.xlu0 %873
    %v876 = vadd.f32 %v866, %v874
    %v877 = vtanh.pop %v876
    %879 = vrot.lane.b32.xlu0 %v877, 32
    %v880 = vpop.permute.xlu0 %879
    %v882 = vmul.f32 %v864, %v880
    %884 = vset.pattern.permute.xlu0 0
    %885 = vperm.xlu0 %884, %v819
    %v886 = vpop.permute.xlu0 %885
    %v888 = vmul.f32 %v886, %v882
    %v889 = vsub.f32 1.0, %v819
    %891 = vset.pattern.permute.xlu0 0
    %892 = vperm.xlu0 %891, %v889
    %v893 = vpop.permute.xlu0 %892
    %v895 = vmul.f32 %v893, %v805
    %v896 = vadd.f32 %v888, %v895
    %v897 = vmul.f32 %v886, %v876
    %v898 = vmul.f32 %v893, %v808
    %v899 = vadd.f32 %v897, %v898
    %v900 = vmul.f32 %v896, %v886
    %v901 = vrot.slane %v354, 6
    %v903 = vrot.slane %v357, 5
    %v905 = vsel %vm364, %v901, %v903
    %v906 = vrot.slane %v321, 6
    %v908 = vrot.slane %v322, 5
    %v910 = vsel %vm364, %v906, %v908
    %912 = vrot.lane.b32.xlu0 %v896, 80
    %v913 = vpop.permute.xlu0 %912
    %v914 = vsel %vm329, %v913, 0
    %916 = vmatpush.msra.mxu0 0.0
    %917 = vmatpush.msra.mxu0 0.0
    %918 = vmatpush.msra.mxu0 0.0
    %919 = vmatpush.msra.mxu0 0.0
    %920 = vmatpush.msra.mxu0 0.0
    %921 = vmatpush.msra.mxu0 0.0
    %922 = vmatpush.msra.mxu0 0.0
    %923 = vmatpush.msra.mxu0 0.0
    %924 = vmatpush.msra.mxu0 0.0
    %925 = vmatpush.msra.mxu0 0.0
    %926 = vmatpush.msra.mxu0 0.0
    %927 = vmatpush.msra.mxu0 0.0
    %928 = vmatpush.msra.mxu0 0.0
    %929 = vmatpush.msra.mxu0 0.0
    %930 = vmatpush.msra.mxu0 %v360
    %931 = vmatpush.msra.mxu0 %v359
    %932 = vmatmul.f32.gmra.mxu0 %v914
    %v933 = vpop.f32.mrf.mxu0
    %v934 = vadd.f32 0.0, %v933
    %935 = vdwg.mxu0
    %v936 = vadd.f32 %v905, %v934
    %v937 = vxor.u32 %v936, 2147483648
    %v938 = vmul.f32 %v937, 1.442695
    %v939 = vpow.pop %v938
    %v940 = vadd.f32 %v939, 1.0
    %v941 = vrcp.pop %v940
    %v942 = vmul.f32 %v940, %v941
    %v943 = vsub.f32 1.0, %v942
    %v944 = vmul.f32 %v941, %v943
    %v945 = vadd.f32 %v941, %v944
    %vm946 = vweird.f32 %v940
    %vm947 = vweird.f32 %v941
    %vm948 = vmor %vm946, %vm947
    %v949 = vsel %vm948, %v941, %v945
    %v950 = vand.u32 2147483647, %v940
    %vm951 = vcmp.eq.f32.partialorder %v950, 8.507059e+37
    %v952 = vand.u32 %v940, 2147483648
    %v953 = vor.u32 1.1754944e-38, %v952
    %v954 = vsel %vm951, %v953, %v949
    %v955 = vmul.f32 1.0, %v954
    %v956 = vtanh.pop %v936
    %v957 = vmul.f32 %v955, %v899
    %959 = vrot.lane.b32.xlu0 %v956, 96
    %v960 = vpop.permute.xlu0 %959
    %v962 = vmul.f32 %v955, %v960
    %964 = vrot.lane.b32.xlu0 %v962, 16
    %v965 = vpop.permute.xlu0 %964
    %v967 = vadd.f32 %v957, %v965
    %v968 = vtanh.pop %v967
    %970 = vrot.lane.b32.xlu0 %v968, 32
    %v971 = vpop.permute.xlu0 %970
    %v973 = vmul.f32 %v955, %v971
    %975 = vset.pattern.permute.xlu0 0
    %976 = vperm.xlu0 %975, %v910
    %v977 = vpop.permute.xlu0 %976
    %v979 = vmul.f32 %v977, %v973
    %v980 = vsub.f32 1.0, %v910
    %982 = vset.pattern.permute.xlu0 0
    %983 = vperm.xlu0 %982, %v980
    %v984 = vpop.permute.xlu0 %983
    %v986 = vmul.f32 %v984, %v896
    %v987 = vadd.f32 %v979, %v986
    %v988 = vmul.f32 %v977, %v967
    %v989 = vmul.f32 %v984, %v899
    %v990 = vadd.f32 %v988, %v989
    %v991 = vmul.f32 %v987, %v977
    %v992 = vrot.slane %v354, 7
    %v994 = vrot.slane %v357, 6
    %v996 = vsel %vm364, %v992, %v994
    %v997 = vrot.slane %v321, 7
    %v999 = vrot.slane %v322, 6
    %v1001 = vsel %vm364, %v997, %v999
    %1003 = vrot.lane.b32.xlu0 %v987, 80
    %v1004 = vpop.permute.xlu0 %1003
    %v1005 = vsel %vm329, %v1004, 0
    %1007 = vmatpush.msra.mxu0 0.0
    %1008 = vmatpush.msra.mxu0 0.0
    %1009 = vmatpush.msra.mxu0 0.0
    %1010 = vmatpush.msra.mxu0 0.0
    %1011 = vmatpush.msra.mxu0 0.0
    %1012 = vmatpush.msra.mxu0 0.0
    %1013 = vmatpush.msra.mxu0 0.0
    %1014 = vmatpush.msra.mxu0 0.0
    %1015 = vmatpush.msra.mxu0 0.0
    %1016 = vmatpush.msra.mxu0 0.0
    %1017 = vmatpush.msra.mxu0 0.0
    %1018 = vmatpush.msra.mxu0 0.0
    %1019 = vmatpush.msra.mxu0 0.0
    %1020 = vmatpush.msra.mxu0 0.0
    %1021 = vmatpush.msra.mxu0 %v360
    %1022 = vmatpush.msra.mxu0 %v359
    %1023 = vmatmul.f32.gmra.mxu0 %v1005
    %v1024 = vpop.f32.mrf.mxu0
    %v1025 = vadd.f32 0.0, %v1024
    %1026 = vdwg.mxu0
    %v1027 = vadd.f32 %v996, %v1025
    %v1028 = vxor.u32 %v1027, 2147483648
    %v1029 = vmul.f32 %v1028, 1.442695
    %v1030 = vpow.pop %v1029
    %v1031 = vadd.f32 %v1030, 1.0
    %v1032 = vrcp.pop %v1031
    %v1033 = vmul.f32 %v1031, %v1032
    %v1034 = vsub.f32 1.0, %v1033
    %v1035 = vmul.f32 %v1032, %v1034
    %v1036 = vadd.f32 %v1032, %v1035
    %vm1037 = vweird.f32 %v1031
    %vm1038 = vweird.f32 %v1032
    %vm1039 = vmor %vm1037, %vm1038
    %v1040 = vsel %vm1039, %v1032, %v1036
    %v1041 = vand.u32 2147483647, %v1031
    %vm1042 = vcmp.eq.f32.partialorder %v1041, 8.507059e+37
    %v1043 = vand.u32 %v1031, 2147483648
    %v1044 = vor.u32 1.1754944e-38, %v1043
    %v1045 = vsel %vm1042, %v1044, %v1040
    %v1046 = vmul.f32 1.0, %v1045
    %v1047 = vtanh.pop %v1027
    %v1048 = vmul.f32 %v1046, %v990
    %1050 = vrot.lane.b32.xlu0 %v1047, 96
    %v1051 = vpop.permute.xlu0 %1050
    %v1053 = vmul.f32 %v1046, %v1051
    %1055 = vrot.lane.b32.xlu0 %v1053, 16
    %v1056 = vpop.permute.xlu0 %1055
    %v1058 = vadd.f32 %v1048, %v1056
    %v1059 = vtanh.pop %v1058
    %1061 = vrot.lane.b32.xlu0 %v1059, 32
    %v1062 = vpop.permute.xlu0 %1061
    %v1064 = vmul.f32 %v1046, %v1062
    %1066 = vset.pattern.permute.xlu0 0
    %1067 = vperm.xlu0 %1066, %v1001
    %v1068 = vpop.permute.xlu0 %1067
    %v1070 = vmul.f32 %v1068, %v1064
    %v1071 = vsub.f32 1.0, %v1001
    %1073 = vset.pattern.permute.xlu0 0
    %1074 = vperm.xlu0 %1073, %v1071
    %v1075 = vpop.permute.xlu0 %1074
    %v1077 = vmul.f32 %v1075, %v987
    %v1078 = vadd.f32 %v1070, %v1077
    %v1079 = vmul.f32 %v1078, %v1068
    %1080 = vset.pattern.permute.xlu0 0
    %1081 = vperm.xlu0 %1080, %v321
    %v1082 = vpop.permute.xlu0 %1081
    %1084 = vset.pattern.permute.xlu0 0
    %1085 = vperm.xlu0 %1084, %v322
    %v1086 = vpop.permute.xlu0 %1085
    %v1088 = vmul.f32 %v319, %v1082
    %v1089 = vmul.f32 %v320, %v1086
    %1090 = vst.msk [vmem:[#allocation3] sm:$0xff] %vm329, %v1088
    %1091 = vst.msk [vmem:[#allocation3 + $0x8] sm:$0xff] %vm329, %v1089
    %v1093 = vrot.slane %v536, 7
    %v1096 = vrot.slane %v627, 6
    %v1099 = vrot.slane %v718, 5
    %v1102 = vrot.slane %v809, 4
    %v1105 = vrot.slane %v900, 3
    %v1108 = vrot.slane %v991, 2
    %v1111 = vrot.slane %v1079, 1
    %v1113 = vsel %vm364, %v447, %v1093
    %vm1114 = vcmask 1041408
    %v1115 = vsel %vm1114, %v1113, %v1096
    %vm1116 = vcmask 1042432
    %v1117 = vsel %vm1116, %v1115, %v1099
    %vm1118 = vcmask 1043456
    %v1119 = vsel %vm1118, %v1117, %v1102
    %vm1120 = vcmask 1044480
    %v1121 = vsel %vm1120, %v1119, %v1105
    %vm1122 = vcmask 1045504
    %v1123 = vsel %vm1122, %v1121, %v1108
    %vm1124 = vcmask 1046528
    %v1125 = vsel %vm1124, %v1123, %v1111
    %1127 = vrot.lane.b32.xlu0 %v1125, 96
    %v1128 = vpop.permute.xlu0 %1127
    %vm1130 = vcmask 261248
    %1131 = vst.msk [vmem:[#allocation3] sm:$0xff] %vm1130, %v1128
    %v1133 = vrot.slane %v447, 1
    %v1135 = vrot.slane %v627, 7
    %v1137 = vrot.slane %v718, 6
    %v1139 = vrot.slane %v809, 5
    %v1141 = vrot.slane %v900, 4
    %v1143 = vrot.slane %v991, 3
    %v1145 = vrot.slane %v1079, 2
    %v1147 = vsel %vm364, %v1133, %v536
    %v1148 = vsel %vm1114, %v1147, %v1135
    %v1149 = vsel %vm1116, %v1148, %v1137
    %v1150 = vsel %vm1118, %v1149, %v1139
    %v1151 = vsel %vm1120, %v1150, %v1141
    %v1152 = vsel %vm1122, %v1151, %v1143
    %v1153 = vsel %vm1124, %v1152, %v1145
    %1155 = vrot.lane.b32.xlu0 %v1153, 96
    %v1156 = vpop.permute.xlu0 %1155
    %1158 = vst.msk [vmem:[#allocation3 + $0x8] sm:$0xff] %vm1130, %v1156
    %v1159 = vld [vmem:[%s5] sm:$0xff]
    %v1160 = vld [vmem:[%s5 + $0x8] sm:$0xff]
    %v1161 = vld [vmem:[%s5 + $0x10] sm:$0xff]
    %v1162 = vld [vmem:[%s5 + $0x18] sm:$0xff]
    %v1163 = vld [vmem:[%s21] sm:$0xf]
    %vm1164 = vcmask 31744
    %v1166 = vsel %vm1164, %v1159, 0
    %v1169 = vsel %vm1164, %v1160, 0
    %v1172 = vsel %vm1164, %v1161, 0
    %v1175 = vsel %vm1164, %v1162, 0
    %v1178 = vsel %vm1118, %v1163, 0
    %1180 = vmatpush.msra.mxu0 0.0
    %1181 = vmatpush.msra.mxu0 0.0
    %1182 = vmatpush.msra.mxu0 0.0
    %1183 = vmatpush.msra.mxu0 0.0
    %1184 = vmatpush.msra.mxu0 0.0
    %1185 = vmatpush.msra.mxu0 0.0
    %1186 = vmatpush.msra.mxu0 0.0
    %1187 = vmatpush.msra.mxu0 0.0
    %1188 = vmatpush.msra.mxu0 0.0
    %1189 = vmatpush.msra.mxu0 0.0
    %1190 = vmatpush.msra.mxu0 0.0
    %1191 = vmatpush.msra.mxu0 0.0
    %1192 = vmatpush.msra.mxu0 0.0
    %1193 = vmatpush.msra.mxu0 0.0
    %1194 = vmatpush.msra.mxu0 0.0
    %1195 = vmatpush.msra.mxu0 %v1178
    %1196 = vmatmul.f32.gmra.mxu0 %v1166
    %v1197 = vpop.f32.mrf.mxu0
    %v1198 = vadd.f32 0.0, %v1197
    %1199 = vmatmul.f32.gmra.mxu0 %v1169
    %v1200 = vpop.f32.mrf.mxu0
    %v1201 = vadd.f32 0.0, %v1200
    %1202 = vmatmul.f32.gmra.mxu0 %v1172
    %v1203 = vpop.f32.mrf.mxu0
    %v1204 = vadd.f32 0.0, %v1203
    %1205 = vmatmul.f32.gmra.mxu0 %v1175
    %v1206 = vpop.f32.mrf.mxu0
    %v1207 = vadd.f32 0.0, %v1206
    %1208 = vdwg.mxu0
    %v1209 = vld [vmem:[#allocation9] sm:$0xff]
    %v1210 = vld [vmem:[#allocation9 + $0x8] sm:$0xff]
    %1212 = vrot.lane.b32.xlu0 %v1078, 80
    %v1213 = vpop.permute.xlu0 %1212
    %v1214 = vsel %vm329, %v1213, 0
    %1216 = vmatpush.msra.mxu0 0.0
    %1217 = vmatpush.msra.mxu0 0.0
    %1218 = vmatpush.msra.mxu0 0.0
    %1219 = vmatpush.msra.mxu0 0.0
    %1220 = vmatpush.msra.mxu0 0.0
    %1221 = vmatpush.msra.mxu0 0.0
    %1222 = vmatpush.msra.mxu0 0.0
    %1223 = vmatpush.msra.mxu0 0.0
    %1224 = vmatpush.msra.mxu0 0.0
    %1225 = vmatpush.msra.mxu0 0.0
    %1226 = vmatpush.msra.mxu0 0.0
    %1227 = vmatpush.msra.mxu0 0.0
    %1228 = vmatpush.msra.mxu0 0.0
    %1229 = vmatpush.msra.mxu0 0.0
    %1230 = vmatpush.msra.mxu0 %v1210
    %1231 = vmatpush.msra.mxu0 %v1209
    %1232 = vmatmul.f32.gmra.mxu0 %v1214
    %v1233 = vpop.f32.mrf.mxu0
    %v1234 = vadd.f32 0.0, %v1233
    %1235 = vdwg.mxu0
    %v1236 = vld [vmem:[#allocation10] sm:$0x1]
    %v1237 = vperm.slane %v1234, 0
    %v1238 = vadd.f32 %v1198, %v1237
    %v1239 = vadd.f32 %v1201, %v1237
    %v1241 = vperm.slane %v1236, 0
    %v1243 = vadd.f32 %v1238, %v1241
    %v1244 = vadd.f32 %v1239, %v1241
    %v1245 = vmax.f32 %v1243, 0.0
    %v1246 = vmax.f32 %v1244, 0.0
    %vm1247 = vcmask 261120
    %1248 = vst.msk [vmem:[#allocation2] sm:$0xff] %vm1247, %v1245
    %1249 = vst.msk [vmem:[#allocation2 + $0x8] sm:$0xff] %vm1247, %v1246
    %v1250 = vperm.slane %v1234, 1
    %v1251 = vadd.f32 %v1204, %v1250
    %v1252 = vadd.f32 %v1207, %v1250
    %v1253 = vadd.f32 %v1251, %v1241
    %v1254 = vadd.f32 %v1252, %v1241
    %v1255 = vmax.f32 %v1253, 0.0
    %v1256 = vmax.f32 %v1254, 0.0
    %1257 = vst.msk [vmem:[#allocation2 + $0x10] sm:$0xff] %vm1247, %v1255
    %1258 = vst.msk [vmem:[#allocation2 + $0x18] sm:$0xff] %vm1247, %v1256
    %v1259 = vld [vmem:[%s7] sm:$0xff]
    %v1260 = vld [vmem:[%s7 + $0x8] sm:$0xff]
    %v1261 = vld [vmem:[%s7 + $0x10] sm:$0xff]
    %v1262 = vld [vmem:[%s7 + $0x18] sm:$0xff]
    %v1263 = vsub.f32 %v1259, 1.0
    %v1264 = vsub.f32 %v1260, 1.0
    %v1265 = vsub.f32 %v1261, 1.0
    %v1266 = vsub.f32 %v1262, 1.0
    %v1267 = vmul.f32 %v1263, 1e+09
    %v1268 = vmul.f32 %v1264, 1e+09
    %v1269 = vmul.f32 %v1265, 1e+09
    %v1270 = vmul.f32 %v1266, 1e+09
    %v1271 = vld [vmem:[%s9] sm:$0xff]
    %v1272 = vld [vmem:[%s9 + $0x8] sm:$0xff]
    %v1273 = vsub.f32 %v1271, 1.0
    %v1274 = vsub.f32 %v1272, 1.0
    %v1275 = vmul.f32 %v1273, 1e+09
    %v1276 = vmul.f32 %v1274, 1e+09
    %v1277 = vld [vmem:[%s27] sm:$0x3]
    %vm1278 = vcmask 254976
    %1279 = vst.msk [vmem:[#allocation2 + $0x20] sm:$0x3] %vm1278, %v1277
    %v1280 = vld [vmem:[#allocation12] sm:$0x3]
    %1281 = vst.msk [vmem:[#allocation3 + $0x10] sm:$0x3] %vm1278, %v1280
    %v1282 = vld [vmem:[%s27] sm:$0x3]
    %1283 = vst.msk [vmem:[#allocation2 + $0x22] sm:$0x3] %vm1278, %v1282
    %v1284 = vld [vmem:[#allocation12] sm:$0x3]
    %1285 = vst.msk [vmem:[#allocation3 + $0x12] sm:$0x3] %vm1278, %v1284
    %v1286 = vld [vmem:[#allocation2] sm:$0xff]
    %v1287 = vld [vmem:[#allocation2 + $0x8] sm:$0xff]
    %v1288 = vld [vmem:[#allocation2 + $0x10] sm:$0xff]
    %v1289 = vld [vmem:[#allocation2 + $0x18] sm:$0xff]
    %v1290 = vld [vmem:[#allocation2 + $0x20] sm:$0xf]
    %v1291 = vld [vmem:[#allocation3] sm:$0xff]
    %v1292 = vld [vmem:[#allocation3 + $0x8] sm:$0xff]
    %v1293 = vld [vmem:[#allocation3 + $0x10] sm:$0xf]
    %v1294 = vld [vmem:[%s31] sm:$0xff]
    %v1295 = vld [vmem:[%s31 + $0x8] sm:$0xff]
    %v1296 = vld [vmem:[%s31 + $0x10] sm:$0xff]
    %v1297 = vld [vmem:[%s31 + $0x18] sm:$0xff]
    %v1299 = vsel %vm1247, %v1286, 0
    %v1302 = vsel %vm1247, %v1287, 0
    %v1305 = vsel %vm1247, %v1288, 0
    %v1308 = vsel %vm1247, %v1289, 0
    %v1311 = vsel %vm1247, %v1290, 0
    %1313 = vmatpush.msra.mxu0 0.0
    %1314 = vmatpush.msra.mxu0 0.0
    %1315 = vmatpush.msra.mxu0 0.0
    %1316 = vmatpush.msra.mxu0 0.0
    %1317 = vmatpush.msra.mxu0 0.0
    %1318 = vmatpush.msra.mxu0 0.0
    %1319 = vmatpush.msra.mxu0 0.0
    %1320 = vmatpush.msra.mxu0 0.0
    %1321 = vmatpush.msra.mxu0 0.0
    %1322 = vmatpush.msra.mxu0 0.0
    %1323 = vmatpush.msra.mxu0 0.0
    %1324 = vmatpush.msra.mxu0 0.0
    %1325 = vmatpush.msra.mxu0 %v1297
    %1326 = vmatpush.msra.mxu0 %v1296
    %1327 = vmatpush.msra.mxu0 %v1295
    %1328 = vmatpush.msra.mxu0 %v1294
    %1329 = vmatmul.f32.gmra.mxu0 %v1299
    %v1330 = vpop.f32.mrf.mxu0
    %v1331 = vadd.f32 0.0, %v1330
    %1332 = vmatmul.f32.gmra.mxu0 %v1302
    %v1333 = vpop.f32.mrf.mxu0
    %v1334 = vadd.f32 0.0, %v1333
    %1335 = vmatmul.f32.gmra.mxu0 %v1305
    %v1336 = vpop.f32.mrf.mxu0
    %v1337 = vadd.f32 0.0, %v1336
    %1338 = vmatmul.f32.gmra.mxu0 %v1308
    %v1339 = vpop.f32.mrf.mxu0
    %v1340 = vadd.f32 0.0, %v1339
    %1341 = vmatmul.f32.gmra.mxu0 %v1311
    %v1342 = vpop.f32.mrf.mxu0
    %v1343 = vadd.f32 0.0, %v1342
    %1344 = vdwg.mxu0
    %v1345 = vld [vmem:[%s33] sm:$0xff]
    %v1346 = vld [vmem:[%s33 + $0x8] sm:$0xff]
    %v1347 = vld [vmem:[%s33 + $0x10] sm:$0xff]
    %v1348 = vld [vmem:[%s33 + $0x18] sm:$0xff]
    %v1350 = vsel %vm1247, %v1291, 0
    %v1353 = vsel %vm1247, %v1292, 0
    %v1356 = vsel %vm1247, %v1293, 0
    %1358 = vmatpush.msra.mxu0 0.0
    %1359 = vmatpush.msra.mxu0 0.0
    %1360 = vmatpush.msra.mxu0 0.0
    %1361 = vmatpush.msra.mxu0 0.0
    %1362 = vmatpush.msra.mxu0 0.0
    %1363 = vmatpush.msra.mxu0 0.0
    %1364 = vmatpush.msra.mxu0 0.0
    %1365 = vmatpush.msra.mxu0 0.0
    %1366 = vmatpush.msra.mxu0 0.0
    %1367 = vmatpush.msra.mxu0 0.0
    %1368 = vmatpush.msra.mxu0 0.0
    %1369 = vmatpush.msra.mxu0 0.0
    %1370 = vmatpush.msra.mxu0 %v1348
    %1371 = vmatpush.msra.mxu0 %v1347
    %1372 = vmatpush.msra.mxu0 %v1346
    %1373 = vmatpush.msra.mxu0 %v1345
    %1374 = vmatmul.f32.gmra.mxu0 %v1350
    %v1375 = vpop.f32.mrf.mxu0
    %v1376 = vadd.f32 0.0, %v1375
    %1377 = vmatmul.f32.gmra.mxu0 %v1353
    %v1378 = vpop.f32.mrf.mxu0
    %v1379 = vadd.f32 0.0, %v1378
    %1380 = vmatmul.f32.gmra.mxu0 %v1356
    %v1381 = vpop.f32.mrf.mxu0
    %v1382 = vadd.f32 0.0, %v1381
    %1383 = vdwg.mxu0
    %v1385 = vsel %vm1247, %v1331, 0
    %v1388 = vsel %vm1247, %v1334, 0
    %v1391 = vsel %vm1247, %v1337, 0
    %v1394 = vsel %vm1247, %v1340, 0
    %v1397 = vsel %vm1247, %v1376, 0
    %v1400 = vsel %vm1247, %v1379, 0
    %v1403 = vsel %vm1247, %v1382, 0
    %1405 = vmatpush.xpose.msra.mxu0 0.0
    %1406 = vmatpush.xpose.msra.mxu0 0.0
    %1407 = vmatpush.xpose.msra.mxu0 0.0
    %1408 = vmatpush.xpose.msra.mxu0 0.0
    %1409 = vmatpush.xpose.msra.mxu0 0.0
    %1410 = vmatpush.xpose.msra.mxu0 0.0
    %1411 = vmatpush.xpose.msra.mxu0 0.0
    %1412 = vmatpush.xpose.msra.mxu0 0.0
    %1413 = vmatpush.xpose.msra.mxu0 0.0
    %1414 = vmatpush.xpose.msra.mxu0 0.0
    %1415 = vmatpush.xpose.msra.mxu0 0.0
    %1416 = vmatpush.xpose.msra.mxu0 0.0
    %1417 = vmatpush.xpose.msra.mxu0 0.0
    %1418 = vmatpush.xpose.msra.mxu0 %v1403
    %1419 = vmatpush.xpose.msra.mxu0 %v1400
    %1420 = vmatpush.xpose.msra.mxu0 %v1397
    %1421 = vmatmul.f32.gmra.mxu0 %v1385
    %v1422 = vpop.f32.mrf.mxu0
    %v1423 = vadd.f32 0.0, %v1422
    %1424 = vmatmul.f32.gmra.mxu0 %v1388
    %v1425 = vpop.f32.mrf.mxu0
    %v1426 = vadd.f32 0.0, %v1425
    %1427 = vmatmul.f32.gmra.mxu0 %v1391
    %v1428 = vpop.f32.mrf.mxu0
    %v1429 = vadd.f32 0.0, %v1428
    %1430 = vmatmul.f32.gmra.mxu0 %v1394
    %v1431 = vpop.f32.mrf.mxu0
    %v1432 = vadd.f32 0.0, %v1431
    %1433 = vdwg.mxu0
    %v1434 = vmul.f32 %v1423, 0.17677669
    %v1435 = vmul.f32 %v1426, 0.17677669
    %v1436 = vmul.f32 %v1429, 0.17677669
    %v1437 = vmul.f32 %v1432, 0.17677669
    %v1438 = vadd.f32 %v1434, %v1267
    %v1439 = vadd.f32 %v1435, %v1268
    %v1440 = vadd.f32 %v1436, %v1269
    %v1441 = vadd.f32 %v1437, %v1270
    %vm1442 = vcmask 162816
    %v1443 = vsel %vm1442, %v1438, -inf
    %1444 = vmax.xlane.f32.xlu0 %v1443
    %v1445 = vpop.xlane.xlu0 %1444
    %v1446 = vsel %vm1442, %v1439, -inf
    %1447 = vmax.xlane.f32.xlu0 %v1446
    %v1448 = vpop.xlane.xlu0 %1447
    %v1449 = vsel %vm1442, %v1440, -inf
    %1450 = vmax.xlane.f32.xlu0 %v1449
    %v1451 = vpop.xlane.xlu0 %1450
    %v1452 = vsel %vm1442, %v1441, -inf
    %1453 = vmax.xlane.f32.xlu0 %v1452
    %v1454 = vpop.xlane.xlu0 %1453
    %v1455 = vsub.f32 %v1438, %v1445
    %v1456 = vsub.f32 %v1439, %v1448
    %v1457 = vsub.f32 %v1440, %v1451
    %v1458 = vsub.f32 %v1441, %v1454
    %v1459 = vmul.f32 %v1455, 1.442695
    %v1460 = vpow.pop %v1459
    %v1461 = vmul.f32 %v1456, 1.442695
    %v1462 = vpow.pop %v1461
    %v1463 = vmul.f32 %v1457, 1.442695
    %v1464 = vpow.pop %v1463
    %v1465 = vmul.f32 %v1458, 1.442695
    %v1466 = vpow.pop %v1465
    %v1467 = vsel %vm1442, %v1460, 0.0
    %1468 = vadd.xlane.f32.xlu0 %v1467
    %v1469 = vpop.xlane.xlu0 %1468
    %v1470 = vsel %vm1442, %v1462, 0.0
    %1471 = vadd.xlane.f32.xlu0 %v1470
    %v1472 = vpop.xlane.xlu0 %1471
    %v1473 = vsel %vm1442, %v1464, 0.0
    %1474 = vadd.xlane.f32.xlu0 %v1473
    %v1475 = vpop.xlane.xlu0 %1474
    %v1476 = vsel %vm1442, %v1466, 0.0
    %1477 = vadd.xlane.f32.xlu0 %v1476
    %v1478 = vpop.xlane.xlu0 %1477
    %v1479 = vrcp.pop %v1469
    %v1480 = vrcp.pop %v1472
    %v1481 = vrcp.pop %v1475
    %v1482 = vrcp.pop %v1478
    %v1483 = vmul.f32 %v1460, %v1479
    %v1484 = vmul.f32 %v1462, %v1480
    %v1485 = vmul.f32 %v1464, %v1481
    %v1486 = vmul.f32 %v1466, %v1482
    %v1488 = vsel %vm1442, %v1483, 0
    %v1491 = vsel %vm1442, %v1484, 0
    %v1494 = vsel %vm1442, %v1485, 0
    %v1497 = vsel %vm1442, %v1486, 0
    %v1499 = vsel %vm1118, %v1293, 0
    %1501 = vmatpush.msra.mxu0 0.0
    %1502 = vmatpush.msra.mxu0 0.0
    %1503 = vmatpush.msra.mxu0 0.0
    %1504 = vmatpush.msra.mxu0 0.0
    %1505 = vmatpush.msra.mxu0 0.0
    %1506 = vmatpush.msra.mxu0 0.0
    %1507 = vmatpush.msra.mxu0 0.0
    %1508 = vmatpush.msra.mxu0 0.0
    %1509 = vmatpush.msra.mxu0 0.0
    %1510 = vmatpush.msra.mxu0 0.0
    %1511 = vmatpush.msra.mxu0 0.0
    %1512 = vmatpush.msra.mxu0 0.0
    %1513 = vmatpush.msra.mxu0 0.0
    %1514 = vmatpush.msra.mxu0 %v1499
    %1515 = vmatpush.msra.mxu0 %v1292
    %1516 = vmatpush.msra.mxu0 %v1291
    %1517 = vmatmul.f32.gmra.mxu0 %v1488
    %v1518 = vpop.f32.mrf.mxu0
    %v1519 = vadd.f32 0.0, %v1518
    %1520 = vmatmul.f32.gmra.mxu0 %v1491
    %v1521 = vpop.f32.mrf.mxu0
    %v1522 = vadd.f32 0.0, %v1521
    %1523 = vmatmul.f32.gmra.mxu0 %v1494
    %v1524 = vpop.f32.mrf.mxu0
    %v1525 = vadd.f32 0.0, %v1524
    %1526 = vmatmul.f32.gmra.mxu0 %v1497
    %v1527 = vpop.f32.mrf.mxu0
    %v1528 = vadd.f32 0.0, %v1527
    %1529 = vdwg.mxu0
    %1530 = vrot.lane.b32.xlu0 %v1376, 96
    %v1531 = vpop.permute.xlu0 %1530
    %1532 = vrot.lane.b32.xlu0 %v1379, 96
    %v1533 = vpop.permute.xlu0 %1532
    %1535 = vrot.lane.b32.xlu0 %v1331, 96
    %v1536 = vpop.permute.xlu0 %1535
    %1537 = vrot.lane.b32.xlu0 %v1334, 96
    %v1538 = vpop.permute.xlu0 %1537
    %1539 = vrot.lane.b32.xlu0 %v1337, 96
    %v1540 = vpop.permute.xlu0 %1539
    %1541 = vrot.lane.b32.xlu0 %v1340, 96
    %v1542 = vpop.permute.xlu0 %1541
    %1543 = vrot.lane.b32.xlu0 %v1343, 96
    %v1544 = vpop.permute.xlu0 %1543
    %v1545 = vsel %vm1247, %v1531, 0
    %v1547 = vsel %vm1247, %v1533, 0
    %v1549 = vsel %vm1247, %v1536, 0
    %v1551 = vsel %vm1247, %v1538, 0
    %v1553 = vsel %vm1247, %v1540, 0
    %v1555 = vsel %vm1247, %v1542, 0
    %v1557 = vsel %vm1247, %v1544, 0
    %1559 = vmatpush.xpose.msra.mxu0 0.0
    %1560 = vmatpush.xpose.msra.mxu0 0.0
    %1561 = vmatpush.xpose.msra.mxu0 0.0
    %1562 = vmatpush.xpose.msra.mxu0 0.0
    %1563 = vmatpush.xpose.msra.mxu0 0.0
    %1564 = vmatpush.xpose.msra.mxu0 0.0
    %1565 = vmatpush.xpose.msra.mxu0 0.0
    %1566 = vmatpush.xpose.msra.mxu0 0.0
    %1567 = vmatpush.xpose.msra.mxu0 0.0
    %1568 = vmatpush.xpose.msra.mxu0 0.0
    %1569 = vmatpush.xpose.msra.mxu0 0.0
    %1570 = vmatpush.xpose.msra.mxu0 %v1557
    %1571 = vmatpush.xpose.msra.mxu0 %v1555
    %1572 = vmatpush.xpose.msra.mxu0 %v1553
    %1573 = vmatpush.xpose.msra.mxu0 %v1551
    %1574 = vmatpush.xpose.msra.mxu0 %v1549
    %1575 = vmatmul.f32.gmra.mxu0 %v1545
    %v1576 = vpop.f32.mrf.mxu0
    %v1577 = vadd.f32 0.0, %v1576
    %1578 = vmatmul.f32.gmra.mxu0 %v1547
    %v1579 = vpop.f32.mrf.mxu0
    %v1580 = vadd.f32 0.0, %v1579
    %1581 = vdwg.mxu0
    %v1582 = vmul.f32 %v1577, 0.17677669
    %v1583 = vmul.f32 %v1580, 0.17677669
    %v1584 = vadd.f32 %v1582, %v1275
    %v1585 = vadd.f32 %v1583, %v1276
    %vm1586 = vcmask 293888
    %v1587 = vsel %vm1586, %v1584, -inf
    %1588 = vmax.xlane.f32.xlu0 %v1587
    %v1589 = vpop.xlane.xlu0 %1588
    %v1590 = vsel %vm1586, %v1585, -inf
    %1591 = vmax.xlane.f32.xlu0 %v1590
    %v1592 = vpop.xlane.xlu0 %1591
    %v1593 = vsub.f32 %v1584, %v1589
    %v1594 = vsub.f32 %v1585, %v1592
    %v1595 = vmul.f32 %v1593, 1.442695
    %v1596 = vpow.pop %v1595
    %v1597 = vmul.f32 %v1594, 1.442695
    %v1598 = vpow.pop %v1597
    %v1599 = vsel %vm1586, %v1596, 0.0
    %1600 = vadd.xlane.f32.xlu0 %v1599
    %v1601 = vpop.xlane.xlu0 %1600
    %v1602 = vsel %vm1586, %v1598, 0.0
    %1603 = vadd.xlane.f32.xlu0 %v1602
    %v1604 = vpop.xlane.xlu0 %1603
    %v1605 = vrcp.pop %v1601
    %v1606 = vrcp.pop %v1604
    %v1607 = vmul.f32 %v1596, %v1605
    %v1608 = vmul.f32 %v1598, %v1606
    %v1610 = vsel %vm1586, %v1607, 0
    %v1613 = vsel %vm1586, %v1608, 0
    %v1615 = vsel %vm1118, %v1290, 0
    %1617 = vmatpush.msra.mxu0 0.0
    %1618 = vmatpush.msra.mxu0 0.0
    %1619 = vmatpush.msra.mxu0 0.0
    %1620 = vmatpush.msra.mxu0 0.0
    %1621 = vmatpush.msra.mxu0 0.0
    %1622 = vmatpush.msra.mxu0 0.0
    %1623 = vmatpush.msra.mxu0 0.0
    %1624 = vmatpush.msra.mxu0 0.0
    %1625 = vmatpush.msra.mxu0 0.0
    %1626 = vmatpush.msra.mxu0 0.0
    %1627 = vmatpush.msra.mxu0 0.0
    %1628 = vmatpush.msra.mxu0 %v1615
    %1629 = vmatpush.msra.mxu0 %v1289
    %1630 = vmatpush.msra.mxu0 %v1288
    %1631 = vmatpush.msra.mxu0 %v1287
    %1632 = vmatpush.msra.mxu0 %v1286
    %1633 = vmatmul.f32.gmra.mxu0 %v1610
    %v1634 = vpop.f32.mrf.mxu0
    %v1635 = vadd.f32 0.0, %v1634
    %1636 = vmatmul.f32.gmra.mxu0 %v1613
    %v1637 = vpop.f32.mrf.mxu0
    %v1638 = vadd.f32 0.0, %v1637
    %1639 = vdwg.mxu0
    %v1640 = vld [vmem:[%s35] sm:$0xff]
    %v1641 = vld [vmem:[%s35 + $0x8] sm:$0xff]
    %v1642 = vld [vmem:[%s35 + $0x10] sm:$0xff]
    %v1643 = vld [vmem:[%s35 + $0x18] sm:$0xff]
    %v1644 = vld [vmem:[%s37] sm:$0xff]
    %v1645 = vld [vmem:[%s37 + $0x8] sm:$0xff]
    %v1646 = vld [vmem:[%s37 + $0x10] sm:$0xff]
    %v1647 = vld [vmem:[%s37 + $0x18] sm:$0xff]
    %v1649 = vsel %vm1247, %v1519, 0
    %v1652 = vsel %vm1247, %v1522, 0
    %v1655 = vsel %vm1247, %v1525, 0
    %v1658 = vsel %vm1247, %v1528, 0
    %1660 = vmatpush.msra.mxu0 0.0
    %1661 = vmatpush.msra.mxu0 0.0
    %1662 = vmatpush.msra.mxu0 0.0
    %1663 = vmatpush.msra.mxu0 0.0
    %1664 = vmatpush.msra.mxu0 0.0
    %1665 = vmatpush.msra.mxu0 0.0
    %1666 = vmatpush.msra.mxu0 0.0
    %1667 = vmatpush.msra.mxu0 0.0
    %1668 = vmatpush.msra.mxu0 0.0
    %1669 = vmatpush.msra.mxu0 0.0
    %1670 = vmatpush.msra.mxu0 0.0
    %1671 = vmatpush.msra.mxu0 0.0
    %1672 = vmatpush.msra.mxu0 %v1647
    %1673 = vmatpush.msra.mxu0 %v1646
    %1674 = vmatpush.msra.mxu0 %v1645
    %1675 = vmatpush.msra.mxu0 %v1644
    %1676 = vmatmul.f32.gmra.mxu0 %v1649
    %v1677 = vpop.f32.mrf.mxu0
    %v1678 = vadd.f32 0.0, %v1677
    %1679 = vmatmul.f32.gmra.mxu0 %v1652
    %v1680 = vpop.f32.mrf.mxu0
    %v1681 = vadd.f32 0.0, %v1680
    %1682 = vmatmul.f32.gmra.mxu0 %v1655
    %v1683 = vpop.f32.mrf.mxu0
    %v1684 = vadd.f32 0.0, %v1683
    %1685 = vmatmul.f32.gmra.mxu0 %v1658
    %v1686 = vpop.f32.mrf.mxu0
    %v1687 = vadd.f32 0.0, %v1686
    %1688 = vdwg.mxu0
    %1689 = vmatpush.msra.mxu0 0.0
    %1690 = vmatpush.msra.mxu0 0.0
    %1691 = vmatpush.msra.mxu0 0.0
    %1692 = vmatpush.msra.mxu0 0.0
    %1693 = vmatpush.msra.mxu0 0.0
    %1694 = vmatpush.msra.mxu0 0.0
    %1695 = vmatpush.msra.mxu0 0.0
    %1696 = vmatpush.msra.mxu0 0.0
    %1697 = vmatpush.msra.mxu0 0.0
    %1698 = vmatpush.msra.mxu0 0.0
    %1699 = vmatpush.msra.mxu0 0.0
    %1700 = vmatpush.msra.mxu0 0.0
    %1701 = vmatpush.msra.mxu0 %v1643
    %1702 = vmatpush.msra.mxu0 %v1642
    %1703 = vmatpush.msra.mxu0 %v1641
    %1704 = vmatpush.msra.mxu0 %v1640
    %1705 = vmatmul.f32.gmra.mxu0 %v1299
    %v1706 = vpop.f32.mrf.mxu0
    %v1707 = vadd.f32 %v1678, %v1706
    %1708 = vmatmul.f32.gmra.mxu0 %v1302
    %v1709 = vpop.f32.mrf.mxu0
    %v1710 = vadd.f32 %v1681, %v1709
    %1711 = vmatmul.f32.gmra.mxu0 %v1305
    %v1712 = vpop.f32.mrf.mxu0
    %v1713 = vadd.f32 %v1684, %v1712
    %1714 = vmatmul.f32.gmra.mxu0 %v1308
    %v1715 = vpop.f32.mrf.mxu0
    %v1716 = vadd.f32 %v1687, %v1715
    %1717 = vdwg.mxu0
    %v1718 = vld [vmem:[#allocation13] sm:$0x1]
    %v1720 = vperm.slane %v1718, 0
    %v1722 = vadd.f32 %v1707, %v1720
    %v1723 = vadd.f32 %v1710, %v1720
    %v1724 = vadd.f32 %v1713, %v1720
    %v1725 = vadd.f32 %v1716, %v1720
    %v1726 = vmax.f32 %v1722, 0.0
    %v1727 = vmax.f32 %v1723, 0.0
    %v1728 = vmax.f32 %v1724, 0.0
    %v1729 = vmax.f32 %v1725, 0.0
    %v1730 = vadd.f32 %v1726, %v1286
    %v1731 = vadd.f32 %v1727, %v1287
    %v1732 = vadd.f32 %v1728, %v1288
    %v1733 = vadd.f32 %v1729, %v1289
    %v1734 = vld [vmem:[%s41] sm:$0xff]
    %v1735 = vld [vmem:[%s41 + $0x8] sm:$0xff]
    %v1736 = vld [vmem:[%s41 + $0x10] sm:$0xff]
    %v1737 = vld [vmem:[%s41 + $0x18] sm:$0xff]
    %v1738 = vld [vmem:[%s43] sm:$0xff]
    %v1739 = vld [vmem:[%s43 + $0x8] sm:$0xff]
    %v1740 = vld [vmem:[%s43 + $0x10] sm:$0xff]
    %v1741 = vld [vmem:[%s43 + $0x18] sm:$0xff]
    %v1743 = vsel %vm1247, %v1635, 0
    %v1746 = vsel %vm1247, %v1638, 0
    %1748 = vmatpush.msra.mxu0 0.0
    %1749 = vmatpush.msra.mxu0 0.0
    %1750 = vmatpush.msra.mxu0 0.0
    %1751 = vmatpush.msra.mxu0 0.0
    %1752 = vmatpush.msra.mxu0 0.0
    %1753 = vmatpush.msra.mxu0 0.0
    %1754 = vmatpush.msra.mxu0 0.0
    %1755 = vmatpush.msra.mxu0 0.0
    %1756 = vmatpush.msra.mxu0 0.0
    %1757 = vmatpush.msra.mxu0 0.0
    %1758 = vmatpush.msra.mxu0 0.0
    %1759 = vmatpush.msra.mxu0 0.0
    %1760 = vmatpush.msra.mxu0 %v1741
    %1761 = vmatpush.msra.mxu0 %v1740
    %1762 = vmatpush.msra.mxu0 %v1739
    %1763 = vmatpush.msra.mxu0 %v1738
    %1764 = vmatmul.f32.gmra.mxu0 %v1743
    %v1765 = vpop.f32.mrf.mxu0
    %v1766 = vadd.f32 0.0, %v1765
    %1767 = vmatmul.f32.gmra.mxu0 %v1746
    %v1768 = vpop.f32.mrf.mxu0
    %v1769 = vadd.f32 0.0, %v1768
    %1770 = vdwg.mxu0
    %1771 = vmatpush.msra.mxu0 0.0
    %1772 = vmatpush.msra.mxu0 0.0
    %1773 = vmatpush.msra.mxu0 0.0
    %1774 = vmatpush.msra.mxu0 0.0
    %1775 = vmatpush.msra.mxu0 0.0
    %1776 = vmatpush.msra.mxu0 0.0
    %1777 = vmatpush.msra.mxu0 0.0
    %1778 = vmatpush.msra.mxu0 0.0
    %1779 = vmatpush.msra.mxu0 0.0
    %1780 = vmatpush.msra.mxu0 0.0
    %1781 = vmatpush.msra.mxu0 0.0
    %1782 = vmatpush.msra.mxu0 0.0
    %1783 = vmatpush.msra.mxu0 %v1737
    %1784 = vmatpush.msra.mxu0 %v1736
    %1785 = vmatpush.msra.mxu0 %v1735
    %1786 = vmatpush.msra.mxu0 %v1734
    %1787 = vmatmul.f32.gmra.mxu0 %v1350
    %v1788 = vpop.f32.mrf.mxu0
    %v1789 = vadd.f32 %v1766, %v1788
    %1790 = vmatmul.f32.gmra.mxu0 %v1353
    %v1791 = vpop.f32.mrf.mxu0
    %v1792 = vadd.f32 %v1769, %v1791
    %1793 = vdwg.mxu0
    %v1794 = vld [vmem:[#allocation15] sm:$0x1]
    %v1796 = vperm.slane %v1794, 0
    %v1798 = vadd.f32 %v1789, %v1796
    %v1799 = vadd.f32 %v1792, %v1796
    %v1800 = vmax.f32 %v1798, 0.0
    %v1801 = vmax.f32 %v1799, 0.0
    %v1802 = vadd.f32 %v1800, %v1291
    %v1803 = vadd.f32 %v1801, %v1292
    %1804 = vst.msk [vmem:[#allocation2] sm:$0xff] %vm1247, %v1730
    %1805 = vst.msk [vmem:[#allocation2 + $0x8] sm:$0xff] %vm1247, %v1731
    %1806 = vst.msk [vmem:[#allocation2 + $0x10] sm:$0xff] %vm1247, %v1732
    %1807 = vst.msk [vmem:[#allocation2 + $0x18] sm:$0xff] %vm1247, %v1733
    %1808 = vst.msk [vmem:[#allocation3] sm:$0xff] %vm1247, %v1802
    %1809 = vst.msk [vmem:[#allocation3 + $0x8] sm:$0xff] %vm1247, %v1803
    %s1810 = scalar_lea.vmem %s27, 2
    %v1811 = vld [vmem:[%s1810] sm:$0x3]
    %1812 = vst.msk [vmem:[#allocation2 + $0x20] sm:$0x3] %vm1278, %v1811
    %s1813 = scalar_lea.vmem [#allocation12], 2
    %v1814 = vld [vmem:[%s1813] sm:$0x3]
    %1815 = vst.msk [vmem:[#allocation3 + $0x10] sm:$0x3] %vm1278, %v1814
    %v1816 = vld [vmem:[%s1810] sm:$0x3]
    %1817 = vst.msk [vmem:[#allocation2 + $0x22] sm:$0x3] %vm1278, %v1816
    %v1818 = vld [vmem:[%s1813] sm:$0x3]
    %1819 = vst.msk [vmem:[#allocation3 + $0x12] sm:$0x3] %vm1278, %v1818
    %v1820 = vld [vmem:[#allocation2] sm:$0xff]
    %v1821 = vld [vmem:[#allocation2 + $0x8] sm:$0xff]
    %v1822 = vld [vmem:[#allocation2 + $0x10] sm:$0xff]
    %v1823 = vld [vmem:[#allocation2 + $0x18] sm:$0xff]
    %v1824 = vld [vmem:[#allocation2 + $0x20] sm:$0xf]
    %v1825 = vld [vmem:[#allocation3] sm:$0xff]
    %v1826 = vld [vmem:[#allocation3 + $0x8] sm:$0xff]
    %v1827 = vld [vmem:[#allocation3 + $0x10] sm:$0xf]
    %s1828 = scalar_lea.vmem %s31, 32
    %v1829 = vld [vmem:[%s1828] sm:$0xff]
    %v1830 = vld [vmem:[%s1828 + $0x8] sm:$0xff]
    %v1831 = vld [vmem:[%s1828 + $0x10] sm:$0xff]
    %v1832 = vld [vmem:[%s1828 + $0x18] sm:$0xff]
    %v1834 = vsel %vm1247, %v1820, 0
    %v1837 = vsel %vm1247, %v1821, 0
    %v1840 = vsel %vm1247, %v1822, 0
    %v1843 = vsel %vm1247, %v1823, 0
    %v1846 = vsel %vm1247, %v1824, 0
    %1848 = vmatpush.msra.mxu0 0.0
    %1849 = vmatpush.msra.mxu0 0.0
    %1850 = vmatpush.msra.mxu0 0.0
    %1851 = vmatpush.msra.mxu0 0.0
    %1852 = vmatpush.msra.mxu0 0.0
    %1853 = vmatpush.msra.mxu0 0.0
    %1854 = vmatpush.msra.mxu0 0.0
    %1855 = vmatpush.msra.mxu0 0.0
    %1856 = vmatpush.msra.mxu0 0.0
    %1857 = vmatpush.msra.mxu0 0.0
    %1858 = vmatpush.msra.mxu0 0.0
    %1859 = vmatpush.msra.mxu0 0.0
    %1860 = vmatpush.msra.mxu0 %v1832
    %1861 = vmatpush.msra.mxu0 %v1831
    %1862 = vmatpush.msra.mxu0 %v1830
    %1863 = vmatpush.msra.mxu0 %v1829
    %1864 = vmatmul.f32.gmra.mxu0 %v1834
    %v1865 = vpop.f32.mrf.mxu0
    %v1866 = vadd.f32 0.0, %v1865
    %1867 = vmatmul.f32.gmra.mxu0 %v1837
    %v1868 = vpop.f32.mrf.mxu0
    %v1869 = vadd.f32 0.0, %v1868
    %1870 = vmatmul.f32.gmra.mxu0 %v1840
    %v1871 = vpop.f32.mrf.mxu0
    %v1872 = vadd.f32 0.0, %v1871
    %1873 = vmatmul.f32.gmra.mxu0 %v1843
    %v1874 = vpop.f32.mrf.mxu0
    %v1875 = vadd.f32 0.0, %v1874
    %1876 = vmatmul.f32.gmra.mxu0 %v1846
    %v1877 = vpop.f32.mrf.mxu0
    %v1878 = vadd.f32 0.0, %v1877
    %1879 = vdwg.mxu0
    %s1880 = scalar_lea.vmem %s33, 32
    %v1881 = vld [vmem:[%s1880] sm:$0xff]
    %v1882 = vld [vmem:[%s1880 + $0x8] sm:$0xff]
    %v1883 = vld [vmem:[%s1880 + $0x10] sm:$0xff]
    %v1884 = vld [vmem:[%s1880 + $0x18] sm:$0xff]
    %v1886 = vsel %vm1247, %v1825, 0
    %v1889 = vsel %vm1247, %v1826, 0
    %v1892 = vsel %vm1247, %v1827, 0
    %1894 = vmatpush.msra.mxu0 0.0
    %1895 = vmatpush.msra.mxu0 0.0
    %1896 = vmatpush.msra.mxu0 0.0
    %1897 = vmatpush.msra.mxu0 0.0
    %1898 = vmatpush.msra.mxu0 0.0
    %1899 = vmatpush.msra.mxu0 0.0
    %1900 = vmatpush.msra.mxu0 0.0
    %1901 = vmatpush.msra.mxu0 0.0
    %1902 = vmatpush.msra.mxu0 0.0
    %1903 = vmatpush.msra.mxu0 0.0
    %1904 = vmatpush.msra.mxu0 0.0
    %1905 = vmatpush.msra.mxu0 0.0
    %1906 = vmatpush.msra.mxu0 %v1884
    %1907 = vmatpush.msra.mxu0 %v1883
    %1908 = vmatpush.msra.mxu0 %v1882
    %1909 = vmatpush.msra.mxu0 %v1881
    %1910 = vmatmul.f32.gmra.mxu0 %v1886
    %v1911 = vpop.f32.mrf.mxu0
    %v1912 = vadd.f32 0.0, %v1911
    %1913 = vmatmul.f32.gmra.mxu0 %v1889
    %v1914 = vpop.f32.mrf.mxu0
    %v1915 = vadd.f32 0.0, %v1914
    %1916 = vmatmul.f32.gmra.mxu0 %v1892
    %v1917 = vpop.f32.mrf.mxu0
    %v1918 = vadd.f32 0.0, %v1917
    %1919 = vdwg.mxu0
    %v1921 = vsel %vm1247, %v1866, 0
    %v1924 = vsel %vm1247, %v1869, 0
    %v1927 = vsel %vm1247, %v1872, 0
    %v1930 = vsel %vm1247, %v1875, 0
    %v1933 = vsel %vm1247, %v1912, 0
    %v1936 = vsel %vm1247, %v1915, 0
    %v1939 = vsel %vm1247, %v1918, 0
    %1941 = vmatpush.xpose.msra.mxu0 0.0
    %1942 = vmatpush.xpose.msra.mxu0 0.0
    %1943 = vmatpush.xpose.msra.mxu0 0.0
    %1944 = vmatpush.xpose.msra.mxu0 0.0
    %1945 = vmatpush.xpose.msra.mxu0 0.0
    %1946 = vmatpush.xpose.msra.mxu0 0.0
    %1947 = vmatpush.xpose.msra.mxu0 0.0
    %1948 = vmatpush.xpose.msra.mxu0 0.0
    %1949 = vmatpush.xpose.msra.mxu0 0.0
    %1950 = vmatpush.xpose.msra.mxu0 0.0
    %1951 = vmatpush.xpose.msra.mxu0 0.0
    %1952 = vmatpush.xpose.msra.mxu0 0.0
    %1953 = vmatpush.xpose.msra.mxu0 0.0
    %1954 = vmatpush.xpose.msra.mxu0 %v1939
    %1955 = vmatpush.xpose.msra.mxu0 %v1936
    %1956 = vmatpush.xpose.msra.mxu0 %v1933
    %1957 = vmatmul.f32.gmra.mxu0 %v1921
    %v1958 = vpop.f32.mrf.mxu0
    %v1959 = vadd.f32 0.0, %v1958
    %1960 = vmatmul.f32.gmra.mxu0 %v1924
    %v1961 = vpop.f32.mrf.mxu0
    %v1962 = vadd.f32 0.0, %v1961
    %1963 = vmatmul.f32.gmra.mxu0 %v1927
    %v1964 = vpop.f32.mrf.mxu0
    %v1965 = vadd.f32 0.0, %v1964
    %1966 = vmatmul.f32.gmra.mxu0 %v1930
    %v1967 = vpop.f32.mrf.mxu0
    %v1968 = vadd.f32 0.0, %v1967
    %1969 = vdwg.mxu0
    %v1970 = vmul.f32 %v1959, 0.17677669
    %v1971 = vmul.f32 %v1962, 0.17677669
    %v1972 = vmul.f32 %v1965, 0.17677669
    %v1973 = vmul.f32 %v1968, 0.17677669
    %v1974 = vadd.f32 %v1970, %v1267
    %v1975 = vadd.f32 %v1971, %v1268
    %v1976 = vadd.f32 %v1972, %v1269
    %v1977 = vadd.f32 %v1973, %v1270
    %v1978 = vsel %vm1442, %v1974, -inf
    %1979 = vmax.xlane.f32.xlu0 %v1978
    %v1980 = vpop.xlane.xlu0 %1979
    %v1981 = vsel %vm1442, %v1975, -inf
    %1982 = vmax.xlane.f32.xlu0 %v1981
    %v1983 = vpop.xlane.xlu0 %1982
    %v1984 = vsel %vm1442, %v1976, -inf
    %1985 = vmax.xlane.f32.xlu0 %v1984
    %v1986 = vpop.xlane.xlu0 %1985
    %v1987 = vsel %vm1442, %v1977, -inf
    %1988 = vmax.xlane.f32.xlu0 %v1987
    %v1989 = vpop.xlane.xlu0 %1988
    %v1990 = vsub.f32 %v1974, %v1980
    %v1991 = vsub.f32 %v1975, %v1983
    %v1992 = vsub.f32 %v1976, %v1986
    %v1993 = vsub.f32 %v1977, %v1989
    %v1994 = vmul.f32 %v1990, 1.442695
    %v1995 = vpow.pop %v1994
    %v1996 = vmul.f32 %v1991, 1.442695
    %v1997 = vpow.pop %v1996
    %v1998 = vmul.f32 %v1992, 1.442695
    %v1999 = vpow.pop %v1998
    %v2000 = vmul.f32 %v1993, 1.442695
    %v2001 = vpow.pop %v2000
    %v2002 = vsel %vm1442, %v1995, 0.0
    %2003 = vadd.xlane.f32.xlu0 %v2002
    %v2004 = vpop.xlane.xlu0 %2003
    %v2005 = vsel %vm1442, %v1997, 0.0
    %2006 = vadd.xlane.f32.xlu0 %v2005
    %v2007 = vpop.xlane.xlu0 %2006
    %v2008 = vsel %vm1442, %v1999, 0.0
    %2009 = vadd.xlane.f32.xlu0 %v2008
    %v2010 = vpop.xlane.xlu0 %2009
    %v2011 = vsel %vm1442, %v2001, 0.0
    %2012 = vadd.xlane.f32.xlu0 %v2011
    %v2013 = vpop.xlane.xlu0 %2012
    %v2014 = vrcp.pop %v2004
    %v2015 = vrcp.pop %v2007
    %v2016 = vrcp.pop %v2010
    %v2017 = vrcp.pop %v2013
    %v2018 = vmul.f32 %v1995, %v2014
    %v2019 = vmul.f32 %v1997, %v2015
    %v2020 = vmul.f32 %v1999, %v2016
    %v2021 = vmul.f32 %v2001, %v2017
    %v2023 = vsel %vm1442, %v2018, 0
    %v2026 = vsel %vm1442, %v2019, 0
    %v2029 = vsel %vm1442, %v2020, 0
    %v2032 = vsel %vm1442, %v2021, 0
    %v2034 = vsel %vm1118, %v1827, 0
    %2036 = vmatpush.msra.mxu0 0.0
    %2037 = vmatpush.msra.mxu0 0.0
    %2038 = vmatpush.msra.mxu0 0.0
    %2039 = vmatpush.msra.mxu0 0.0
    %2040 = vmatpush.msra.mxu0 0.0
    %2041 = vmatpush.msra.mxu0 0.0
    %2042 = vmatpush.msra.mxu0 0.0
    %2043 = vmatpush.msra.mxu0 0.0
    %2044 = vmatpush.msra.mxu0 0.0
    %2045 = vmatpush.msra.mxu0 0.0
    %2046 = vmatpush.msra.mxu0 0.0
    %2047 = vmatpush.msra.mxu0 0.0
    %2048 = vmatpush.msra.mxu0 0.0
    %2049 = vmatpush.msra.mxu0 %v2034
    %2050 = vmatpush.msra.mxu0 %v1826
    %2051 = vmatpush.msra.mxu0 %v1825
    %2052 = vmatmul.f32.gmra.mxu0 %v2023
    %v2053 = vpop.f32.mrf.mxu0
    %v2054 = vadd.f32 0.0, %v2053
    %2055 = vmatmul.f32.gmra.mxu0 %v2026
    %v2056 = vpop.f32.mrf.mxu0
    %v2057 = vadd.f32 0.0, %v2056
    %2058 = vmatmul.f32.gmra.mxu0 %v2029
    %v2059 = vpop.f32.mrf.mxu0
    %v2060 = vadd.f32 0.0, %v2059
    %2061 = vmatmul.f32.gmra.mxu0 %v2032
    %v2062 = vpop.f32.mrf.mxu0
    %v2063 = vadd.f32 0.0, %v2062
    %2064 = vdwg.mxu0
    %2065 = vrot.lane.b32.xlu0 %v1912, 96
    %v2066 = vpop.permute.xlu0 %2065
    %2067 = vrot.lane.b32.xlu0 %v1915, 96
    %v2068 = vpop.permute.xlu0 %2067
    %2070 = vrot.lane.b32.xlu0 %v1866, 96
    %v2071 = vpop.permute.xlu0 %2070
    %2072 = vrot.lane.b32.xlu0 %v1869, 96
    %v2073 = vpop.permute.xlu0 %2072
    %2074 = vrot.lane.b32.xlu0 %v1872, 96
    %v2075 = vpop.permute.xlu0 %2074
    %2076 = vrot.lane.b32.xlu0 %v1875, 96
    %v2077 = vpop.permute.xlu0 %2076
    %2078 = vrot.lane.b32.xlu0 %v1878, 96
    %v2079 = vpop.permute.xlu0 %2078
    %v2080 = vsel %vm1247, %v2066, 0
    %v2082 = vsel %vm1247, %v2068, 0
    %v2084 = vsel %vm1247, %v2071, 0
    %v2086 = vsel %vm1247, %v2073, 0
    %v2088 = vsel %vm1247, %v2075, 0
    %v2090 = vsel %vm1247, %v2077, 0
    %v2092 = vsel %vm1247, %v2079, 0
    %2094 = vmatpush.xpose.msra.mxu0 0.0
    %2095 = vmatpush.xpose.msra.mxu0 0.0
    %2096 = vmatpush.xpose.msra.mxu0 0.0
    %2097 = vmatpush.xpose.msra.mxu0 0.0
    %2098 = vmatpush.xpose.msra.mxu0 0.0
    %2099 = vmatpush.xpose.msra.mxu0 0.0
    %2100 = vmatpush.xpose.msra.mxu0 0.0
    %2101 = vmatpush.xpose.msra.mxu0 0.0
    %2102 = vmatpush.xpose.msra.mxu0 0.0
    %2103 = vmatpush.xpose.msra.mxu0 0.0
    %2104 = vmatpush.xpose.msra.mxu0 0.0
    %2105 = vmatpush.xpose.msra.mxu0 %v2092
    %2106 = vmatpush.xpose.msra.mxu0 %v2090
    %2107 = vmatpush.xpose.msra.mxu0 %v2088
    %2108 = vmatpush.xpose.msra.mxu0 %v2086
    %2109 = vmatpush.xpose.msra.mxu0 %v2084
    %2110 = vmatmul.f32.gmra.mxu0 %v2080
    %v2111 = vpop.f32.mrf.mxu0
    %v2112 = vadd.f32 0.0, %v2111
    %2113 = vmatmul.f32.gmra.mxu0 %v2082
    %v2114 = vpop.f32.mrf.mxu0
    %v2115 = vadd.f32 0.0, %v2114
    %2116 = vdwg.mxu0
    %v2117 = vmul.f32 %v2112, 0.17677669
    %v2118 = vmul.f32 %v2115, 0.17677669
    %v2119 = vadd.f32 %v2117, %v1275
    %v2120 = vadd.f32 %v2118, %v1276
    %v2121 = vsel %vm1586, %v2119, -inf
    %2122 = vmax.xlane.f32.xlu0 %v2121
    %v2123 = vpop.xlane.xlu0 %2122
    %v2124 = vsel %vm1586, %v2120, -inf
    %2125 = vmax.xlane.f32.xlu0 %v2124
    %v2126 = vpop.xlane.xlu0 %2125
    %v2127 = vsub.f32 %v2119, %v2123
    %v2128 = vsub.f32 %v2120, %v2126
    %v2129 = vmul.f32 %v2127, 1.442695
    %v2130 = vpow.pop %v2129
    %v2131 = vmul.f32 %v2128, 1.442695
    %v2132 = vpow.pop %v2131
    %v2133 = vsel %vm1586, %v2130, 0.0
    %2134 = vadd.xlane.f32.xlu0 %v2133
    %v2135 = vpop.xlane.xlu0 %2134
    %v2136 = vsel %vm1586, %v2132, 0.0
    %2137 = vadd.xlane.f32.xlu0 %v2136
    %v2138 = vpop.xlane.xlu0 %2137
    %v2139 = vrcp.pop %v2135
    %v2140 = vrcp.pop %v2138
    %v2141 = vmul.f32 %v2130, %v2139
    %v2142 = vmul.f32 %v2132, %v2140
    %v2144 = vsel %vm1586, %v2141, 0
    %v2147 = vsel %vm1586, %v2142, 0
    %v2149 = vsel %vm1118, %v1824, 0
    %2151 = vmatpush.msra.mxu0 0.0
    %2152 = vmatpush.msra.mxu0 0.0
    %2153 = vmatpush.msra.mxu0 0.0
    %2154 = vmatpush.msra.mxu0 0.0
    %2155 = vmatpush.msra.mxu0 0.0
    %2156 = vmatpush.msra.mxu0 0.0
    %2157 = vmatpush.msra.mxu0 0.0
    %2158 = vmatpush.msra.mxu0 0.0
    %2159 = vmatpush.msra.mxu0 0.0
    %2160 = vmatpush.msra.mxu0 0.0
    %2161 = vmatpush.msra.mxu0 0.0
    %2162 = vmatpush.msra.mxu0 %v2149
    %2163 = vmatpush.msra.mxu0 %v1823
    %2164 = vmatpush.msra.mxu0 %v1822
    %2165 = vmatpush.msra.mxu0 %v1821
    %2166 = vmatpush.msra.mxu0 %v1820
    %2167 = vmatmul.f32.gmra.mxu0 %v2144
    %v2168 = vpop.f32.mrf.mxu0
    %v2169 = vadd.f32 0.0, %v2168
    %2170 = vmatmul.f32.gmra.mxu0 %v2147
    %v2171 = vpop.f32.mrf.mxu0
    %v2172 = vadd.f32 0.0, %v2171
    %2173 = vdwg.mxu0
    %s2174 = scalar_lea.vmem %s35, 32
    %v2175 = vld [vmem:[%s2174] sm:$0xff]
    %v2176 = vld [vmem:[%s2174 + $0x8] sm:$0xff]
    %v2177 = vld [vmem:[%s2174 + $0x10] sm:$0xff]
    %v2178 = vld [vmem:[%s2174 + $0x18] sm:$0xff]
    %s2179 = scalar_lea.vmem %s37, 32
    %v2180 = vld [vmem:[%s2179] sm:$0xff]
    %v2181 = vld [vmem:[%s2179 + $0x8] sm:$0xff]
    %v2182 = vld [vmem:[%s2179 + $0x10] sm:$0xff]
    %v2183 = vld [vmem:[%s2179 + $0x18] sm:$0xff]
    %v2185 = vsel %vm1247, %v2054, 0
    %v2188 = vsel %vm1247, %v2057, 0
    %v2191 = vsel %vm1247, %v2060, 0
    %v2194 = vsel %vm1247, %v2063, 0
    %2196 = vmatpush.msra.mxu0 0.0
    %2197 = vmatpush.msra.mxu0 0.0
    %2198 = vmatpush.msra.mxu0 0.0
    %2199 = vmatpush.msra.mxu0 0.0
    %2200 = vmatpush.msra.mxu0 0.0
    %2201 = vmatpush.msra.mxu0 0.0
    %2202 = vmatpush.msra.mxu0 0.0
    %2203 = vmatpush.msra.mxu0 0.0
    %2204 = vmatpush.msra.mxu0 0.0
    %2205 = vmatpush.msra.mxu0 0.0
    %2206 = vmatpush.msra.mxu0 0.0
    %2207 = vmatpush.msra.mxu0 0.0
    %2208 = vmatpush.msra.mxu0 %v2183
    %2209 = vmatpush.msra.mxu0 %v2182
    %2210 = vmatpush.msra.mxu0 %v2181
    %2211 = vmatpush.msra.mxu0 %v2180
    %2212 = vmatmul.f32.gmra.mxu0 %v2185
    %v2213 = vpop.f32.mrf.mxu0
    %v2214 = vadd.f32 0.0, %v2213
    %2215 = vmatmul.f32.gmra.mxu0 %v2188
    %v2216 = vpop.f32.mrf.mxu0
    %v2217 = vadd.f32 0.0, %v2216
    %2218 = vmatmul.f32.gmra.mxu0 %v2191
    %v2219 = vpop.f32.mrf.mxu0
    %v2220 = vadd.f32 0.0, %v2219
    %2221 = vmatmul.f32.gmra.mxu0 %v2194
    %v2222 = vpop.f32.mrf.mxu0
    %v2223 = vadd.f32 0.0, %v2222
    %2224 = vdwg.mxu0
    %2225 = vmatpush.msra.mxu0 0.0
    %2226 = vmatpush.msra.mxu0 0.0
    %2227 = vmatpush.msra.mxu0 0.0
    %2228 = vmatpush.msra.mxu0 0.0
    %2229 = vmatpush.msra.mxu0 0.0
    %2230 = vmatpush.msra.mxu0 0.0
    %2231 = vmatpush.msra.mxu0 0.0
    %2232 = vmatpush.msra.mxu0 0.0
    %2233 = vmatpush.msra.mxu0 0.0
    %2234 = vmatpush.msra.mxu0 0.0
    %2235 = vmatpush.msra.mxu0 0.0
    %2236 = vmatpush.msra.mxu0 0.0
    %2237 = vmatpush.msra.mxu0 %v2178
    %2238 = vmatpush.msra.mxu0 %v2177
    %2239 = vmatpush.msra.mxu0 %v2176
    %2240 = vmatpush.msra.mxu0 %v2175
    %2241 = vmatmul.f32.gmra.mxu0 %v1834
    %v2242 = vpop.f32.mrf.mxu0
    %v2243 = vadd.f32 %v2214, %v2242
    %2244 = vmatmul.f32.gmra.mxu0 %v1837
    %v2245 = vpop.f32.mrf.mxu0
    %v2246 = vadd.f32 %v2217, %v2245
    %2247 = vmatmul.f32.gmra.mxu0 %v1840
    %v2248 = vpop.f32.mrf.mxu0
    %v2249 = vadd.f32 %v2220, %v2248
    %2250 = vmatmul.f32.gmra.mxu0 %v1843
    %v2251 = vpop.f32.mrf.mxu0
    %v2252 = vadd.f32 %v2223, %v2251
    %2253 = vdwg.mxu0
    %s2254 = scalar_lea.vmem [#allocation13], 1
    %v2255 = vld [vmem:[%s2254] sm:$0x1]
    %v2257 = vperm.slane %v2255, 0
    %v2259 = vadd.f32 %v2243, %v2257
    %v2260 = vadd.f32 %v2246, %v2257
    %v2261 = vadd.f32 %v2249, %v2257
    %v2262 = vadd.f32 %v2252, %v2257
    %v2263 = vmax.f32 %v2259, 0.0
    %v2264 = vmax.f32 %v2260, 0.0
    %v2265 = vmax.f32 %v2261, 0.0
    %v2266 = vmax.f32 %v2262, 0.0
    %v2267 = vadd.f32 %v2263, %v1820
    %v2268 = vadd.f32 %v2264, %v1821
    %v2269 = vadd.f32 %v2265, %v1822
    %v2270 = vadd.f32 %v2266, %v1823
    %s2271 = scalar_lea.vmem %s41, 32
    %v2272 = vld [vmem:[%s2271] sm:$0xff]
    %v2273 = vld [vmem:[%s2271 + $0x8] sm:$0xff]
    %v2274 = vld [vmem:[%s2271 + $0x10] sm:$0xff]
    %v2275 = vld [vmem:[%s2271 + $0x18] sm:$0xff]
    %s2276 = scalar_lea.vmem %s43, 32
    %v2277 = vld [vmem:[%s2276] sm:$0xff]
    %v2278 = vld [vmem:[%s2276 + $0x8] sm:$0xff]
    %v2279 = vld [vmem:[%s2276 + $0x10] sm:$0xff]
    %v2280 = vld [vmem:[%s2276 + $0x18] sm:$0xff]
    %v2282 = vsel %vm1247, %v2169, 0
    %v2285 = vsel %vm1247, %v2172, 0
    %2287 = vmatpush.msra.mxu0 0.0
    %2288 = vmatpush.msra.mxu0 0.0
    %2289 = vmatpush.msra.mxu0 0.0
    %2290 = vmatpush.msra.mxu0 0.0
    %2291 = vmatpush.msra.mxu0 0.0
    %2292 = vmatpush.msra.mxu0 0.0
    %2293 = vmatpush.msra.mxu0 0.0
    %2294 = vmatpush.msra.mxu0 0.0
    %2295 = vmatpush.msra.mxu0 0.0
    %2296 = vmatpush.msra.mxu0 0.0
    %2297 = vmatpush.msra.mxu0 0.0
    %2298 = vmatpush.msra.mxu0 0.0
    %2299 = vmatpush.msra.mxu0 %v2280
    %2300 = vmatpush.msra.mxu0 %v2279
    %2301 = vmatpush.msra.mxu0 %v2278
    %2302 = vmatpush.msra.mxu0 %v2277
    %2303 = vmatmul.f32.gmra.mxu0 %v2282
    %v2304 = vpop.f32.mrf.mxu0
    %v2305 = vadd.f32 0.0, %v2304
    %2306 = vmatmul.f32.gmra.mxu0 %v2285
    %v2307 = vpop.f32.mrf.mxu0
    %v2308 = vadd.f32 0.0, %v2307
    %2309 = vdwg.mxu0
    %2310 = vmatpush.msra.mxu0 0.0
    %2311 = vmatpush.msra.mxu0 0.0
    %2312 = vmatpush.msra.mxu0 0.0
    %2313 = vmatpush.msra.mxu0 0.0
    %2314 = vmatpush.msra.mxu0 0.0
    %2315 = vmatpush.msra.mxu0 0.0
    %2316 = vmatpush.msra.mxu0 0.0
    %2317 = vmatpush.msra.mxu0 0.0
    %2318 = vmatpush.msra.mxu0 0.0
    %2319 = vmatpush.msra.mxu0 0.0
    %2320 = vmatpush.msra.mxu0 0.0
    %2321 = vmatpush.msra.mxu0 0.0
    %2322 = vmatpush.msra.mxu0 %v2275
    %2323 = vmatpush.msra.mxu0 %v2274
    %2324 = vmatpush.msra.mxu0 %v2273
    %2325 = vmatpush.msra.mxu0 %v2272
    %2326 = vmatmul.f32.gmra.mxu0 %v1886
    %v2327 = vpop.f32.mrf.mxu0
    %v2328 = vadd.f32 %v2305, %v2327
    %2329 = vmatmul.f32.gmra.mxu0 %v1889
    %v2330 = vpop.f32.mrf.mxu0
    %v2331 = vadd.f32 %v2308, %v2330
    %2332 = vdwg.mxu0
    %s2333 = scalar_lea.vmem [#allocation15], 1
    %v2334 = vld [vmem:[%s2333] sm:$0x1]
    %v2336 = vperm.slane %v2334, 0
    %v2338 = vadd.f32 %v2328, %v2336
    %v2339 = vadd.f32 %v2331, %v2336
    %v2340 = vmax.f32 %v2338, 0.0
    %v2341 = vmax.f32 %v2339, 0.0
    %v2342 = vadd.f32 %v2340, %v1825
    %v2343 = vadd.f32 %v2341, %v1826
    %2344 = vst.msk [vmem:[#allocation2] sm:$0xff] %vm1247, %v2267
    %2345 = vst.msk [vmem:[#allocation2 + $0x8] sm:$0xff] %vm1247, %v2268
    %2346 = vst.msk [vmem:[#allocation2 + $0x10] sm:$0xff] %vm1247, %v2269
    %2347 = vst.msk [vmem:[#allocation2 + $0x18] sm:$0xff] %vm1247, %v2270
    %2348 = vst.msk [vmem:[#allocation3] sm:$0xff] %vm1247, %v2342
    %2349 = vst.msk [vmem:[#allocation3 + $0x8] sm:$0xff] %vm1247, %v2343
    %v2350 = vld [vmem:[#allocation2] sm:$0xff]
    %v2351 = vld [vmem:[#allocation2 + $0x8] sm:$0xff]
    %v2352 = vld [vmem:[#allocation2 + $0x10] sm:$0xff]
    %v2353 = vld [vmem:[#allocation2 + $0x18] sm:$0xff]
    %v2354 = vld [vmem:[#allocation3] sm:$0xff]
    %v2355 = vld [vmem:[#allocation3 + $0x8] sm:$0xff]
    %v2356 = vld [vmem:[#allocation16] sm:$0x1]
    %v2358 = vperm.slane %v2356, 0
    %v2360 = vmul.f32 %v2350, %v2358
    %v2361 = vmul.f32 %v2351, %v2358
    %v2362 = vmul.f32 %v2352, %v2358
    %v2363 = vmul.f32 %v2353, %v2358
    %v2364 = vsel %vm1247, %v2360, 0.0
    %2365 = vadd.xlane.f32.xlu0 %v2364
    %v2366 = vpop.xlane.xlu0 %2365
    %v2367 = vsel %vm1247, %v2361, 0.0
    %2368 = vadd.xlane.f32.xlu0 %v2367
    %v2369 = vpop.xlane.xlu0 %2368
    %v2370 = vsel %vm1247, %v2362, 0.0
    %2371 = vadd.xlane.f32.xlu0 %v2370
    %v2372 = vpop.xlane.xlu0 %2371
    %v2373 = vsel %vm1247, %v2363, 0.0
    %2374 = vadd.xlane.f32.xlu0 %v2373
    %v2375 = vpop.xlane.xlu0 %2374
    %v2376 = vmax.f32 %v2366, %v2369
    %v2377 = vmax.f32 %v2372, %v2375
    %v2378 = vmax.f32 %v2376, %v2377
    %v2379 = vrot.slane %v2378, 4
    %v2380 = vmax.f32 %v2378, %v2379
    %v2381 = vrot.slane %v2380, 2
    %v2382 = vmax.f32 %v2380, %v2381
    %v2383 = vrot.slane %v2382, 1
    %v2384 = vmax.f32 %v2382, %v2383
    %v2385 = vsub.f32 %v2366, %v2384
    %v2386 = vsub.f32 %v2369, %v2384
    %v2387 = vsub.f32 %v2372, %v2384
    %v2388 = vsub.f32 %v2375, %v2384
    %v2389 = vmul.f32 %v2385, 1.442695
    %v2390 = vpow.pop %v2389
    %v2391 = vmul.f32 %v2386, 1.442695
    %v2392 = vpow.pop %v2391
    %v2393 = vmul.f32 %v2387, 1.442695
    %v2394 = vpow.pop %v2393
    %v2395 = vmul.f32 %v2388, 1.442695
    %v2396 = vpow.pop %v2395
    %v2397 = vld [vmem:[%s11] sm:$0x3]
    %v2398 = vmul.f32 %v2350, %v2390
    %v2399 = vmul.f32 %v2351, %v2392
    %v2400 = vmul.f32 %v2352, %v2394
    %v2401 = vmul.f32 %v2353, %v2396
    %v2403 = vsel %vm1247, %v2397, 0
    %2405 = vmatpush.msra.mxu0 0.0
    %2406 = vmatpush.msra.mxu0 0.0
    %2407 = vmatpush.msra.mxu0 0.0
    %2408 = vmatpush.msra.mxu0 0.0
    %2409 = vmatpush.msra.mxu0 0.0
    %2410 = vmatpush.msra.mxu0 0.0
    %2411 = vmatpush.msra.mxu0 0.0
    %2412 = vmatpush.msra.mxu0 0.0
    %2413 = vmatpush.msra.mxu0 0.0
    %2414 = vmatpush.msra.mxu0 0.0
    %2415 = vmatpush.msra.mxu0 0.0
    %2416 = vmatpush.msra.mxu0 0.0
    %2417 = vmatpush.msra.mxu0 %v2401
    %2418 = vmatpush.msra.mxu0 %v2400
    %2419 = vmatpush.msra.mxu0 %v2399
    %2420 = vmatpush.msra.mxu0 %v2398
    %2421 = vmatmul.f32.gmra.mxu0 %v2403
    %v2422 = vpop.f32.mrf.mxu0
    %v2423 = vadd.f32 0.0, %v2422
    %2424 = vdwg.mxu0
    %2425 = vmatpush.msra.mxu0 0.0
    %2426 = vmatpush.msra.mxu0 0.0
    %2427 = vmatpush.msra.mxu0 0.0
    %2428 = vmatpush.msra.mxu0 0.0
    %2429 = vmatpush.msra.mxu0 0.0
    %2430 = vmatpush.msra.mxu0 0.0
    %2431 = vmatpush.msra.mxu0 0.0
    %2432 = vmatpush.msra.mxu0 0.0
    %2433 = vmatpush.msra.mxu0 0.0
    %2434 = vmatpush.msra.mxu0 0.0
    %2435 = vmatpush.msra.mxu0 0.0
    %2436 = vmatpush.msra.mxu0 0.0
    %2437 = vmatpush.msra.mxu0 %v2396
    %2438 = vmatpush.msra.mxu0 %v2394
    %2439 = vmatpush.msra.mxu0 %v2392
    %2440 = vmatpush.msra.mxu0 %v2390
    %2441 = vmatmul.f32.gmra.mxu0 %v2403
    %v2442 = vpop.f32.mrf.mxu0
    %v2443 = vadd.f32 0.0, %v2442
    %2444 = vdwg.mxu0
    %v2445 = vrcp.pop %v2443
    %2447 = vset.pattern.permute.xlu0 0
    %2448 = vperm.xlu0 %2447, %v2445
    %v2449 = vpop.permute.xlu0 %2448
    %v2451 = vmul.f32 %v2423, %v2449
    %v2452 = vld [vmem:[#allocation18] sm:$0x1]
    %v2454 = vperm.slane %v2452, 0
    %v2456 = vmul.f32 %v2354, %v2454
    %v2457 = vmul.f32 %v2355, %v2454
    %v2458 = vsel %vm1247, %v2456, 0.0
    %2459 = vadd.xlane.f32.xlu0 %v2458
    %v2460 = vpop.xlane.xlu0 %2459
    %v2461 = vsel %vm1247, %v2457, 0.0
    %2462 = vadd.xlane.f32.xlu0 %v2461
    %v2463 = vpop.xlane.xlu0 %2462
    %v2464 = vmax.f32 %v2460, %v2463
    %v2465 = vrot.slane %v2464, 4
    %v2466 = vmax.f32 %v2464, %v2465
    %v2467 = vrot.slane %v2466, 2
    %v2468 = vmax.f32 %v2466, %v2467
    %v2469 = vrot.slane %v2468, 1
    %v2470 = vmax.f32 %v2468, %v2469
    %v2471 = vsub.f32 %v2460, %v2470
    %v2472 = vsub.f32 %v2463, %v2470
    %v2473 = vmul.f32 %v2471, 1.442695
    %v2474 = vpow.pop %v2473
    %v2475 = vmul.f32 %v2472, 1.442695
    %v2476 = vpow.pop %v2475
    %v2477 = vld [vmem:[%s13] sm:$0x3]
    %v2478 = vmul.f32 %v2354, %v2474
    %v2479 = vmul.f32 %v2355, %v2476
    %v2481 = vsel %vm329, %v2477, 0
    %2483 = vmatpush.msra.mxu0 0.0
    %2484 = vmatpush.msra.mxu0 0.0
    %2485 = vmatpush.msra.mxu0 0.0
    %2486 = vmatpush.msra.mxu0 0.0
    %2487 = vmatpush.msra.mxu0 0.0
    %2488 = vmatpush.msra.mxu0 0.0
    %2489 = vmatpush.msra.mxu0 0.0
    %2490 = vmatpush.msra.mxu0 0.0
    %2491 = vmatpush.msra.mxu0 0.0
    %2492 = vmatpush.msra.mxu0 0.0
    %2493 = vmatpush.msra.mxu0 0.0
    %2494 = vmatpush.msra.mxu0 0.0
    %2495 = vmatpush.msra.mxu0 0.0
    %2496 = vmatpush.msra.mxu0 0.0
    %2497 = vmatpush.msra.mxu0 %v2479
    %2498 = vmatpush.msra.mxu0 %v2478
    %2499 = vmatmul.f32.gmra.mxu0 %v2481
    %v2500 = vpop.f32.mrf.mxu0
    %v2501 = vadd.f32 0.0, %v2500
    %2502 = vdwg.mxu0
    %2503 = vmatpush.msra.mxu0 0.0
    %2504 = vmatpush.msra.mxu0 0.0
    %2505 = vmatpush.msra.mxu0 0.0
    %2506 = vmatpush.msra.mxu0 0.0
    %2507 = vmatpush.msra.mxu0 0.0
    %2508 = vmatpush.msra.mxu0 0.0
    %2509 = vmatpush.msra.mxu0 0.0
    %2510 = vmatpush.msra.mxu0 0.0
    %2511 = vmatpush.msra.mxu0 0.0
    %2512 = vmatpush.msra.mxu0 0.0
    %2513 = vmatpush.msra.mxu0 0.0
    %2514 = vmatpush.msra.mxu0 0.0
    %2515 = vmatpush.msra.mxu0 0.0
    %2516 = vmatpush.msra.mxu0 0.0
    %2517 = vmatpush.msra.mxu0 %v2476
    %2518 = vmatpush.msra.mxu0 %v2474
    %2519 = vmatmul.f32.gmra.mxu0 %v2481
    %v2520 = vpop.f32.mrf.mxu0
    %v2521 = vadd.f32 0.0, %v2520
    %2522 = vdwg.mxu0
    %v2523 = vrcp.pop %v2521
    %2525 = vset.pattern.permute.xlu0 0
    %2526 = vperm.xlu0 %2525, %v2523
    %v2527 = vpop.permute.xlu0 %2526
    %v2529 = vmul.f32 %v2501, %v2527
    %v2530 = vld [vmem:[#allocation19] sm:$0xff]
    %v2531 = vld [vmem:[#allocation19 + $0x8] sm:$0xff]
    %v2532 = vld [vmem:[#allocation19 + $0x10] sm:$0xff]
    %v2533 = vld [vmem:[#allocation19 + $0x18] sm:$0xff]
    %v2534 = vld [vmem:[#allocation21] sm:$0xff]
    %v2535 = vld [vmem:[#allocation21 + $0x8] sm:$0xff]
    %v2536 = vld [vmem:[#allocation21 + $0x10] sm:$0xff]
    %v2537 = vld [vmem:[#allocation21 + $0x18] sm:$0xff]
    %v2539 = vsel %vm1247, %v2529, 0
    %2541 = vmatpush.msra.mxu0 0.0
    %2542 = vmatpush.msra.mxu0 0.0
    %2543 = vmatpush.msra.mxu0 0.0
    %2544 = vmatpush.msra.mxu0 0.0
    %2545 = vmatpush.msra.mxu0 0.0
    %2546 = vmatpush.msra.mxu0 0.0
    %2547 = vmatpush.msra.mxu0 0.0
    %2548 = vmatpush.msra.mxu0 0.0
    %2549 = vmatpush.msra.mxu0 0.0
    %2550 = vmatpush.msra.mxu0 0.0
    %2551 = vmatpush.msra.mxu0 0.0
    %2552 = vmatpush.msra.mxu0 0.0
    %2553 = vmatpush.msra.mxu0 %v2537
    %2554 = vmatpush.msra.mxu0 %v2536
    %2555 = vmatpush.msra.mxu0 %v2535
    %2556 = vmatpush.msra.mxu0 %v2534
    %2557 = vmatmul.f32.gmra.mxu0 %v2539
    %v2558 = vpop.f32.mrf.mxu0
    %v2559 = vadd.f32 0.0, %v2558
    %2560 = vdwg.mxu0
    %v2562 = vsel %vm1247, %v2451, 0
    %2564 = vmatpush.msra.mxu0 0.0
    %2565 = vmatpush.msra.mxu0 0.0
    %2566 = vmatpush.msra.mxu0 0.0
    %2567 = vmatpush.msra.mxu0 0.0
    %2568 = vmatpush.msra.mxu0 0.0
    %2569 = vmatpush.msra.mxu0 0.0
    %2570 = vmatpush.msra.mxu0 0.0
    %2571 = vmatpush.msra.mxu0 0.0
    %2572 = vmatpush.msra.mxu0 0.0
    %2573 = vmatpush.msra.mxu0 0.0
    %2574 = vmatpush.msra.mxu0 0.0
    %2575 = vmatpush.msra.mxu0 0.0
    %2576 = vmatpush.msra.mxu0 %v2533
    %2577 = vmatpush.msra.mxu0 %v2532
    %2578 = vmatpush.msra.mxu0 %v2531
    %2579 = vmatpush.msra.mxu0 %v2530
    %2580 = vmatmul.f32.gmra.mxu0 %v2562
    %v2581 = vpop.f32.mrf.mxu0
    %v2582 = vadd.f32 %v2559, %v2581
    %2583 = vdwg.mxu0
    %v2584 = vld [vmem:[#allocation22] sm:$0x1]
    %v2586 = vperm.slane %v2584, 0
    %v2588 = vadd.f32 %v2582, %v2586
    %v2589 = vmax.f32 %v2588, 0.0
    %v2590 = vld [vmem:[%s57] sm:$0xff]
    %v2591 = vld [vmem:[%s57 + $0x8] sm:$0xff]
    %v2592 = vld [vmem:[%s57 + $0x10] sm:$0xff]
    %v2593 = vld [vmem:[%s57 + $0x18] sm:$0xff]
    %v2594 = vld [vmem:[%s57 + $0x20] sm:$0xff]
    %v2595 = vld [vmem:[%s57 + $0x28] sm:$0xff]
    %v2596 = vld [vmem:[%s57 + $0x30] sm:$0xff]
    %v2597 = vld [vmem:[%s57 + $0x38] sm:$0xff]
    %v2598 = vld [vmem:[#allocation24] sm:$0x1]
    %v2600 = vperm.slane %v2598, 0
    %vm2602 = vcmask 523264
    %v2604 = vsel %vm2602, %v2589, 0
    %2606 = vmatpush.msra.mxu0 0.0
    %2607 = vmatpush.msra.mxu0 0.0
    %2608 = vmatpush.msra.mxu0 0.0
    %2609 = vmatpush.msra.mxu0 0.0
    %2610 = vmatpush.msra.mxu0 0.0
    %2611 = vmatpush.msra.mxu0 0.0
    %2612 = vmatpush.msra.mxu0 0.0
    %2613 = vmatpush.msra.mxu0 0.0
    %2614 = vmatpush.msra.mxu0 %v2597
    %2615 = vmatpush.msra.mxu0 %v2596
    %2616 = vmatpush.msra.mxu0 %v2595
    %2617 = vmatpush.msra.mxu0 %v2594
    %2618 = vmatpush.msra.mxu0 %v2593
    %2619 = vmatpush.msra.mxu0 %v2592
    %2620 = vmatpush.msra.mxu0 %v2591
    %2621 = vmatpush.msra.mxu0 %v2590
    %2622 = vmatmul.f32.gmra.mxu0 %v2604
    %v2623 = vpop.f32.mrf.mxu0
    %v2624 = vadd.f32 %v2600, %v2623
    %2625 = vdwg.mxu0
    %vm2626 = vcmask 74752
    %2627 = vst.msk [vmem:[#allocation25] sm:$0x3] %vm2626, %v2624
    // Predicated region
    $region174: #{dcn_forward.1} parent=1 // pred_check
      _
    $region175: #{dcn_forward.1} parent=1 // pred_check_branch
      %2629 = sbr.rel (0) target = $region177
    $region176: #{dcn_forward.1} parent=1 // pred_region
      %2631 = vsyncadd [#allocation6], 0
      %s2633 = sshll.u32 [#allocation25], 4
      %s2634 = int_to_ptr.vmem [resolvable:$true] %s2633
      %s2635 = sshll.u32 %s61, 4
      %s2636 = int_to_ptr.hbm [resolvable:$true] %s2635
      %2638 = dma.vmem_to_hbm [thread:$0]  %s2634, 32, %s2636, [#allocation6]
    $region177: #{dcn_forward.1} parent=1 // pred_fallthru
      _
    // Predicated region
    $region178: #{dcn_forward.1} parent=1 // pred_check
      _
    $region179: #{dcn_forward.1} parent=1 // pred_check_branch
      %2640 = sbr.rel (0) target = $region181
    $region180: #{dcn_forward.1} parent=1 // pred_region
      %2642 = dma.done [#allocation6], 32
    $region181: #{dcn_forward.1} parent=1 // pred_fallthru
      _
    %2643 = vsyncpa [#allocation5], 1
    %2644 = vsyncpa [#allocation8], 1
    %2645 = vsyncpa [#allocation11], 1
    %2646 = vsyncpa [#allocation14], 1
    %2647 = vsyncpa [#allocation17], 1
    %2648 = vsyncpa [#allocation20], 1
    %2649 = vsyncpa [#allocation23], 1
    %2650 = vsyncpa [#allocation6], 1

</llo_original>
